<compile_context>
chip_gen: v5e
topology: v5e:2x2
jax: 0.10.0
libtpu: 0.0.40
codegen_flags: <defaults>
</compile_context>

<pallas_src>
import functools

import jax
import jax.numpy as jnp
import numpy as np
from jax import lax
from jax.experimental import pallas as pl
from jax.experimental.pallas import tpu as pltpu


# ----------------------------------------------------------------------------
# Sub-pixel (phase) decomposition tables for ConvTranspose2d(kernel=4, stride=2, padding=1)
# ----------------------------------------------------------------------------
def _upsample2_taps(phase):
    """Output row (2*m + phase) of a k=4/s=2/p=1 transposed conv is a sum of exactly two
    rows of the pad-1 input.  Returns ((row_offset_into_padded_input, kernel_tap), ...)."""
    taps = []
    for k in range(4):
        if (phase + 1 - k) % 2 == 0:
            t = (phase + 1 - k) // 2
            taps.append((t + 1, k))
    return tuple(taps)


def _composed_terms(rho):
    """Two stacked k=4/s=2/p=1 transposed convs == 4x upsampling.  Final-output row
    (4*m + rho), expressed against the zero-padded phase planes of the first upsample:
    returns ((plane_phase, padded_plane_row_offset, kernel_tap), ...)."""
    terms = []
    for off, k in _upsample2_taps(rho):
        t = off - 1
        a = t % 2
        terms.append((a, 1 + (t - a) // 2, k))
    return tuple(terms)


_TAPS3 = tuple((dy, dx) for dy in range(3) for dx in range(3))


# ----------------------------------------------------------------------------
# In-kernel helpers
# ----------------------------------------------------------------------------
def _fold_patch(xp, H, W):
    """im2col over the 3x3 window of a (H+2, W+2, C) padded value -> (H*W, 9*C) matmul LHS."""
    C = xp.shape[-1]
    cols = [xp[dy:dy + H, dx:dx + W, :].reshape(H * W, C) for (dy, dx) in _TAPS3]
    return jnp.concatenate(cols, axis=-1)


def _zero_halo(ref, H, W):
    """Zero only the 1-px border of a (H+2, W+2, C) padded scratch (interior is overwritten)."""
    C = ref.shape[-1]
    zr = jnp.zeros((1, W + 2, C), ref.dtype)
    ref[pl.ds(0, 1), :, :] = zr
    ref[pl.ds(H + 1, 1), :, :] = zr
    zc = jnp.zeros((H, 1, C), ref.dtype)
    ref[pl.ds(1, H), pl.ds(0, 1), :] = zc
    ref[pl.ds(1, H), pl.ds(W + 1, 1), :] = zc


def _zero_halo_plane(ref, p, H, W):
    """Same as _zero_halo, for plane p of a (4, H+2, W+2, C) scratch."""
    C = ref.shape[-1]
    zr = jnp.zeros((1, W + 2, C), ref.dtype)
    ref[p, pl.ds(0, 1), :, :] = zr
    ref[p, pl.ds(H + 1, 1), :, :] = zr
    zc = jnp.zeros((H, 1, C), ref.dtype)
    ref[p, pl.ds(1, H), pl.ds(0, 1), :] = zc
    ref[p, pl.ds(1, H), pl.ds(W + 1, 1), :] = zc


# ----------------------------------------------------------------------------
# Fused decoder kernel (one grid step per batch element; all activations in VMEM)
# ----------------------------------------------------------------------------
def _decoder_kernel(x_ref, w1_ref, b1_ref, wr3_ref, wr1_ref, w2_ref, b2_ref,
                    w3_ref, b3_ref, o_ref, xpad_ref, act_ref, p2_ref,
                    *, H, W, num_res_layers):
    f32 = jnp.float32
    cd = xpad_ref.dtype                  # MXU-operand / activation-scratch dtype (f32 or bf16)
    Ch = act_ref.shape[-1]
    C2 = p2_ref.shape[-1]

    def mm(lhs, rhs):
        return jnp.dot(lhs, rhs, preferred_element_type=f32)

    # ---- zero ONLY the 1-px halos (interiors are fully overwritten each step) ----
    _zero_halo(xpad_ref, H, W)
    _zero_halo(act_ref, H, W)
    for p in range(4):
        _zero_halo_plane(p2_ref, p, H, W)

    xpad_ref[pl.ds(1, H), pl.ds(1, W), :] = x_ref[0].astype(cd)

    # ---- ConvTranspose2d(k=3, s=1, p=1) == flipped 3x3 conv; 9 taps folded into K ----
    a1 = mm(_fold_patch(xpad_ref[...], H, W), w1_ref[...]) + b1_ref[...]
    act_ref[pl.ds(1, H), pl.ds(1, W), :] = a1.reshape(H, W, Ch)

    # ---- ResidualStack (running sum kept in f32; operands cast once per layer) ----
    for i in range(num_res_layers):
        ac = act_ref[...]                                  # (H+2, W+2, Ch), zero halo
        hp = jnp.maximum(ac, 0.0).astype(cd)               # ReLU(pad) == pad(ReLU)
        t = jnp.maximum(mm(_fold_patch(hp, H, W), wr3_ref[i]), 0.0).astype(cd)
        u = mm(t, wr1_ref[i])                              # (H*W, Ch)
        new = ac[1:1 + H, 1:1 + W, :].reshape(H * W, Ch) + u
        act_ref[pl.ds(1, H), pl.ds(1, W), :] = new.reshape(H, W, Ch)

    ap = jnp.maximum(act_ref[...], 0.0).astype(cd)         # final ReLU of the stack

    # ---- ConvTranspose2d(k=4, s=2, p=1) + ReLU: all 4 sub-pixel phases in ONE matmul
    #      (K = 9*Ch, N = 4*C2), sharing the same 3x3-tap im2col fold. ----
    ph = jnp.maximum(mm(_fold_patch(ap, H, W), w2_ref[...]) + b2_ref[...], 0.0).astype(cd)
    for p in range(4):
        p2_ref[p, pl.ds(1, H), pl.ds(1, W), :] = ph[:, p * C2:(p + 1) * C2].reshape(H, W, C2)

    # ---- Final ConvTranspose2d(k=4, s=2, p=1), composed with the previous upsample:
    #      4 per-plane matmuls (K = 9*C2, N = 16*Cop), f32 partial sums accumulated. ----
    acc = mm(_fold_patch(p2_ref[0], H, W), w3_ref[0])
    for p in range(1, 4):
        acc = acc + mm(_fold_patch(p2_ref[p], H, W), w3_ref[p])

    # lane-dense (multiple-of-128) store of all 16 sub-pixel phases of the final output
    o_ref[0] = (acc + b3_ref[...]).astype(o_ref.dtype)


# ----------------------------------------------------------------------------
# One-time parameter preparation (hoisted out of the forward pass)
# ----------------------------------------------------------------------------
def prepare_params(params, compute_dtype=jnp.bfloat16):
    cd = compute_dtype
    f32 = jnp.float32

    w1_t = params["ct1_w"].astype(f32)          # (Cin, Ch, 3, 3)  ConvTranspose2d weights
    Ch = w1_t.shape[1]
    w2_t = params["ct2_w"].astype(f32)          # (Ch, C2, 4, 4)
    C2 = w2_t.shape[1]
    w3_t = params["ct3_w"].astype(f32)          # (C2, Co, 4, 4)
    Co = w3_t.shape[1]
    Cop = ((Co + 7) // 8) * 8                   # pad Co so 16*Cop is a multiple of 128 lanes

    # ct1: ConvTranspose2d(k3,s1,p1) == 3x3 conv with flipped taps over a pad-1 input.
    w1 = jnp.concatenate([w1_t[:, :, 2 - dy, 2 - dx] for (dy, dx) in _TAPS3], axis=0)   # (9*Cin, Ch)

    # Residual stack weights (3x3 conv no-bias -> ReLU -> 1x1 conv no-bias).
    res = params["res"]
    L = len(res)
    if L == 0:
        # Placeholders only — the in-kernel residual loop is skipped when L == 0.
        wr3 = jnp.zeros((1, 9 * Ch, 1), f32)
        wr1 = jnp.zeros((1, 1, Ch), f32)
    else:
        wr3 = jnp.stack([jnp.concatenate([w3r.astype(f32)[:, :, dy, dx].T for (dy, dx) in _TAPS3], axis=0)
                         for (w3r, _) in res])                                           # (L, 9*Ch, R)
        wr1 = jnp.stack([w1r.astype(f32)[:, :, 0, 0].T for (_, w1r) in res])             # (L, R, Ch)

    # ct2 (k4,s2,p1): all 4 sub-pixel phases packed against the shared 3x3-tap im2col fold.
    w2f = jnp.zeros((9 * Ch, 4 * C2), f32)
    for a in range(2):
        for b in range(2):
            col = (2 * a + b) * C2
            for (dr, ky) in _upsample2_taps(a):
                for (dc, kx) in _upsample2_taps(b):
                    row = (dr * 3 + dc) * Ch
                    w2f = w2f.at[row:row + Ch, col:col + C2].set(w2_t[:, :, ky, kx])
    b2f = jnp.tile(params["ct2_b"].astype(f32).reshape(1, C2), (1, 4))                   # (1, 4*C2)

    # ct3 (k4,s2,p1) composed with ct2: 16 final sub-pixel phases packed per ct2 phase plane,
    # each plane read through a 3x3-tap fold (K = 9*C2); zero-padded output channels to Cop.
    terms = [_composed_terms(r) for r in range(4)]
    w3f = jnp.zeros((4, 9 * C2, 16 * Cop), f32)
    for pa in range(2):
        for pb in range(2):
            plane = 2 * pa + pb
            for rho in range(4):
                dr, ky = next((d, k) for (a, d, k) in terms[rho] if a == pa)
                for sig in range(4):
                    dc, kx = next((d, k) for (a, d, k) in terms[sig] if a == pb)
                    row = (dr * 3 + dc) * C2
                    col = (4 * rho + sig) * Cop
                    w3f = w3f.at[plane, row:row + C2, col:col + Co].set(w3_t[:, :, ky, kx])
    b3f = jnp.zeros((1, 16 * Cop), f32)
    b3 = params["ct3_b"].astype(f32)
    for ph in range(16):
        b3f = b3f.at[0, ph * Cop:ph * Cop + Co].set(b3)

    return {
        "w1": w1.astype(cd),
        "b1": params["ct1_b"].astype(f32).reshape(1, -1),
        "wr3": wr3.astype(cd),
        "wr1": wr1.astype(cd),
        "w2": w2f.astype(cd),
        "b2": b2f,
        "w3": w3f.astype(cd),
        "b3": b3f,
        "num_res_layers": L,
        "Co": Co,
        "Cop": Cop,
    }


# ----------------------------------------------------------------------------
# Forward pass (single pallas_call + one depth-to-space pass to NCHW)
# ----------------------------------------------------------------------------
def decoder_forward(prep, x_nchw):
    N, Cin, H, W = x_nchw.shape
    cd = prep["w1"].dtype
    Ch = prep["w1"].shape[1]
    C2 = prep["w2"].shape[1] // 4
    Co, Cop = prep["Co"], prep["Cop"]
    L = prep["num_res_layers"]

    x = jnp.transpose(x_nchw, (0, 2, 3, 1))                      # NCHW -> NHWC (C on lanes)

    # VMEM budget from the actual footprint; cap 56 MiB keeps v7x (64 MiB VMEM) safe.
    cdb = jnp.dtype(cd).itemsize
    scratch_b = (H + 2) * (W + 2) * (Cin * cdb + Ch * 4 + 4 * C2 * cdb)
    io_b = 2 * (H * W * Cin * x.dtype.itemsize + H * W * 16 * Cop * 4)
    w_b = 2 * sum(int(np.prod(prep[k].shape)) * jnp.dtype(prep[k].dtype).itemsize
                  for k in ("w1", "b1", "wr3", "wr1", "w2", "b2", "w3", "b3"))
    tmp_b = 6 * H * W * 9 * max(Cin, Ch, C2) * 4                 # im2col / intermediate temporaries
    vmem_limit = int(min(56 * 2 ** 20, max(32 * 2 ** 20, 2 * (scratch_b + io_b + w_b + tmp_b))))

    kern = functools.partial(_decoder_kernel, H=H, W=W, num_res_layers=L)
    out = pl.pallas_call(
        kern,
        out_shape=jax.ShapeDtypeStruct((N, H * W, 16 * Cop), jnp.float32),
        grid=(N,),
        in_specs=[
            pl.BlockSpec((1, H, W, Cin), lambda n: (n, 0, 0, 0)),
            pl.BlockSpec(prep["w1"].shape, lambda n: (0, 0)),
            pl.BlockSpec(prep["b1"].shape, lambda n: (0, 0)),
            pl.BlockSpec(prep["wr3"].shape, lambda n: (0, 0, 0)),
            pl.BlockSpec(prep["wr1"].shape, lambda n: (0, 0, 0)),
            pl.BlockSpec(prep["w2"].shape, lambda n: (0, 0)),
            pl.BlockSpec(prep["b2"].shape, lambda n: (0, 0)),
            pl.BlockSpec(prep["w3"].shape, lambda n: (0, 0, 0)),
            pl.BlockSpec(prep["b3"].shape, lambda n: (0, 0)),
        ],
        out_specs=pl.BlockSpec((1, H * W, 16 * Cop), lambda n: (n, 0, 0)),
        scratch_shapes=[
            pltpu.VMEM((H + 2, W + 2, Cin), cd),                 # padded input (compute dtype)
            pltpu.VMEM((H + 2, W + 2, Ch), jnp.float32),         # padded running activation (f32 sum)
            pltpu.VMEM((4, H + 2, W + 2, C2), cd),               # padded ct2 phase planes
        ],
        compiler_params=pltpu.CompilerParams(
            dimension_semantics=("parallel",),                   # batch steps split across TCs (v7x)
            vmem_limit_bytes=vmem_limit),
    )(x, prep["w1"], prep["b1"], prep["wr3"], prep["wr1"],
      prep["w2"], prep["b2"], prep["w3"], prep["b3"])

    # TODO(synk): this depth-to-space is one extra XLA memory pass over the largest tensor;
    # fuse into the consumer / keep the phase-major layout downstream when possible.
    y = out.reshape(N, H, W, 4, 4, Cop)[..., :Co]
    y = jnp.transpose(y, (0, 5, 1, 3, 2, 4)).reshape(N, Co, 4 * H, 4 * W)
    return y


# ----------------------------------------------------------------------------
# Deterministic parameter init (PyTorch weight layouts)
# ----------------------------------------------------------------------------
def init_params(key, input_dim, hidden_dim, num_res_layers, res_hidden_dim):
    ks = jax.random.split(key, 6 + 2 * num_res_layers)

    def nrm(k, shape, scale=0.1):
        return scale * jax.random.normal(k, shape, dtype=jnp.float32)

    params = {
        "ct1_w": nrm(ks[0], (input_dim, hidden_dim, 3, 3)),       # ConvTranspose2d (Cin,Cout,kh,kw)
        "ct1_b": nrm(ks[1], (hidden_dim,)),
        "ct2_w": nrm(ks[2], (hidden_dim, hidden_dim // 2, 4, 4)),
        "ct2_b": nrm(ks[3], (hidden_dim // 2,)),
        "ct3_w": nrm(ks[4], (hidden_dim // 2, 3, 4, 4)),
        "ct3_b": nrm(ks[5], (3,)),
        "res": [],
    }
    for i in range(num_res_layers):
        w3 = nrm(ks[6 + 2 * i], (res_hidden_dim, hidden_dim, 3, 3))   # Conv2d, no bias
        w1 = nrm(ks[7 + 2 * i], (hidden_dim, res_hidden_dim, 1, 1))   # Conv2d, no bias
        params["res"].append((w3, w1))
    return params


# ----------------------------------------------------------------------------
# Pure-JAX reference (NCHW, PyTorch semantics) for verification
# ----------------------------------------------------------------------------
def _ref_conv2d(x, w_oihw, pad):
    return lax.conv_general_dilated(
        x, w_oihw, (1, 1), [(pad, pad), (pad, pad)],
        dimension_numbers=("NCHW", "OIHW", "NCHW"),
        precision=lax.Precision.HIGHEST)


def _ref_convT(x, w_t, b, k, s, p):
    w_eq = jnp.flip(w_t, axis=(2, 3)).transpose(1, 0, 2, 3)      # OIHW
    out = lax.conv_general_dilated(
        x, w_eq, (1, 1), [(k - 1 - p, k - 1 - p)] * 2, lhs_dilation=(s, s),
        dimension_numbers=("NCHW", "OIHW", "NCHW"),
        precision=lax.Precision.HIGHEST)
    return out + b[None, :, None, None]


def ref_decoder(params, x):
    x = _ref_convT(x, params["ct1_w"], params["ct1_b"], 3, 1, 1)
    for (w3, w1) in params["res"]:
        h = jnp.maximum(x, 0.0)
        h = _ref_conv2d(h, w3, 1)
        h = jnp.maximum(h, 0.0)
        h = _ref_conv2d(h, w1, 0)
        x = x + h
    x = jnp.maximum(x, 0.0)
    x = jnp.maximum(_ref_convT(x, params["ct2_w"], params["ct2_b"], 4, 2, 1), 0.0)
    x = _ref_convT(x, params["ct3_w"], params["ct3_b"], 4, 2, 1)
    return x


# ----------------------------------------------------------------------------
if __name__ == "__main__":
    key = jax.random.PRNGKey(0)
    input_dim, hidden_dim, num_res_layers, res_hidden_dim = 4, 32, 2, 8
    N, H, W = 2, 8, 8

    kp, kx = jax.random.split(key)
    params = init_params(kp, input_dim, hidden_dim, num_res_layers, res_hidden_dim)
    x = jax.random.normal(kx, (N, input_dim, H, W), dtype=jnp.float32)

    ref = jax.block_until_ready(ref_decoder(params, x))

    # f32 MXU-operand path: tight-tolerance check against the pure-lax reference.
    prep32 = prepare_params(params, compute_dtype=jnp.float32)
    out32 = jax.block_until_ready(jax.jit(functools.partial(decoder_forward, prep32))(x))
    assert out32.shape == (N, 3, 4 * H, 4 * W), out32.shape
    np.testing.assert_allclose(np.asarray(out32), np.asarray(ref), rtol=1e-3, atol=1e-3)

    # bf16 MXU-operand path (default / perf path on v5e/v6e/v7x): looser tolerance check.
    prep16 = prepare_params(params)                      # compute_dtype defaults to bf16
    out16 = jax.block_until_ready(jax.jit(functools.partial(decoder_forward, prep16))(x))
    assert out16.shape == (N, 3, 4 * H, 4 * W), out16.shape
    np.testing.assert_allclose(np.asarray(out16), np.asarray(ref), rtol=5e-2, atol=5e-2)

    print("KERNEL_OK")
</pallas_src>

<mosaic_0001>
module attributes {stable_mosaic.version = 11 : i64} {
  func.func @_decoder_kernel(%arg0: i32, %arg1: memref<1x8x8x4xf32, #tpu.memory_space<vmem>>, %arg2: memref<36x32xf32, #tpu.memory_space<vmem>>, %arg3: memref<1x32xf32, #tpu.memory_space<vmem>>, %arg4: memref<2x288x8xf32, #tpu.memory_space<vmem>>, %arg5: memref<2x8x32xf32, #tpu.memory_space<vmem>>, %arg6: memref<288x64xf32, #tpu.memory_space<vmem>>, %arg7: memref<1x64xf32, #tpu.memory_space<vmem>>, %arg8: memref<4x144x128xf32, #tpu.memory_space<vmem>>, %arg9: memref<1x128xf32, #tpu.memory_space<vmem>>, %arg10: memref<1x64x128xf32, #tpu.memory_space<vmem>>, %arg11: memref<10x10x4xf32, #tpu.memory_space<vmem>>, %arg12: memref<10x10x32xf32, #tpu.memory_space<vmem>>, %arg13: memref<4x10x10x16xf32, #tpu.memory_space<vmem>>) attributes {dimension_semantics = [#tpu.dimension_semantics<parallel>], iteration_bounds = array<i64: 2>, scalar_prefetch = 0 : i64, scratch_operands = 3 : i64, tpu.core_type = #tpu.core_type<tc>, window_params = [{transform_indices = @transform_0, window_bounds = array<i64: 1, 8, 8, 4>}, {pipeline_mode = #tpu.pipeline_mode<synchronous>, transform_indices = @transform_1, window_bounds = array<i64: 36, 32>}, {pipeline_mode = #tpu.pipeline_mode<synchronous>, transform_indices = @transform_2, window_bounds = array<i64: 1, 32>}, {pipeline_mode = #tpu.pipeline_mode<synchronous>, transform_indices = @transform_3, window_bounds = array<i64: 2, 288, 8>}, {pipeline_mode = #tpu.pipeline_mode<synchronous>, transform_indices = @transform_4, window_bounds = array<i64: 2, 8, 32>}, {pipeline_mode = #tpu.pipeline_mode<synchronous>, transform_indices = @transform_5, window_bounds = array<i64: 288, 64>}, {pipeline_mode = #tpu.pipeline_mode<synchronous>, transform_indices = @transform_6, window_bounds = array<i64: 1, 64>}, {pipeline_mode = #tpu.pipeline_mode<synchronous>, transform_indices = @transform_7, window_bounds = array<i64: 4, 144, 128>}, {pipeline_mode = #tpu.pipeline_mode<synchronous>, transform_indices = @transform_8, window_bounds = array<i64: 1, 128>}, {transform_indices = @transform_9, window_bounds = array<i64: 1, 64, 128>}]} {
    %cst = arith.constant 0.000000e+00 : f32
    %0 = vector.broadcast %cst : f32 to vector<1x10x4xf32>
    %c0 = arith.constant 0 : index
    %c0_0 = arith.constant 0 : index
    %c0_1 = arith.constant 0 : index
    %1 = vector.load %arg11[%c0, %c0_0, %c0_1] : memref<10x10x4xf32, #tpu.memory_space<vmem>>, vector<1x10x4xf32>
    tpu.vector_store %arg11[%c0, %c0_0, %c0_1], %0 {strides = array<i32>} : memref<10x10x4xf32, #tpu.memory_space<vmem>>, vector<1x10x4xf32>,
    %c9 = arith.constant 9 : index
    %c0_2 = arith.constant 0 : index
    %c0_3 = arith.constant 0 : index
    %2 = vector.load %arg11[%c9, %c0_2, %c0_3] : memref<10x10x4xf32, #tpu.memory_space<vmem>>, vector<1x10x4xf32>
    tpu.vector_store %arg11[%c9, %c0_2, %c0_3], %0 {strides = array<i32>} : memref<10x10x4xf32, #tpu.memory_space<vmem>>, vector<1x10x4xf32>,
    %cst_4 = arith.constant 0.000000e+00 : f32
    %3 = vector.broadcast %cst_4 : f32 to vector<8x1x4xf32>
    %c1 = arith.constant 1 : index
    %c0_5 = arith.constant 0 : index
    %c0_6 = arith.constant 0 : index
    %4 = vector.load %arg11[%c1, %c0_5, %c0_6] : memref<10x10x4xf32, #tpu.memory_space<vmem>>, vector<8x1x4xf32>
    tpu.vector_store %arg11[%c1, %c0_5, %c0_6], %3 {strides = array<i32>} : memref<10x10x4xf32, #tpu.memory_space<vmem>>, vector<8x1x4xf32>,
    %c1_7 = arith.constant 1 : index
    %c9_8 = arith.constant 9 : index
    %c0_9 = arith.constant 0 : index
    %5 = vector.load %arg11[%c1_7, %c9_8, %c0_9] : memref<10x10x4xf32, #tpu.memory_space<vmem>>, vector<8x1x4xf32>
    tpu.vector_store %arg11[%c1_7, %c9_8, %c0_9], %3 {strides = array<i32>} : memref<10x10x4xf32, #tpu.memory_space<vmem>>, vector<8x1x4xf32>,
    %cst_10 = arith.constant 0.000000e+00 : f32
    %6 = vector.broadcast %cst_10 : f32 to vector<1x10x32xf32>
    %c0_11 = arith.constant 0 : index
    %c0_12 = arith.constant 0 : index
    %c0_13 = arith.constant 0 : index
    %7 = vector.load %arg12[%c0_11, %c0_12, %c0_13] : memref<10x10x32xf32, #tpu.memory_space<vmem>>, vector<1x10x32xf32>
    tpu.vector_store %arg12[%c0_11, %c0_12, %c0_13], %6 {strides = array<i32>} : memref<10x10x32xf32, #tpu.memory_space<vmem>>, vector<1x10x32xf32>,
    %c9_14 = arith.constant 9 : index
    %c0_15 = arith.constant 0 : index
    %c0_16 = arith.constant 0 : index
    %8 = vector.load %arg12[%c9_14, %c0_15, %c0_16] : memref<10x10x32xf32, #tpu.memory_space<vmem>>, vector<1x10x32xf32>
    tpu.vector_store %arg12[%c9_14, %c0_15, %c0_16], %6 {strides = array<i32>} : memref<10x10x32xf32, #tpu.memory_space<vmem>>, vector<1x10x32xf32>,
    %cst_17 = arith.constant 0.000000e+00 : f32
    %9 = vector.broadcast %cst_17 : f32 to vector<8x1x32xf32>
    %c1_18 = arith.constant 1 : index
    %c0_19 = arith.constant 0 : index
    %c0_20 = arith.constant 0 : index
    %10 = vector.load %arg12[%c1_18, %c0_19, %c0_20] : memref<10x10x32xf32, #tpu.memory_space<vmem>>, vector<8x1x32xf32>
    tpu.vector_store %arg12[%c1_18, %c0_19, %c0_20], %9 {strides = array<i32>} : memref<10x10x32xf32, #tpu.memory_space<vmem>>, vector<8x1x32xf32>,
    %c1_21 = arith.constant 1 : index
    %c9_22 = arith.constant 9 : index
    %c0_23 = arith.constant 0 : index
    %11 = vector.load %arg12[%c1_21, %c9_22, %c0_23] : memref<10x10x32xf32, #tpu.memory_space<vmem>>, vector<8x1x32xf32>
    tpu.vector_store %arg12[%c1_21, %c9_22, %c0_23], %9 {strides = array<i32>} : memref<10x10x32xf32, #tpu.memory_space<vmem>>, vector<8x1x32xf32>,
    %cst_24 = arith.constant 0.000000e+00 : f32
    %12 = vector.broadcast %cst_24 : f32 to vector<1x10x16xf32>
    %c0_25 = arith.constant 0 : index
    %c0_26 = arith.constant 0 : index
    %c0_27 = arith.constant 0 : index
    %c0_28 = arith.constant 0 : index
    %13 = vector.load %arg13[%c0_25, %c0_26, %c0_27, %c0_28] : memref<4x10x10x16xf32, #tpu.memory_space<vmem>>, vector<1x1x10x16xf32>
    %14 = vector.shape_cast %13 : vector<1x1x10x16xf32> to vector<1x10x16xf32>
    %15 = vector.shape_cast %12 : vector<1x10x16xf32> to vector<1x1x10x16xf32>
    tpu.vector_store %arg13[%c0_25, %c0_26, %c0_27, %c0_28], %15 {strides = array<i32>} : memref<4x10x10x16xf32, #tpu.memory_space<vmem>>, vector<1x1x10x16xf32>,
    %c0_29 = arith.constant 0 : index
    %c9_30 = arith.constant 9 : index
    %c0_31 = arith.constant 0 : index
    %c0_32 = arith.constant 0 : index
    %16 = vector.load %arg13[%c0_29, %c9_30, %c0_31, %c0_32] : memref<4x10x10x16xf32, #tpu.memory_space<vmem>>, vector<1x1x10x16xf32>
    %17 = vector.shape_cast %16 : vector<1x1x10x16xf32> to vector<1x10x16xf32>
    %18 = vector.shape_cast %12 : vector<1x10x16xf32> to vector<1x1x10x16xf32>
    tpu.vector_store %arg13[%c0_29, %c9_30, %c0_31, %c0_32], %18 {strides = array<i32>} : memref<4x10x10x16xf32, #tpu.memory_space<vmem>>, vector<1x1x10x16xf32>,
    %cst_33 = arith.constant 0.000000e+00 : f32
    %19 = vector.broadcast %cst_33 : f32 to vector<8x1x16xf32>
    %c0_34 = arith.constant 0 : index
    %c1_35 = arith.constant 1 : index
    %c0_36 = arith.constant 0 : index
    %c0_37 = arith.constant 0 : index
    %20 = vector.load %arg13[%c0_34, %c1_35, %c0_36, %c0_37] : memref<4x10x10x16xf32, #tpu.memory_space<vmem>>, vector<1x8x1x16xf32>
    %21 = vector.shape_cast %20 : vector<1x8x1x16xf32> to vector<8x1x16xf32>
    %22 = vector.shape_cast %19 : vector<8x1x16xf32> to vector<1x8x1x16xf32>
    tpu.vector_store %arg13[%c0_34, %c1_35, %c0_36, %c0_37], %22 {strides = array<i32>} : memref<4x10x10x16xf32, #tpu.memory_space<vmem>>, vector<1x8x1x16xf32>,
    %c0_38 = arith.constant 0 : index
    %c1_39 = arith.constant 1 : index
    %c9_40 = arith.constant 9 : index
    %c0_41 = arith.constant 0 : index
    %23 = vector.load %arg13[%c0_38, %c1_39, %c9_40, %c0_41] : memref<4x10x10x16xf32, #tpu.memory_space<vmem>>, vector<1x8x1x16xf32>
    %24 = vector.shape_cast %23 : vector<1x8x1x16xf32> to vector<8x1x16xf32>
    %25 = vector.shape_cast %19 : vector<8x1x16xf32> to vector<1x8x1x16xf32>
    tpu.vector_store %arg13[%c0_38, %c1_39, %c9_40, %c0_41], %25 {strides = array<i32>} : memref<4x10x10x16xf32, #tpu.memory_space<vmem>>, vector<1x8x1x16xf32>,
    %cst_42 = arith.constant 0.000000e+00 : f32
    %26 = vector.broadcast %cst_42 : f32 to vector<1x10x16xf32>
    %c1_43 = arith.constant 1 : index
    %c0_44 = arith.constant 0 : index
    %c0_45 = arith.constant 0 : index
    %c0_46 = arith.constant 0 : index
    %27 = vector.load %arg13[%c1_43, %c0_44, %c0_45, %c0_46] : memref<4x10x10x16xf32, #tpu.memory_space<vmem>>, vector<1x1x10x16xf32>
    %28 = vector.shape_cast %27 : vector<1x1x10x16xf32> to vector<1x10x16xf32>
    %29 = vector.shape_cast %26 : vector<1x10x16xf32> to vector<1x1x10x16xf32>
    tpu.vector_store %arg13[%c1_43, %c0_44, %c0_45, %c0_46], %29 {strides = array<i32>} : memref<4x10x10x16xf32, #tpu.memory_space<vmem>>, vector<1x1x10x16xf32>,
    %c1_47 = arith.constant 1 : index
    %c9_48 = arith.constant 9 : index
    %c0_49 = arith.constant 0 : index
    %c0_50 = arith.constant 0 : index
    %30 = vector.load %arg13[%c1_47, %c9_48, %c0_49, %c0_50] : memref<4x10x10x16xf32, #tpu.memory_space<vmem>>, vector<1x1x10x16xf32>
    %31 = vector.shape_cast %30 : vector<1x1x10x16xf32> to vector<1x10x16xf32>
    %32 = vector.shape_cast %26 : vector<1x10x16xf32> to vector<1x1x10x16xf32>
    tpu.vector_store %arg13[%c1_47, %c9_48, %c0_49, %c0_50], %32 {strides = array<i32>} : memref<4x10x10x16xf32, #tpu.memory_space<vmem>>, vector<1x1x10x16xf32>,
    %cst_51 = arith.constant 0.000000e+00 : f32
    %33 = vector.broadcast %cst_51 : f32 to vector<8x1x16xf32>
    %c1_52 = arith.constant 1 : index
    %c1_53 = arith.constant 1 : index
    %c0_54 = arith.constant 0 : index
    %c0_55 = arith.constant 0 : index
    %34 = vector.load %arg13[%c1_52, %c1_53, %c0_54, %c0_55] : memref<4x10x10x16xf32, #tpu.memory_space<vmem>>, vector<1x8x1x16xf32>
    %35 = vector.shape_cast %34 : vector<1x8x1x16xf32> to vector<8x1x16xf32>
    %36 = vector.shape_cast %33 : vector<8x1x16xf32> to vector<1x8x1x16xf32>
    tpu.vector_store %arg13[%c1_52, %c1_53, %c0_54, %c0_55], %36 {strides = array<i32>} : memref<4x10x10x16xf32, #tpu.memory_space<vmem>>, vector<1x8x1x16xf32>,
    %c1_56 = arith.constant 1 : index
    %c1_57 = arith.constant 1 : index
    %c9_58 = arith.constant 9 : index
    %c0_59 = arith.constant 0 : index
    %37 = vector.load %arg13[%c1_56, %c1_57, %c9_58, %c0_59] : memref<4x10x10x16xf32, #tpu.memory_space<vmem>>, vector<1x8x1x16xf32>
    %38 = vector.shape_cast %37 : vector<1x8x1x16xf32> to vector<8x1x16xf32>
    %39 = vector.shape_cast %33 : vector<8x1x16xf32> to vector<1x8x1x16xf32>
    tpu.vector_store %arg13[%c1_56, %c1_57, %c9_58, %c0_59], %39 {strides = array<i32>} : memref<4x10x10x16xf32, #tpu.memory_space<vmem>>, vector<1x8x1x16xf32>,
    %cst_60 = arith.constant 0.000000e+00 : f32
    %40 = vector.broadcast %cst_60 : f32 to vector<1x10x16xf32>
    %c2 = arith.constant 2 : index
    %c0_61 = arith.constant 0 : index
    %c0_62 = arith.constant 0 : index
    %c0_63 = arith.constant 0 : index
    %41 = vector.load %arg13[%c2, %c0_61, %c0_62, %c0_63] : memref<4x10x10x16xf32, #tpu.memory_space<vmem>>, vector<1x1x10x16xf32>
    %42 = vector.shape_cast %41 : vector<1x1x10x16xf32> to vector<1x10x16xf32>
    %43 = vector.shape_cast %40 : vector<1x10x16xf32> to vector<1x1x10x16xf32>
    tpu.vector_store %arg13[%c2, %c0_61, %c0_62, %c0_63], %43 {strides = array<i32>} : memref<4x10x10x16xf32, #tpu.memory_space<vmem>>, vector<1x1x10x16xf32>,
    %c2_64 = arith.constant 2 : index
    %c9_65 = arith.constant 9 : index
    %c0_66 = arith.constant 0 : index
    %c0_67 = arith.constant 0 : index
    %44 = vector.load %arg13[%c2_64, %c9_65, %c0_66, %c0_67] : memref<4x10x10x16xf32, #tpu.memory_space<vmem>>, vector<1x1x10x16xf32>
    %45 = vector.shape_cast %44 : vector<1x1x10x16xf32> to vector<1x10x16xf32>
    %46 = vector.shape_cast %40 : vector<1x10x16xf32> to vector<1x1x10x16xf32>
    tpu.vector_store %arg13[%c2_64, %c9_65, %c0_66, %c0_67], %46 {strides = array<i32>} : memref<4x10x10x16xf32, #tpu.memory_space<vmem>>, vector<1x1x10x16xf32>,
    %cst_68 = arith.constant 0.000000e+00 : f32
    %47 = vector.broadcast %cst_68 : f32 to vector<8x1x16xf32>
    %c2_69 = arith.constant 2 : index
    %c1_70 = arith.constant 1 : index
    %c0_71 = arith.constant 0 : index
    %c0_72 = arith.constant 0 : index
    %48 = vector.load %arg13[%c2_69, %c1_70, %c0_71, %c0_72] : memref<4x10x10x16xf32, #tpu.memory_space<vmem>>, vector<1x8x1x16xf32>
    %49 = vector.shape_cast %48 : vector<1x8x1x16xf32> to vector<8x1x16xf32>
    %50 = vector.shape_cast %47 : vector<8x1x16xf32> to vector<1x8x1x16xf32>
    tpu.vector_store %arg13[%c2_69, %c1_70, %c0_71, %c0_72], %50 {strides = array<i32>} : memref<4x10x10x16xf32, #tpu.memory_space<vmem>>, vector<1x8x1x16xf32>,
    %c2_73 = arith.constant 2 : index
    %c1_74 = arith.constant 1 : index
    %c9_75 = arith.constant 9 : index
    %c0_76 = arith.constant 0 : index
    %51 = vector.load %arg13[%c2_73, %c1_74, %c9_75, %c0_76] : memref<4x10x10x16xf32, #tpu.memory_space<vmem>>, vector<1x8x1x16xf32>
    %52 = vector.shape_cast %51 : vector<1x8x1x16xf32> to vector<8x1x16xf32>
    %53 = vector.shape_cast %47 : vector<8x1x16xf32> to vector<1x8x1x16xf32>
    tpu.vector_store %arg13[%c2_73, %c1_74, %c9_75, %c0_76], %53 {strides = array<i32>} : memref<4x10x10x16xf32, #tpu.memory_space<vmem>>, vector<1x8x1x16xf32>,
    %cst_77 = arith.constant 0.000000e+00 : f32
    %54 = vector.broadcast %cst_77 : f32 to vector<1x10x16xf32>
    %c3 = arith.constant 3 : index
    %c0_78 = arith.constant 0 : index
    %c0_79 = arith.constant 0 : index
    %c0_80 = arith.constant 0 : index
    %55 = vector.load %arg13[%c3, %c0_78, %c0_79, %c0_80] : memref<4x10x10x16xf32, #tpu.memory_space<vmem>>, vector<1x1x10x16xf32>
    %56 = vector.shape_cast %55 : vector<1x1x10x16xf32> to vector<1x10x16xf32>
    %57 = vector.shape_cast %54 : vector<1x10x16xf32> to vector<1x1x10x16xf32>
    tpu.vector_store %arg13[%c3, %c0_78, %c0_79, %c0_80], %57 {strides = array<i32>} : memref<4x10x10x16xf32, #tpu.memory_space<vmem>>, vector<1x1x10x16xf32>,
    %c3_81 = arith.constant 3 : index
    %c9_82 = arith.constant 9 : index
    %c0_83 = arith.constant 0 : index
    %c0_84 = arith.constant 0 : index
    %58 = vector.load %arg13[%c3_81, %c9_82, %c0_83, %c0_84] : memref<4x10x10x16xf32, #tpu.memory_space<vmem>>, vector<1x1x10x16xf32>
    %59 = vector.shape_cast %58 : vector<1x1x10x16xf32> to vector<1x10x16xf32>
    %60 = vector.shape_cast %54 : vector<1x10x16xf32> to vector<1x1x10x16xf32>
    tpu.vector_store %arg13[%c3_81, %c9_82, %c0_83, %c0_84], %60 {strides = array<i32>} : memref<4x10x10x16xf32, #tpu.memory_space<vmem>>, vector<1x1x10x16xf32>,
    %cst_85 = arith.constant 0.000000e+00 : f32
    %61 = vector.broadcast %cst_85 : f32 to vector<8x1x16xf32>
    %c3_86 = arith.constant 3 : index
    %c1_87 = arith.constant 1 : index
    %c0_88 = arith.constant 0 : index
    %c0_89 = arith.constant 0 : index
    %62 = vector.load %arg13[%c3_86, %c1_87, %c0_88, %c0_89] : memref<4x10x10x16xf32, #tpu.memory_space<vmem>>, vector<1x8x1x16xf32>
    %63 = vector.shape_cast %62 : vector<1x8x1x16xf32> to vector<8x1x16xf32>
    %64 = vector.shape_cast %61 : vector<8x1x16xf32> to vector<1x8x1x16xf32>
    tpu.vector_store %arg13[%c3_86, %c1_87, %c0_88, %c0_89], %64 {strides = array<i32>} : memref<4x10x10x16xf32, #tpu.memory_space<vmem>>, vector<1x8x1x16xf32>,
    %c3_90 = arith.constant 3 : index
    %c1_91 = arith.constant 1 : index
    %c9_92 = arith.constant 9 : index
    %c0_93 = arith.constant 0 : index
    %65 = vector.load %arg13[%c3_90, %c1_91, %c9_92, %c0_93] : memref<4x10x10x16xf32, #tpu.memory_space<vmem>>, vector<1x8x1x16xf32>
    %66 = vector.shape_cast %65 : vector<1x8x1x16xf32> to vector<8x1x16xf32>
    %67 = vector.shape_cast %61 : vector<8x1x16xf32> to vector<1x8x1x16xf32>
    tpu.vector_store %arg13[%c3_90, %c1_91, %c9_92, %c0_93], %67 {strides = array<i32>} : memref<4x10x10x16xf32, #tpu.memory_space<vmem>>, vector<1x8x1x16xf32>,
    %c0_94 = arith.constant 0 : index
    %c0_95 = arith.constant 0 : index
    %c0_96 = arith.constant 0 : index
    %c0_97 = arith.constant 0 : index
    %68 = vector.load %arg1[%c0_94, %c0_95, %c0_96, %c0_97] : memref<1x8x8x4xf32, #tpu.memory_space<vmem>>, vector<1x8x8x4xf32>
    %69 = vector.shape_cast %68 : vector<1x8x8x4xf32> to vector<8x8x4xf32>
    %c1_98 = arith.constant 1 : index
    %c1_99 = arith.constant 1 : index
    %c0_100 = arith.constant 0 : index
    %70 = vector.load %arg11[%c1_98, %c1_99, %c0_100] : memref<10x10x4xf32, #tpu.memory_space<vmem>>, vector<8x8x4xf32>
    tpu.vector_store %arg11[%c1_98, %c1_99, %c0_100], %69 {strides = array<i32>} : memref<10x10x4xf32, #tpu.memory_space<vmem>>, vector<8x8x4xf32>,
    %c0_101 = arith.constant 0 : index
    %c0_102 = arith.constant 0 : index
    %c0_103 = arith.constant 0 : index
    %71 = vector.load %arg11[%c0_101, %c0_102, %c0_103] : memref<10x10x4xf32, #tpu.memory_space<vmem>>, vector<10x10x4xf32>
    %72 = vector.extract_strided_slice %71 {offsets = [0, 0, 0], sizes = [8, 8, 4], strides = [1, 1, 1]} : vector<10x10x4xf32> to vector<8x8x4xf32>
    %73 = vector.shape_cast %72 : vector<8x8x4xf32> to vector<64x4xf32>
    %74 = vector.extract_strided_slice %71 {offsets = [0, 1, 0], sizes = [8, 8, 4], strides = [1, 1, 1]} : vector<10x10x4xf32> to vector<8x8x4xf32>
    %75 = vector.shape_cast %74 : vector<8x8x4xf32> to vector<64x4xf32>
    %76 = vector.extract_strided_slice %71 {offsets = [0, 2, 0], sizes = [8, 8, 4], strides = [1, 1, 1]} : vector<10x10x4xf32> to vector<8x8x4xf32>
    %77 = vector.shape_cast %76 : vector<8x8x4xf32> to vector<64x4xf32>
    %78 = vector.extract_strided_slice %71 {offsets = [1, 0, 0], sizes = [8, 8, 4], strides = [1, 1, 1]} : vector<10x10x4xf32> to vector<8x8x4xf32>
    %79 = vector.shape_cast %78 : vector<8x8x4xf32> to vector<64x4xf32>
    %80 = vector.extract_strided_slice %71 {offsets = [1, 1, 0], sizes = [8, 8, 4], strides = [1, 1, 1]} : vector<10x10x4xf32> to vector<8x8x4xf32>
    %81 = vector.shape_cast %80 : vector<8x8x4xf32> to vector<64x4xf32>
    %82 = vector.extract_strided_slice %71 {offsets = [1, 2, 0], sizes = [8, 8, 4], strides = [1, 1, 1]} : vector<10x10x4xf32> to vector<8x8x4xf32>
    %83 = vector.shape_cast %82 : vector<8x8x4xf32> to vector<64x4xf32>
    %84 = vector.extract_strided_slice %71 {offsets = [2, 0, 0], sizes = [8, 8, 4], strides = [1, 1, 1]} : vector<10x10x4xf32> to vector<8x8x4xf32>
    %85 = vector.shape_cast %84 : vector<8x8x4xf32> to vector<64x4xf32>
    %86 = vector.extract_strided_slice %71 {offsets = [2, 1, 0], sizes = [8, 8, 4], strides = [1, 1, 1]} : vector<10x10x4xf32> to vector<8x8x4xf32>
    %87 = vector.shape_cast %86 : vector<8x8x4xf32> to vector<64x4xf32>
    %88 = vector.extract_strided_slice %71 {offsets = [2, 2, 0], sizes = [8, 8, 4], strides = [1, 1, 1]} : vector<10x10x4xf32> to vector<8x8x4xf32>
    %89 = vector.shape_cast %88 : vector<8x8x4xf32> to vector<64x4xf32>
    %90 = tpu.concatenate %73, %75, %77, %79, %81, %83, %85, %87, %89 in 1 : vector<64x4xf32>, vector<64x4xf32>, vector<64x4xf32>, vector<64x4xf32>, vector<64x4xf32>, vector<64x4xf32>, vector<64x4xf32>, vector<64x4xf32>, vector<64x4xf32> -> vector<64x36xf32>
    %c0_104 = arith.constant 0 : index
    %c0_105 = arith.constant 0 : index
    %91 = vector.load %arg2[%c0_104, %c0_105] : memref<36x32xf32, #tpu.memory_space<vmem>>, vector<36x32xf32>
    %cst_106 = arith.constant dense<0.000000e+00> : vector<64x32xf32>
    %92 = tpu.matmul %90, %91, %cst_106 {dimension_numbers = #tpu.dot_dimension_numbers<[1], [0], [0], [1], [0, 0, 1, 1], [], []>} : vector<64x36xf32>, vector<36x32xf32>, vector<64x32xf32> -> vector<64x32xf32>
    %c0_107 = arith.constant 0 : index
    %c0_108 = arith.constant 0 : index
    %93 = vector.load %arg3[%c0_107, %c0_108] : memref<1x32xf32, #tpu.memory_space<vmem>>, vector<1x32xf32>
    %94 = vector.broadcast %93 : vector<1x32xf32> to vector<64x32xf32>
    %95 = arith.addf %92, %94 : vector<64x32xf32>
    %96 = vector.shape_cast %95 : vector<64x32xf32> to vector<8x8x32xf32>
    %c1_109 = arith.constant 1 : index
    %c1_110 = arith.constant 1 : index
    %c0_111 = arith.constant 0 : index
    %97 = vector.load %arg12[%c1_109, %c1_110, %c0_111] : memref<10x10x32xf32, #tpu.memory_space<vmem>>, vector<8x8x32xf32>
    tpu.vector_store %arg12[%c1_109, %c1_110, %c0_111], %96 {strides = array<i32>} : memref<10x10x32xf32, #tpu.memory_space<vmem>>, vector<8x8x32xf32>,
    %c0_112 = arith.constant 0 : index
    %c0_113 = arith.constant 0 : index
    %c0_114 = arith.constant 0 : index
    %98 = vector.load %arg12[%c0_112, %c0_113, %c0_114] : memref<10x10x32xf32, #tpu.memory_space<vmem>>, vector<10x10x32xf32>
    %cst_115 = arith.constant 0.000000e+00 : f32
    %99 = vector.broadcast %cst_115 : f32 to vector<10x10x32xf32>
    %100 = arith.maximumf %98, %99 : vector<10x10x32xf32>
    %101 = vector.extract_strided_slice %100 {offsets = [0, 0, 0], sizes = [8, 8, 32], strides = [1, 1, 1]} : vector<10x10x32xf32> to vector<8x8x32xf32>
    %102 = vector.shape_cast %101 : vector<8x8x32xf32> to vector<64x32xf32>
    %103 = vector.extract_strided_slice %100 {offsets = [0, 1, 0], sizes = [8, 8, 32], strides = [1, 1, 1]} : vector<10x10x32xf32> to vector<8x8x32xf32>
    %104 = vector.shape_cast %103 : vector<8x8x32xf32> to vector<64x32xf32>
    %105 = vector.extract_strided_slice %100 {offsets = [0, 2, 0], sizes = [8, 8, 32], strides = [1, 1, 1]} : vector<10x10x32xf32> to vector<8x8x32xf32>
    %106 = vector.shape_cast %105 : vector<8x8x32xf32> to vector<64x32xf32>
    %107 = vector.extract_strided_slice %100 {offsets = [1, 0, 0], sizes = [8, 8, 32], strides = [1, 1, 1]} : vector<10x10x32xf32> to vector<8x8x32xf32>
    %108 = vector.shape_cast %107 : vector<8x8x32xf32> to vector<64x32xf32>
    %109 = vector.extract_strided_slice %100 {offsets = [1, 1, 0], sizes = [8, 8, 32], strides = [1, 1, 1]} : vector<10x10x32xf32> to vector<8x8x32xf32>
    %110 = vector.shape_cast %109 : vector<8x8x32xf32> to vector<64x32xf32>
    %111 = vector.extract_strided_slice %100 {offsets = [1, 2, 0], sizes = [8, 8, 32], strides = [1, 1, 1]} : vector<10x10x32xf32> to vector<8x8x32xf32>
    %112 = vector.shape_cast %111 : vector<8x8x32xf32> to vector<64x32xf32>
    %113 = vector.extract_strided_slice %100 {offsets = [2, 0, 0], sizes = [8, 8, 32], strides = [1, 1, 1]} : vector<10x10x32xf32> to vector<8x8x32xf32>
    %114 = vector.shape_cast %113 : vector<8x8x32xf32> to vector<64x32xf32>
    %115 = vector.extract_strided_slice %100 {offsets = [2, 1, 0], sizes = [8, 8, 32], strides = [1, 1, 1]} : vector<10x10x32xf32> to vector<8x8x32xf32>
    %116 = vector.shape_cast %115 : vector<8x8x32xf32> to vector<64x32xf32>
    %117 = vector.extract_strided_slice %100 {offsets = [2, 2, 0], sizes = [8, 8, 32], strides = [1, 1, 1]} : vector<10x10x32xf32> to vector<8x8x32xf32>
    %118 = vector.shape_cast %117 : vector<8x8x32xf32> to vector<64x32xf32>
    %119 = tpu.concatenate %102, %104, %106, %108, %110, %112, %114, %116, %118 in 1 : vector<64x32xf32>, vector<64x32xf32>, vector<64x32xf32>, vector<64x32xf32>, vector<64x32xf32>, vector<64x32xf32>, vector<64x32xf32>, vector<64x32xf32>, vector<64x32xf32> -> vector<64x288xf32>
    %c0_116 = arith.constant 0 : index
    %c0_117 = arith.constant 0 : index
    %c0_118 = arith.constant 0 : index
    %120 = vector.load %arg4[%c0_116, %c0_117, %c0_118] : memref<2x288x8xf32, #tpu.memory_space<vmem>>, vector<1x288x8xf32>
    %121 = vector.shape_cast %120 : vector<1x288x8xf32> to vector<288x8xf32>
    %cst_119 = arith.constant dense<0.000000e+00> : vector<64x8xf32>
    %122 = tpu.matmul %119, %121, %cst_119 {dimension_numbers = #tpu.dot_dimension_numbers<[1], [0], [0], [1], [0, 0, 1, 1], [], []>} : vector<64x288xf32>, vector<288x8xf32>, vector<64x8xf32> -> vector<64x8xf32>
    %cst_120 = arith.constant 0.000000e+00 : f32
    %123 = vector.broadcast %cst_120 : f32 to vector<64x8xf32>
    %124 = arith.maximumf %122, %123 : vector<64x8xf32>
    %c0_121 = arith.constant 0 : index
    %c0_122 = arith.constant 0 : index
    %c0_123 = arith.constant 0 : index
    %125 = vector.load %arg5[%c0_121, %c0_122, %c0_123] : memref<2x8x32xf32, #tpu.memory_space<vmem>>, vector<1x8x32xf32>
    %126 = vector.shape_cast %125 : vector<1x8x32xf32> to vector<8x32xf32>
    %cst_124 = arith.constant dense<0.000000e+00> : vector<64x32xf32>
    %127 = tpu.matmul %124, %126, %cst_124 {dimension_numbers = #tpu.dot_dimension_numbers<[1], [0], [0], [1], [0, 0, 1, 1], [], []>} : vector<64x8xf32>, vector<8x32xf32>, vector<64x32xf32> -> vector<64x32xf32>
    %128 = vector.extract_strided_slice %98 {offsets = [1, 1, 0], sizes = [8, 8, 32], strides = [1, 1, 1]} : vector<10x10x32xf32> to vector<8x8x32xf32>
    %129 = vector.shape_cast %128 : vector<8x8x32xf32> to vector<64x32xf32>
    %130 = arith.addf %129, %127 : vector<64x32xf32>
    %131 = vector.shape_cast %130 : vector<64x32xf32> to vector<8x8x32xf32>
    %c1_125 = arith.constant 1 : index
    %c1_126 = arith.constant 1 : index
    %c0_127 = arith.constant 0 : index
    %132 = vector.load %arg12[%c1_125, %c1_126, %c0_127] : memref<10x10x32xf32, #tpu.memory_space<vmem>>, vector<8x8x32xf32>
    tpu.vector_store %arg12[%c1_125, %c1_126, %c0_127], %131 {strides = array<i32>} : memref<10x10x32xf32, #tpu.memory_space<vmem>>, vector<8x8x32xf32>,
    %c0_128 = arith.constant 0 : index
    %c0_129 = arith.constant 0 : index
    %c0_130 = arith.constant 0 : index
    %133 = vector.load %arg12[%c0_128, %c0_129, %c0_130] : memref<10x10x32xf32, #tpu.memory_space<vmem>>, vector<10x10x32xf32>
    %cst_131 = arith.constant 0.000000e+00 : f32
    %134 = vector.broadcast %cst_131 : f32 to vector<10x10x32xf32>
    %135 = arith.maximumf %133, %134 : vector<10x10x32xf32>
    %136 = vector.extract_strided_slice %135 {offsets = [0, 0, 0], sizes = [8, 8, 32], strides = [1, 1, 1]} : vector<10x10x32xf32> to vector<8x8x32xf32>
    %137 = vector.shape_cast %136 : vector<8x8x32xf32> to vector<64x32xf32>
    %138 = vector.extract_strided_slice %135 {offsets = [0, 1, 0], sizes = [8, 8, 32], strides = [1, 1, 1]} : vector<10x10x32xf32> to vector<8x8x32xf32>
    %139 = vector.shape_cast %138 : vector<8x8x32xf32> to vector<64x32xf32>
    %140 = vector.extract_strided_slice %135 {offsets = [0, 2, 0], sizes = [8, 8, 32], strides = [1, 1, 1]} : vector<10x10x32xf32> to vector<8x8x32xf32>
    %141 = vector.shape_cast %140 : vector<8x8x32xf32> to vector<64x32xf32>
    %142 = vector.extract_strided_slice %135 {offsets = [1, 0, 0], sizes = [8, 8, 32], strides = [1, 1, 1]} : vector<10x10x32xf32> to vector<8x8x32xf32>
    %143 = vector.shape_cast %142 : vector<8x8x32xf32> to vector<64x32xf32>
    %144 = vector.extract_strided_slice %135 {offsets = [1, 1, 0], sizes = [8, 8, 32], strides = [1, 1, 1]} : vector<10x10x32xf32> to vector<8x8x32xf32>
    %145 = vector.shape_cast %144 : vector<8x8x32xf32> to vector<64x32xf32>
    %146 = vector.extract_strided_slice %135 {offsets = [1, 2, 0], sizes = [8, 8, 32], strides = [1, 1, 1]} : vector<10x10x32xf32> to vector<8x8x32xf32>
    %147 = vector.shape_cast %146 : vector<8x8x32xf32> to vector<64x32xf32>
    %148 = vector.extract_strided_slice %135 {offsets = [2, 0, 0], sizes = [8, 8, 32], strides = [1, 1, 1]} : vector<10x10x32xf32> to vector<8x8x32xf32>
    %149 = vector.shape_cast %148 : vector<8x8x32xf32> to vector<64x32xf32>
    %150 = vector.extract_strided_slice %135 {offsets = [2, 1, 0], sizes = [8, 8, 32], strides = [1, 1, 1]} : vector<10x10x32xf32> to vector<8x8x32xf32>
    %151 = vector.shape_cast %150 : vector<8x8x32xf32> to vector<64x32xf32>
    %152 = vector.extract_strided_slice %135 {offsets = [2, 2, 0], sizes = [8, 8, 32], strides = [1, 1, 1]} : vector<10x10x32xf32> to vector<8x8x32xf32>
    %153 = vector.shape_cast %152 : vector<8x8x32xf32> to vector<64x32xf32>
    %154 = tpu.concatenate %137, %139, %141, %143, %145, %147, %149, %151, %153 in 1 : vector<64x32xf32>, vector<64x32xf32>, vector<64x32xf32>, vector<64x32xf32>, vector<64x32xf32>, vector<64x32xf32>, vector<64x32xf32>, vector<64x32xf32>, vector<64x32xf32> -> vector<64x288xf32>
    %c1_132 = arith.constant 1 : index
    %c0_133 = arith.constant 0 : index
    %c0_134 = arith.constant 0 : index
    %155 = vector.load %arg4[%c1_132, %c0_133, %c0_134] : memref<2x288x8xf32, #tpu.memory_space<vmem>>, vector<1x288x8xf32>
    %156 = vector.shape_cast %155 : vector<1x288x8xf32> to vector<288x8xf32>
    %cst_135 = arith.constant dense<0.000000e+00> : vector<64x8xf32>
    %157 = tpu.matmul %154, %156, %cst_135 {dimension_numbers = #tpu.dot_dimension_numbers<[1], [0], [0], [1], [0, 0, 1, 1], [], []>} : vector<64x288xf32>, vector<288x8xf32>, vector<64x8xf32> -> vector<64x8xf32>
    %cst_136 = arith.constant 0.000000e+00 : f32
    %158 = vector.broadcast %cst_136 : f32 to vector<64x8xf32>
    %159 = arith.maximumf %157, %158 : vector<64x8xf32>
    %c1_137 = arith.constant 1 : index
    %c0_138 = arith.constant 0 : index
    %c0_139 = arith.constant 0 : index
    %160 = vector.load %arg5[%c1_137, %c0_138, %c0_139] : memref<2x8x32xf32, #tpu.memory_space<vmem>>, vector<1x8x32xf32>
    %161 = vector.shape_cast %160 : vector<1x8x32xf32> to vector<8x32xf32>
    %cst_140 = arith.constant dense<0.000000e+00> : vector<64x32xf32>
    %162 = tpu.matmul %159, %161, %cst_140 {dimension_numbers = #tpu.dot_dimension_numbers<[1], [0], [0], [1], [0, 0, 1, 1], [], []>} : vector<64x8xf32>, vector<8x32xf32>, vector<64x32xf32> -> vector<64x32xf32>
    %163 = vector.extract_strided_slice %133 {offsets = [1, 1, 0], sizes = [8, 8, 32], strides = [1, 1, 1]} : vector<10x10x32xf32> to vector<8x8x32xf32>
    %164 = vector.shape_cast %163 : vector<8x8x32xf32> to vector<64x32xf32>
    %165 = arith.addf %164, %162 : vector<64x32xf32>
    %166 = vector.shape_cast %165 : vector<64x32xf32> to vector<8x8x32xf32>
    %c1_141 = arith.constant 1 : index
    %c1_142 = arith.constant 1 : index
    %c0_143 = arith.constant 0 : index
    %167 = vector.load %arg12[%c1_141, %c1_142, %c0_143] : memref<10x10x32xf32, #tpu.memory_space<vmem>>, vector<8x8x32xf32>
    tpu.vector_store %arg12[%c1_141, %c1_142, %c0_143], %166 {strides = array<i32>} : memref<10x10x32xf32, #tpu.memory_space<vmem>>, vector<8x8x32xf32>,
    %c0_144 = arith.constant 0 : index
    %c0_145 = arith.constant 0 : index
    %c0_146 = arith.constant 0 : index
    %168 = vector.load %arg12[%c0_144, %c0_145, %c0_146] : memref<10x10x32xf32, #tpu.memory_space<vmem>>, vector<10x10x32xf32>
    %cst_147 = arith.constant 0.000000e+00 : f32
    %169 = vector.broadcast %cst_147 : f32 to vector<10x10x32xf32>
    %170 = arith.maximumf %168, %169 : vector<10x10x32xf32>
    %171 = vector.extract_strided_slice %170 {offsets = [0, 0, 0], sizes = [8, 8, 32], strides = [1, 1, 1]} : vector<10x10x32xf32> to vector<8x8x32xf32>
    %172 = vector.shape_cast %171 : vector<8x8x32xf32> to vector<64x32xf32>
    %173 = vector.extract_strided_slice %170 {offsets = [0, 1, 0], sizes = [8, 8, 32], strides = [1, 1, 1]} : vector<10x10x32xf32> to vector<8x8x32xf32>
    %174 = vector.shape_cast %173 : vector<8x8x32xf32> to vector<64x32xf32>
    %175 = vector.extract_strided_slice %170 {offsets = [0, 2, 0], sizes = [8, 8, 32], strides = [1, 1, 1]} : vector<10x10x32xf32> to vector<8x8x32xf32>
    %176 = vector.shape_cast %175 : vector<8x8x32xf32> to vector<64x32xf32>
    %177 = vector.extract_strided_slice %170 {offsets = [1, 0, 0], sizes = [8, 8, 32], strides = [1, 1, 1]} : vector<10x10x32xf32> to vector<8x8x32xf32>
    %178 = vector.shape_cast %177 : vector<8x8x32xf32> to vector<64x32xf32>
    %179 = vector.extract_strided_slice %170 {offsets = [1, 1, 0], sizes = [8, 8, 32], strides = [1, 1, 1]} : vector<10x10x32xf32> to vector<8x8x32xf32>
    %180 = vector.shape_cast %179 : vector<8x8x32xf32> to vector<64x32xf32>
    %181 = vector.extract_strided_slice %170 {offsets = [1, 2, 0], sizes = [8, 8, 32], strides = [1, 1, 1]} : vector<10x10x32xf32> to vector<8x8x32xf32>
    %182 = vector.shape_cast %181 : vector<8x8x32xf32> to vector<64x32xf32>
    %183 = vector.extract_strided_slice %170 {offsets = [2, 0, 0], sizes = [8, 8, 32], strides = [1, 1, 1]} : vector<10x10x32xf32> to vector<8x8x32xf32>
    %184 = vector.shape_cast %183 : vector<8x8x32xf32> to vector<64x32xf32>
    %185 = vector.extract_strided_slice %170 {offsets = [2, 1, 0], sizes = [8, 8, 32], strides = [1, 1, 1]} : vector<10x10x32xf32> to vector<8x8x32xf32>
    %186 = vector.shape_cast %185 : vector<8x8x32xf32> to vector<64x32xf32>
    %187 = vector.extract_strided_slice %170 {offsets = [2, 2, 0], sizes = [8, 8, 32], strides = [1, 1, 1]} : vector<10x10x32xf32> to vector<8x8x32xf32>
    %188 = vector.shape_cast %187 : vector<8x8x32xf32> to vector<64x32xf32>
    %189 = tpu.concatenate %172, %174, %176, %178, %180, %182, %184, %186, %188 in 1 : vector<64x32xf32>, vector<64x32xf32>, vector<64x32xf32>, vector<64x32xf32>, vector<64x32xf32>, vector<64x32xf32>, vector<64x32xf32>, vector<64x32xf32>, vector<64x32xf32> -> vector<64x288xf32>
    %c0_148 = arith.constant 0 : index
    %c0_149 = arith.constant 0 : index
    %190 = vector.load %arg6[%c0_148, %c0_149] : memref<288x64xf32, #tpu.memory_space<vmem>>, vector<288x64xf32>
    %cst_150 = arith.constant dense<0.000000e+00> : vector<64x64xf32>
    %191 = tpu.matmul %189, %190, %cst_150 {dimension_numbers = #tpu.dot_dimension_numbers<[1], [0], [0], [1], [0, 0, 1, 1], [], []>} : vector<64x288xf32>, vector<288x64xf32>, vector<64x64xf32> -> vector<64x64xf32>
    %c0_151 = arith.constant 0 : index
    %c0_152 = arith.constant 0 : index
    %192 = vector.load %arg7[%c0_151, %c0_152] : memref<1x64xf32, #tpu.memory_space<vmem>>, vector<1x64xf32>
    %193 = vector.broadcast %192 : vector<1x64xf32> to vector<64x64xf32>
    %194 = arith.addf %191, %193 : vector<64x64xf32>
    %cst_153 = arith.constant 0.000000e+00 : f32
    %195 = vector.broadcast %cst_153 : f32 to vector<64x64xf32>
    %196 = arith.maximumf %194, %195 : vector<64x64xf32>
    %197 = vector.extract_strided_slice %196 {offsets = [0, 0], sizes = [64, 16], strides = [1, 1]} : vector<64x64xf32> to vector<64x16xf32>
    %198 = vector.shape_cast %197 : vector<64x16xf32> to vector<8x8x16xf32>
    %c0_154 = arith.constant 0 : index
    %c1_155 = arith.constant 1 : index
    %c1_156 = arith.constant 1 : index
    %c0_157 = arith.constant 0 : index
    %199 = vector.load %arg13[%c0_154, %c1_155, %c1_156, %c0_157] : memref<4x10x10x16xf32, #tpu.memory_space<vmem>>, vector<1x8x8x16xf32>
    %200 = vector.shape_cast %199 : vector<1x8x8x16xf32> to vector<8x8x16xf32>
    %201 = vector.shape_cast %198 : vector<8x8x16xf32> to vector<1x8x8x16xf32>
    tpu.vector_store %arg13[%c0_154, %c1_155, %c1_156, %c0_157], %201 {strides = array<i32>} : memref<4x10x10x16xf32, #tpu.memory_space<vmem>>, vector<1x8x8x16xf32>,
    %202 = vector.extract_strided_slice %196 {offsets = [0, 16], sizes = [64, 16], strides = [1, 1]} : vector<64x64xf32> to vector<64x16xf32>
    %203 = vector.shape_cast %202 : vector<64x16xf32> to vector<8x8x16xf32>
    %c1_158 = arith.constant 1 : index
    %c1_159 = arith.constant 1 : index
    %c1_160 = arith.constant 1 : index
    %c0_161 = arith.constant 0 : index
    %204 = vector.load %arg13[%c1_158, %c1_159, %c1_160, %c0_161] : memref<4x10x10x16xf32, #tpu.memory_space<vmem>>, vector<1x8x8x16xf32>
    %205 = vector.shape_cast %204 : vector<1x8x8x16xf32> to vector<8x8x16xf32>
    %206 = vector.shape_cast %203 : vector<8x8x16xf32> to vector<1x8x8x16xf32>
    tpu.vector_store %arg13[%c1_158, %c1_159, %c1_160, %c0_161], %206 {strides = array<i32>} : memref<4x10x10x16xf32, #tpu.memory_space<vmem>>, vector<1x8x8x16xf32>,
    %207 = vector.extract_strided_slice %196 {offsets = [0, 32], sizes = [64, 16], strides = [1, 1]} : vector<64x64xf32> to vector<64x16xf32>
    %208 = vector.shape_cast %207 : vector<64x16xf32> to vector<8x8x16xf32>
    %c2_162 = arith.constant 2 : index
    %c1_163 = arith.constant 1 : index
    %c1_164 = arith.constant 1 : index
    %c0_165 = arith.constant 0 : index
    %209 = vector.load %arg13[%c2_162, %c1_163, %c1_164, %c0_165] : memref<4x10x10x16xf32, #tpu.memory_space<vmem>>, vector<1x8x8x16xf32>
    %210 = vector.shape_cast %209 : vector<1x8x8x16xf32> to vector<8x8x16xf32>
    %211 = vector.shape_cast %208 : vector<8x8x16xf32> to vector<1x8x8x16xf32>
    tpu.vector_store %arg13[%c2_162, %c1_163, %c1_164, %c0_165], %211 {strides = array<i32>} : memref<4x10x10x16xf32, #tpu.memory_space<vmem>>, vector<1x8x8x16xf32>,
    %212 = vector.extract_strided_slice %196 {offsets = [0, 48], sizes = [64, 16], strides = [1, 1]} : vector<64x64xf32> to vector<64x16xf32>
    %213 = vector.shape_cast %212 : vector<64x16xf32> to vector<8x8x16xf32>
    %c3_166 = arith.constant 3 : index
    %c1_167 = arith.constant 1 : index
    %c1_168 = arith.constant 1 : index
    %c0_169 = arith.constant 0 : index
    %214 = vector.load %arg13[%c3_166, %c1_167, %c1_168, %c0_169] : memref<4x10x10x16xf32, #tpu.memory_space<vmem>>, vector<1x8x8x16xf32>
    %215 = vector.shape_cast %214 : vector<1x8x8x16xf32> to vector<8x8x16xf32>
    %216 = vector.shape_cast %213 : vector<8x8x16xf32> to vector<1x8x8x16xf32>
    tpu.vector_store %arg13[%c3_166, %c1_167, %c1_168, %c0_169], %216 {strides = array<i32>} : memref<4x10x10x16xf32, #tpu.memory_space<vmem>>, vector<1x8x8x16xf32>,
    %c0_170 = arith.constant 0 : index
    %c0_171 = arith.constant 0 : index
    %c0_172 = arith.constant 0 : index
    %c0_173 = arith.constant 0 : index
    %217 = vector.load %arg13[%c0_170, %c0_171, %c0_172, %c0_173] : memref<4x10x10x16xf32, #tpu.memory_space<vmem>>, vector<1x10x10x16xf32>
    %218 = vector.shape_cast %217 : vector<1x10x10x16xf32> to vector<10x10x16xf32>
    %219 = vector.extract_strided_slice %218 {offsets = [0, 0, 0], sizes = [8, 8, 16], strides = [1, 1, 1]} : vector<10x10x16xf32> to vector<8x8x16xf32>
    %220 = vector.shape_cast %219 : vector<8x8x16xf32> to vector<64x16xf32>
    %221 = vector.extract_strided_slice %218 {offsets = [0, 1, 0], sizes = [8, 8, 16], strides = [1, 1, 1]} : vector<10x10x16xf32> to vector<8x8x16xf32>
    %222 = vector.shape_cast %221 : vector<8x8x16xf32> to vector<64x16xf32>
    %223 = vector.extract_strided_slice %218 {offsets = [0, 2, 0], sizes = [8, 8, 16], strides = [1, 1, 1]} : vector<10x10x16xf32> to vector<8x8x16xf32>
    %224 = vector.shape_cast %223 : vector<8x8x16xf32> to vector<64x16xf32>
    %225 = vector.extract_strided_slice %218 {offsets = [1, 0, 0], sizes = [8, 8, 16], strides = [1, 1, 1]} : vector<10x10x16xf32> to vector<8x8x16xf32>
    %226 = vector.shape_cast %225 : vector<8x8x16xf32> to vector<64x16xf32>
    %227 = vector.extract_strided_slice %218 {offsets = [1, 1, 0], sizes = [8, 8, 16], strides = [1, 1, 1]} : vector<10x10x16xf32> to vector<8x8x16xf32>
    %228 = vector.shape_cast %227 : vector<8x8x16xf32> to vector<64x16xf32>
    %229 = vector.extract_strided_slice %218 {offsets = [1, 2, 0], sizes = [8, 8, 16], strides = [1, 1, 1]} : vector<10x10x16xf32> to vector<8x8x16xf32>
    %230 = vector.shape_cast %229 : vector<8x8x16xf32> to vector<64x16xf32>
    %231 = vector.extract_strided_slice %218 {offsets = [2, 0, 0], sizes = [8, 8, 16], strides = [1, 1, 1]} : vector<10x10x16xf32> to vector<8x8x16xf32>
    %232 = vector.shape_cast %231 : vector<8x8x16xf32> to vector<64x16xf32>
    %233 = vector.extract_strided_slice %218 {offsets = [2, 1, 0], sizes = [8, 8, 16], strides = [1, 1, 1]} : vector<10x10x16xf32> to vector<8x8x16xf32>
    %234 = vector.shape_cast %233 : vector<8x8x16xf32> to vector<64x16xf32>
    %235 = vector.extract_strided_slice %218 {offsets = [2, 2, 0], sizes = [8, 8, 16], strides = [1, 1, 1]} : vector<10x10x16xf32> to vector<8x8x16xf32>
    %236 = vector.shape_cast %235 : vector<8x8x16xf32> to vector<64x16xf32>
    %237 = tpu.concatenate %220, %222, %224, %226, %228, %230, %232, %234, %236 in 1 : vector<64x16xf32>, vector<64x16xf32>, vector<64x16xf32>, vector<64x16xf32>, vector<64x16xf32>, vector<64x16xf32>, vector<64x16xf32>, vector<64x16xf32>, vector<64x16xf32> -> vector<64x144xf32>
    %c0_174 = arith.constant 0 : index
    %c0_175 = arith.constant 0 : index
    %c0_176 = arith.constant 0 : index
    %238 = vector.load %arg8[%c0_174, %c0_175, %c0_176] : memref<4x144x128xf32, #tpu.memory_space<vmem>>, vector<1x144x128xf32>
    %239 = vector.shape_cast %238 : vector<1x144x128xf32> to vector<144x128xf32>
    %cst_177 = arith.constant dense<0.000000e+00> : vector<64x128xf32>
    %240 = tpu.matmul %237, %239, %cst_177 {dimension_numbers = #tpu.dot_dimension_numbers<[1], [0], [0], [1], [0, 0, 1, 1], [], []>} : vector<64x144xf32>, vector<144x128xf32>, vector<64x128xf32> -> vector<64x128xf32>
    %c1_178 = arith.constant 1 : index
    %c0_179 = arith.constant 0 : index
    %c0_180 = arith.constant 0 : index
    %c0_181 = arith.constant 0 : index
    %241 = vector.load %arg13[%c1_178, %c0_179, %c0_180, %c0_181] : memref<4x10x10x16xf32, #tpu.memory_space<vmem>>, vector<1x10x10x16xf32>
    %242 = vector.shape_cast %241 : vector<1x10x10x16xf32> to vector<10x10x16xf32>
    %243 = vector.extract_strided_slice %242 {offsets = [0, 0, 0], sizes = [8, 8, 16], strides = [1, 1, 1]} : vector<10x10x16xf32> to vector<8x8x16xf32>
    %244 = vector.shape_cast %243 : vector<8x8x16xf32> to vector<64x16xf32>
    %245 = vector.extract_strided_slice %242 {offsets = [0, 1, 0], sizes = [8, 8, 16], strides = [1, 1, 1]} : vector<10x10x16xf32> to vector<8x8x16xf32>
    %246 = vector.shape_cast %245 : vector<8x8x16xf32> to vector<64x16xf32>
    %247 = vector.extract_strided_slice %242 {offsets = [0, 2, 0], sizes = [8, 8, 16], strides = [1, 1, 1]} : vector<10x10x16xf32> to vector<8x8x16xf32>
    %248 = vector.shape_cast %247 : vector<8x8x16xf32> to vector<64x16xf32>
    %249 = vector.extract_strided_slice %242 {offsets = [1, 0, 0], sizes = [8, 8, 16], strides = [1, 1, 1]} : vector<10x10x16xf32> to vector<8x8x16xf32>
    %250 = vector.shape_cast %249 : vector<8x8x16xf32> to vector<64x16xf32>
    %251 = vector.extract_strided_slice %242 {offsets = [1, 1, 0], sizes = [8, 8, 16], strides = [1, 1, 1]} : vector<10x10x16xf32> to vector<8x8x16xf32>
    %252 = vector.shape_cast %251 : vector<8x8x16xf32> to vector<64x16xf32>
    %253 = vector.extract_strided_slice %242 {offsets = [1, 2, 0], sizes = [8, 8, 16], strides = [1, 1, 1]} : vector<10x10x16xf32> to vector<8x8x16xf32>
    %254 = vector.shape_cast %253 : vector<8x8x16xf32> to vector<64x16xf32>
    %255 = vector.extract_strided_slice %242 {offsets = [2, 0, 0], sizes = [8, 8, 16], strides = [1, 1, 1]} : vector<10x10x16xf32> to vector<8x8x16xf32>
    %256 = vector.shape_cast %255 : vector<8x8x16xf32> to vector<64x16xf32>
    %257 = vector.extract_strided_slice %242 {offsets = [2, 1, 0], sizes = [8, 8, 16], strides = [1, 1, 1]} : vector<10x10x16xf32> to vector<8x8x16xf32>
    %258 = vector.shape_cast %257 : vector<8x8x16xf32> to vector<64x16xf32>
    %259 = vector.extract_strided_slice %242 {offsets = [2, 2, 0], sizes = [8, 8, 16], strides = [1, 1, 1]} : vector<10x10x16xf32> to vector<8x8x16xf32>
    %260 = vector.shape_cast %259 : vector<8x8x16xf32> to vector<64x16xf32>
    %261 = tpu.concatenate %244, %246, %248, %250, %252, %254, %256, %258, %260 in 1 : vector<64x16xf32>, vector<64x16xf32>, vector<64x16xf32>, vector<64x16xf32>, vector<64x16xf32>, vector<64x16xf32>, vector<64x16xf32>, vector<64x16xf32>, vector<64x16xf32> -> vector<64x144xf32>
    %c1_182 = arith.constant 1 : index
    %c0_183 = arith.constant 0 : index
    %c0_184 = arith.constant 0 : index
    %262 = vector.load %arg8[%c1_182, %c0_183, %c0_184] : memref<4x144x128xf32, #tpu.memory_space<vmem>>, vector<1x144x128xf32>
    %263 = vector.shape_cast %262 : vector<1x144x128xf32> to vector<144x128xf32>
    %cst_185 = arith.constant dense<0.000000e+00> : vector<64x128xf32>
    %264 = tpu.matmul %261, %263, %cst_185 {dimension_numbers = #tpu.dot_dimension_numbers<[1], [0], [0], [1], [0, 0, 1, 1], [], []>} : vector<64x144xf32>, vector<144x128xf32>, vector<64x128xf32> -> vector<64x128xf32>
    %265 = arith.addf %240, %264 : vector<64x128xf32>
    %c2_186 = arith.constant 2 : index
    %c0_187 = arith.constant 0 : index
    %c0_188 = arith.constant 0 : index
    %c0_189 = arith.constant 0 : index
    %266 = vector.load %arg13[%c2_186, %c0_187, %c0_188, %c0_189] : memref<4x10x10x16xf32, #tpu.memory_space<vmem>>, vector<1x10x10x16xf32>
    %267 = vector.shape_cast %266 : vector<1x10x10x16xf32> to vector<10x10x16xf32>
    %268 = vector.extract_strided_slice %267 {offsets = [0, 0, 0], sizes = [8, 8, 16], strides = [1, 1, 1]} : vector<10x10x16xf32> to vector<8x8x16xf32>
    %269 = vector.shape_cast %268 : vector<8x8x16xf32> to vector<64x16xf32>
    %270 = vector.extract_strided_slice %267 {offsets = [0, 1, 0], sizes = [8, 8, 16], strides = [1, 1, 1]} : vector<10x10x16xf32> to vector<8x8x16xf32>
    %271 = vector.shape_cast %270 : vector<8x8x16xf32> to vector<64x16xf32>
    %272 = vector.extract_strided_slice %267 {offsets = [0, 2, 0], sizes = [8, 8, 16], strides = [1, 1, 1]} : vector<10x10x16xf32> to vector<8x8x16xf32>
    %273 = vector.shape_cast %272 : vector<8x8x16xf32> to vector<64x16xf32>
    %274 = vector.extract_strided_slice %267 {offsets = [1, 0, 0], sizes = [8, 8, 16], strides = [1, 1, 1]} : vector<10x10x16xf32> to vector<8x8x16xf32>
    %275 = vector.shape_cast %274 : vector<8x8x16xf32> to vector<64x16xf32>
    %276 = vector.extract_strided_slice %267 {offsets = [1, 1, 0], sizes = [8, 8, 16], strides = [1, 1, 1]} : vector<10x10x16xf32> to vector<8x8x16xf32>
    %277 = vector.shape_cast %276 : vector<8x8x16xf32> to vector<64x16xf32>
    %278 = vector.extract_strided_slice %267 {offsets = [1, 2, 0], sizes = [8, 8, 16], strides = [1, 1, 1]} : vector<10x10x16xf32> to vector<8x8x16xf32>
    %279 = vector.shape_cast %278 : vector<8x8x16xf32> to vector<64x16xf32>
    %280 = vector.extract_strided_slice %267 {offsets = [2, 0, 0], sizes = [8, 8, 16], strides = [1, 1, 1]} : vector<10x10x16xf32> to vector<8x8x16xf32>
    %281 = vector.shape_cast %280 : vector<8x8x16xf32> to vector<64x16xf32>
    %282 = vector.extract_strided_slice %267 {offsets = [2, 1, 0], sizes = [8, 8, 16], strides = [1, 1, 1]} : vector<10x10x16xf32> to vector<8x8x16xf32>
    %283 = vector.shape_cast %282 : vector<8x8x16xf32> to vector<64x16xf32>
    %284 = vector.extract_strided_slice %267 {offsets = [2, 2, 0], sizes = [8, 8, 16], strides = [1, 1, 1]} : vector<10x10x16xf32> to vector<8x8x16xf32>
    %285 = vector.shape_cast %284 : vector<8x8x16xf32> to vector<64x16xf32>
    %286 = tpu.concatenate %269, %271, %273, %275, %277, %279, %281, %283, %285 in 1 : vector<64x16xf32>, vector<64x16xf32>, vector<64x16xf32>, vector<64x16xf32>, vector<64x16xf32>, vector<64x16xf32>, vector<64x16xf32>, vector<64x16xf32>, vector<64x16xf32> -> vector<64x144xf32>
    %c2_190 = arith.constant 2 : index
    %c0_191 = arith.constant 0 : index
    %c0_192 = arith.constant 0 : index
    %287 = vector.load %arg8[%c2_190, %c0_191, %c0_192] : memref<4x144x128xf32, #tpu.memory_space<vmem>>, vector<1x144x128xf32>
    %288 = vector.shape_cast %287 : vector<1x144x128xf32> to vector<144x128xf32>
    %cst_193 = arith.constant dense<0.000000e+00> : vector<64x128xf32>
    %289 = tpu.matmul %286, %288, %cst_193 {dimension_numbers = #tpu.dot_dimension_numbers<[1], [0], [0], [1], [0, 0, 1, 1], [], []>} : vector<64x144xf32>, vector<144x128xf32>, vector<64x128xf32> -> vector<64x128xf32>
    %290 = arith.addf %265, %289 : vector<64x128xf32>
    %c3_194 = arith.constant 3 : index
    %c0_195 = arith.constant 0 : index
    %c0_196 = arith.constant 0 : index
    %c0_197 = arith.constant 0 : index
    %291 = vector.load %arg13[%c3_194, %c0_195, %c0_196, %c0_197] : memref<4x10x10x16xf32, #tpu.memory_space<vmem>>, vector<1x10x10x16xf32>
    %292 = vector.shape_cast %291 : vector<1x10x10x16xf32> to vector<10x10x16xf32>
    %293 = vector.extract_strided_slice %292 {offsets = [0, 0, 0], sizes = [8, 8, 16], strides = [1, 1, 1]} : vector<10x10x16xf32> to vector<8x8x16xf32>
    %294 = vector.shape_cast %293 : vector<8x8x16xf32> to vector<64x16xf32>
    %295 = vector.extract_strided_slice %292 {offsets = [0, 1, 0], sizes = [8, 8, 16], strides = [1, 1, 1]} : vector<10x10x16xf32> to vector<8x8x16xf32>
    %296 = vector.shape_cast %295 : vector<8x8x16xf32> to vector<64x16xf32>
    %297 = vector.extract_strided_slice %292 {offsets = [0, 2, 0], sizes = [8, 8, 16], strides = [1, 1, 1]} : vector<10x10x16xf32> to vector<8x8x16xf32>
    %298 = vector.shape_cast %297 : vector<8x8x16xf32> to vector<64x16xf32>
    %299 = vector.extract_strided_slice %292 {offsets = [1, 0, 0], sizes = [8, 8, 16], strides = [1, 1, 1]} : vector<10x10x16xf32> to vector<8x8x16xf32>
    %300 = vector.shape_cast %299 : vector<8x8x16xf32> to vector<64x16xf32>
    %301 = vector.extract_strided_slice %292 {offsets = [1, 1, 0], sizes = [8, 8, 16], strides = [1, 1, 1]} : vector<10x10x16xf32> to vector<8x8x16xf32>
    %302 = vector.shape_cast %301 : vector<8x8x16xf32> to vector<64x16xf32>
    %303 = vector.extract_strided_slice %292 {offsets = [1, 2, 0], sizes = [8, 8, 16], strides = [1, 1, 1]} : vector<10x10x16xf32> to vector<8x8x16xf32>
    %304 = vector.shape_cast %303 : vector<8x8x16xf32> to vector<64x16xf32>
    %305 = vector.extract_strided_slice %292 {offsets = [2, 0, 0], sizes = [8, 8, 16], strides = [1, 1, 1]} : vector<10x10x16xf32> to vector<8x8x16xf32>
    %306 = vector.shape_cast %305 : vector<8x8x16xf32> to vector<64x16xf32>
    %307 = vector.extract_strided_slice %292 {offsets = [2, 1, 0], sizes = [8, 8, 16], strides = [1, 1, 1]} : vector<10x10x16xf32> to vector<8x8x16xf32>
    %308 = vector.shape_cast %307 : vector<8x8x16xf32> to vector<64x16xf32>
    %309 = vector.extract_strided_slice %292 {offsets = [2, 2, 0], sizes = [8, 8, 16], strides = [1, 1, 1]} : vector<10x10x16xf32> to vector<8x8x16xf32>
    %310 = vector.shape_cast %309 : vector<8x8x16xf32> to vector<64x16xf32>
    %311 = tpu.concatenate %294, %296, %298, %300, %302, %304, %306, %308, %310 in 1 : vector<64x16xf32>, vector<64x16xf32>, vector<64x16xf32>, vector<64x16xf32>, vector<64x16xf32>, vector<64x16xf32>, vector<64x16xf32>, vector<64x16xf32>, vector<64x16xf32> -> vector<64x144xf32>
    %c3_198 = arith.constant 3 : index
    %c0_199 = arith.constant 0 : index
    %c0_200 = arith.constant 0 : index
    %312 = vector.load %arg8[%c3_198, %c0_199, %c0_200] : memref<4x144x128xf32, #tpu.memory_space<vmem>>, vector<1x144x128xf32>
    %313 = vector.shape_cast %312 : vector<1x144x128xf32> to vector<144x128xf32>
    %cst_201 = arith.constant dense<0.000000e+00> : vector<64x128xf32>
    %314 = tpu.matmul %311, %313, %cst_201 {dimension_numbers = #tpu.dot_dimension_numbers<[1], [0], [0], [1], [0, 0, 1, 1], [], []>} : vector<64x144xf32>, vector<144x128xf32>, vector<64x128xf32> -> vector<64x128xf32>
    %315 = arith.addf %290, %314 : vector<64x128xf32>
    %c0_202 = arith.constant 0 : index
    %c0_203 = arith.constant 0 : index
    %316 = vector.load %arg9[%c0_202, %c0_203] : memref<1x128xf32, #tpu.memory_space<vmem>>, vector<1x128xf32>
    %317 = vector.broadcast %316 : vector<1x128xf32> to vector<64x128xf32>
    %318 = arith.addf %315, %317 : vector<64x128xf32>
    %c0_204 = arith.constant 0 : index
    %c0_205 = arith.constant 0 : index
    %c0_206 = arith.constant 0 : index
    %319 = vector.load %arg10[%c0_204, %c0_205, %c0_206] : memref<1x64x128xf32, #tpu.memory_space<vmem>>, vector<1x64x128xf32>
    %320 = vector.shape_cast %319 : vector<1x64x128xf32> to vector<64x128xf32>
    %321 = vector.shape_cast %318 : vector<64x128xf32> to vector<1x64x128xf32>
    tpu.vector_store %arg10[%c0_204, %c0_205, %c0_206], %321 {strides = array<i32>} : memref<1x64x128xf32, #tpu.memory_space<vmem>>, vector<1x64x128xf32>,
    return
  }
  func.func @transform_0(%arg0: i32) -> (i32, i32, i32, i32) {
    %c0_i32 = arith.constant 0 : i32
    %c0_i32_0 = arith.constant 0 : i32
    %c0_i32_1 = arith.constant 0 : i32
    %c0_i32_2 = arith.constant 0 : i32
    return %arg0, %c0_i32, %c0_i32_0, %c0_i32_1 : i32, i32, i32, i32
  }
  func.func @transform_1(%arg0: i32) -> (i32, i32) {
    %c0_i32 = arith.constant 0 : i32
    %c0_i32_0 = arith.constant 0 : i32
    %c0_i32_1 = arith.constant 0 : i32
    return %c0_i32, %c0_i32_0 : i32, i32
  }
  func.func @transform_2(%arg0: i32) -> (i32, i32) {
    %c0_i32 = arith.constant 0 : i32
    %c0_i32_0 = arith.constant 0 : i32
    %c0_i32_1 = arith.constant 0 : i32
    return %c0_i32, %c0_i32_0 : i32, i32
  }
  func.func @transform_3(%arg0: i32) -> (i32, i32, i32) {
    %c0_i32 = arith.constant 0 : i32
    %c0_i32_0 = arith.constant 0 : i32
    %c0_i32_1 = arith.constant 0 : i32
    %c0_i32_2 = arith.constant 0 : i32
    return %c0_i32, %c0_i32_0, %c0_i32_1 : i32, i32, i32
  }
  func.func @transform_4(%arg0: i32) -> (i32, i32, i32) {
    %c0_i32 = arith.constant 0 : i32
    %c0_i32_0 = arith.constant 0 : i32
    %c0_i32_1 = arith.constant 0 : i32
    %c0_i32_2 = arith.constant 0 : i32
    return %c0_i32, %c0_i32_0, %c0_i32_1 : i32, i32, i32
  }
  func.func @transform_5(%arg0: i32) -> (i32, i32) {
    %c0_i32 = arith.constant 0 : i32
    %c0_i32_0 = arith.constant 0 : i32
    %c0_i32_1 = arith.constant 0 : i32
    return %c0_i32, %c0_i32_0 : i32, i32
  }
  func.func @transform_6(%arg0: i32) -> (i32, i32) {
    %c0_i32 = arith.constant 0 : i32
    %c0_i32_0 = arith.constant 0 : i32
    %c0_i32_1 = arith.constant 0 : i32
    return %c0_i32, %c0_i32_0 : i32, i32
  }
  func.func @transform_7(%arg0: i32) -> (i32, i32, i32) {
    %c0_i32 = arith.constant 0 : i32
    %c0_i32_0 = arith.constant 0 : i32
    %c0_i32_1 = arith.constant 0 : i32
    %c0_i32_2 = arith.constant 0 : i32
    return %c0_i32, %c0_i32_0, %c0_i32_1 : i32, i32, i32
  }
  func.func @transform_8(%arg0: i32) -> (i32, i32) {
    %c0_i32 = arith.constant 0 : i32
    %c0_i32_0 = arith.constant 0 : i32
    %c0_i32_1 = arith.constant 0 : i32
    return %c0_i32, %c0_i32_0 : i32, i32
  }
  func.func @transform_9(%arg0: i32) -> (i32, i32, i32) {
    %c0_i32 = arith.constant 0 : i32
    %c0_i32_0 = arith.constant 0 : i32
    %c0_i32_1 = arith.constant 0 : i32
    return %arg0, %c0_i32, %c0_i32_0 : i32, i32, i32
  }
}

</mosaic_0001>

<llo_original>
// kernel: decoder_forward.1
$region0: #{decoder_forward.1}
  #allocation0 [shape = 'u32[]', space=smem, size = 0x4, offset = 0x4, fixed_abs, tag = 'smem constant byte address 0x4 - core index']
  #allocation1 [shape = 'u32[72,128]{1,0:T(1,128)}', space=vmem, size = 0x9000, scoped, tag = 'internal scratch']
  #allocation2 [shape = 'f32[10,10,4]{2,1,0:T(8,128)}', space=vmem, size = 0x14000, scoped, tag = 'scratch operand']
  #allocation3 [shape = 'f32[10,10,32]{2,1,0:T(8,128)}', space=vmem, size = 0x14000, scoped, tag = 'scratch operand']
  #allocation4 [shape = 'f32[4,10,10,16]{3,2,1,0:T(8,128)}', space=vmem, size = 0x50000, scoped, tag = 'scratch operand']
  %s0 = inlined_call_operand.vmem [shape: f32[2,8,8,4], index: 0, kind: input, shape index: {}]
  %s1 = inlined_call_operand.vmem [shape: f32[36,32], index: 1, kind: input, shape index: {}]
  %s2 = inlined_call_operand.vmem [shape: f32[1,32], index: 2, kind: input, shape index: {}]
  %s3 = inlined_call_operand.hbm [shape: f32[2,288,8], index: 3, kind: input, shape index: {}]
  %s4 = inlined_call_operand.vmem [shape: f32[2,8,32], index: 4, kind: input, shape index: {}]
  %s5 = inlined_call_operand.hbm [shape: f32[288,64], index: 5, kind: input, shape index: {}]
  %s6 = inlined_call_operand.vmem [shape: f32[1,64], index: 6, kind: input, shape index: {}]
  %s7 = inlined_call_operand.hbm [shape: f32[4,144,128], index: 7, kind: input, shape index: {}]
  %s8 = inlined_call_operand.vmem [shape: f32[1,128], index: 8, kind: input, shape index: {}]
  %s9 = inlined_call_operand.vmem [shape: f32[2,64,128], index: 9, kind: output, shape index: {}]
  %s10 = sld [smem:[#allocation0]]
  $region81: #{decoder_forward.1} parent=0
    _
  %s12 = ssub.s32 1, %s10
  %s13 = scalar_select 0, %s12, %s10
  $region1: #{decoder_forward.1} parent=0
    #allocation5 [shape = 'u8[294912]{0}', space=vmem, size = 0x48000, scoped, tag = 'input window, operand 3, single buffered']
    #allocation6 [shape = 's32[2]{0}', space=sflag, size = 0x8, scoped, tag = 'scoped memory for decoder_forward.1']
    #allocation7 [shape = 'u8[147456]{0}', space=vmem, size = 0x24000, scoped, tag = 'input window, operand 5, single buffered']
    #allocation8 [shape = 's32[1]{0}', space=sflag, size = 0x4, scoped, tag = 'scoped memory for decoder_forward.1']
    #allocation9 [shape = 'u8[294912]{0}', space=vmem, size = 0x48000, scoped, tag = 'input window, operand 7, single buffered']
    %14 = vsyncpa [#allocation6], 0
    %15 = vsyncpa [#allocation8], 0
    loop: start=0, step=1, limit=4
    $region2: #{decoder_forward.1} parent=1 // loop_pre_header
      _
    $region3: #{decoder_forward.1} parent=1 // loop_header
      %s17 = sphi 0, %s21
      %p18 = scmp.ge.s32.totalorder %s17, 4
      %s27 = sphi 0, %s29
      %s30 = sphi 0, %s27
      %s31 = sphi 0, %s30
      %s47 = sphi 0, %s31
      %s51 = sphi 0, %s51
      %s53 = sphi 0, %s51
      %s54 = sphi 0, %s53
      %s68 = sphi 0, %s54
      %s72 = sphi 0, %s72
      %s74 = sphi 0, %s72
      %s75 = sphi 0, %s74
      %s89 = sphi 0, %s75
      %s93 = sphi 0, %s93
      %s95 = sphi 0, %s93
      %s96 = sphi 0, %s95
      %s110 = sphi 0, %s96
      %s114 = sphi 0, %s114
      %s116 = sphi 0, %s114
      %s117 = sphi 0, %s116
      %s131 = sphi 0, %s117
      %s135 = sphi 0, %s135
      %s137 = sphi 0, %s135
      %s138 = sphi 0, %s137
      %s152 = sphi 0, %s138
      %s156 = sphi 0, %s156
      %s158 = sphi 0, %s156
      %s159 = sphi 0, %s158
      %s173 = sphi 0, %s159
      %s177 = sphi 0, %s177
      %s179 = sphi 0, %s177
      %s180 = sphi 0, %s179
      %s194 = sphi 0, %s180
      %s198 = sphi 0, %s198
      %s200 = sphi 0, %s198
      %s201 = sphi 0, %s200
      %s215 = sphi 0, %s201
      %s221 = sphi 0, %s223
      %s224 = sphi 0, %s221
      %s225 = sphi 0, %s224
      %s241 = sphi 0, %s225
    $region4: #{decoder_forward.1} parent=1 // loop_header_branch
      %20 = sbr.rel (%p18) target = $region8
    $region5: #{decoder_forward.1} parent=1 // loop_body
      %s22 = ssub.s32 %s17, 1
      %s23 = ssub.s32 %s17, 2
      %s24 = sadd.s32 %s17, 1
      %s25 = ssub.s32 %s17, %s24
      %p26 = scmp.eq.s32.totalorder %s25, 0
      %s28 = sadd.s32 %s27, 1
      %s29 = scalar_select %p26, %s27, %s28
      %p32 = pneg %p26
      %p33 = scmp.eq.s32.totalorder %s17, 1
      %p34 = por %p32, %p33
      %p35 = scmp.ne.s32.totalorder %s27, %s30
      %p36 = scmp.eq.s32.totalorder %s17, 0
      %p37 = por %p35, %p36
      %p38 = scmp.ne.s32.totalorder %s27, %s30
      %p39 = scmp.eq.s32.totalorder %s22, 1
      %p40 = por %p38, %p39
      %p41 = scmp.ne.s32.totalorder %s30, %s31
      %p42 = scmp.eq.s32.totalorder %s22, 0
      %p43 = por %p41, %p42
      %p44 = scmp.ne.s32.totalorder %s30, %s31
      %p45 = scmp.eq.s32.totalorder %s23, 1
      %p46 = por %p44, %p45
      %p48 = scmp.ne.s32.totalorder %s31, %s47
      %p49 = scmp.eq.s32.totalorder %s23, 0
      %p50 = por %p48, %p49
      %s52 = sadd.s32 %s51, 1
      %p55 = scmp.eq.s32.totalorder %s17, 1
      %p56 = scmp.ne.s32.totalorder %s51, %s53
      %p57 = scmp.eq.s32.totalorder %s17, 0
      %p58 = por %p56, %p57
      %p59 = scmp.ne.s32.totalorder %s51, %s53
      %p60 = scmp.eq.s32.totalorder %s22, 1
      %p61 = por %p59, %p60
      %p62 = scmp.ne.s32.totalorder %s53, %s54
      %p63 = scmp.eq.s32.totalorder %s22, 0
      %p64 = por %p62, %p63
      %p65 = scmp.ne.s32.totalorder %s53, %s54
      %p66 = scmp.eq.s32.totalorder %s23, 1
      %p67 = por %p65, %p66
      %p69 = scmp.ne.s32.totalorder %s54, %s68
      %p70 = scmp.eq.s32.totalorder %s23, 0
      %p71 = por %p69, %p70
      %s73 = sadd.s32 %s72, 1
      %p76 = scmp.eq.s32.totalorder %s17, 1
      %p77 = scmp.ne.s32.totalorder %s72, %s74
      %p78 = scmp.eq.s32.totalorder %s17, 0
      %p79 = por %p77, %p78
      %p80 = scmp.ne.s32.totalorder %s72, %s74
      %p81 = scmp.eq.s32.totalorder %s22, 1
      %p82 = por %p80, %p81
      %p83 = scmp.ne.s32.totalorder %s74, %s75
      %p84 = scmp.eq.s32.totalorder %s22, 0
      %p85 = por %p83, %p84
      %p86 = scmp.ne.s32.totalorder %s74, %s75
      %p87 = scmp.eq.s32.totalorder %s23, 1
      %p88 = por %p86, %p87
      %p90 = scmp.ne.s32.totalorder %s75, %s89
      %p91 = scmp.eq.s32.totalorder %s23, 0
      %p92 = por %p90, %p91
      %s94 = sadd.s32 %s93, 1
      %p97 = scmp.eq.s32.totalorder %s17, 1
      %p98 = scmp.ne.s32.totalorder %s93, %s95
      %p99 = scmp.eq.s32.totalorder %s17, 0
      %p100 = por %p98, %p99
      %p101 = scmp.ne.s32.totalorder %s93, %s95
      %p102 = scmp.eq.s32.totalorder %s22, 1
      %p103 = por %p101, %p102
      %p104 = scmp.ne.s32.totalorder %s95, %s96
      %p105 = scmp.eq.s32.totalorder %s22, 0
      %p106 = por %p104, %p105
      %p107 = scmp.ne.s32.totalorder %s95, %s96
      %p108 = scmp.eq.s32.totalorder %s23, 1
      %p109 = por %p107, %p108
      %p111 = scmp.ne.s32.totalorder %s96, %s110
      %p112 = scmp.eq.s32.totalorder %s23, 0
      %p113 = por %p111, %p112
      %s115 = sadd.s32 %s114, 1
      %p118 = scmp.eq.s32.totalorder %s17, 1
      %p119 = scmp.ne.s32.totalorder %s114, %s116
      %p120 = scmp.eq.s32.totalorder %s17, 0
      %p121 = por %p119, %p120
      %p122 = scmp.ne.s32.totalorder %s114, %s116
      %p123 = scmp.eq.s32.totalorder %s22, 1
      %p124 = por %p122, %p123
      %p125 = scmp.ne.s32.totalorder %s116, %s117
      %p126 = scmp.eq.s32.totalorder %s22, 0
      %p127 = por %p125, %p126
      %p128 = scmp.ne.s32.totalorder %s116, %s117
      %p129 = scmp.eq.s32.totalorder %s23, 1
      %p130 = por %p128, %p129
      %p132 = scmp.ne.s32.totalorder %s117, %s131
      %p133 = scmp.eq.s32.totalorder %s23, 0
      %p134 = por %p132, %p133
      %s136 = sadd.s32 %s135, 1
      %p139 = scmp.eq.s32.totalorder %s17, 1
      %p140 = scmp.ne.s32.totalorder %s135, %s137
      %p141 = scmp.eq.s32.totalorder %s17, 0
      %p142 = por %p140, %p141
      %p143 = scmp.ne.s32.totalorder %s135, %s137
      %p144 = scmp.eq.s32.totalorder %s22, 1
      %p145 = por %p143, %p144
      %p146 = scmp.ne.s32.totalorder %s137, %s138
      %p147 = scmp.eq.s32.totalorder %s22, 0
      %p148 = por %p146, %p147
      %p149 = scmp.ne.s32.totalorder %s137, %s138
      %p150 = scmp.eq.s32.totalorder %s23, 1
      %p151 = por %p149, %p150
      %p153 = scmp.ne.s32.totalorder %s138, %s152
      %p154 = scmp.eq.s32.totalorder %s23, 0
      %p155 = por %p153, %p154
      %s157 = sadd.s32 %s156, 1
      %p160 = scmp.eq.s32.totalorder %s17, 1
      %p161 = scmp.ne.s32.totalorder %s156, %s158
      %p162 = scmp.eq.s32.totalorder %s17, 0
      %p163 = por %p161, %p162
      %p164 = scmp.ne.s32.totalorder %s156, %s158
      %p165 = scmp.eq.s32.totalorder %s22, 1
      %p166 = por %p164, %p165
      %p167 = scmp.ne.s32.totalorder %s158, %s159
      %p168 = scmp.eq.s32.totalorder %s22, 0
      %p169 = por %p167, %p168
      %p170 = scmp.ne.s32.totalorder %s158, %s159
      %p171 = scmp.eq.s32.totalorder %s23, 1
      %p172 = por %p170, %p171
      %p174 = scmp.ne.s32.totalorder %s159, %s173
      %p175 = scmp.eq.s32.totalorder %s23, 0
      %p176 = por %p174, %p175
      %s178 = sadd.s32 %s177, 1
      %p181 = scmp.eq.s32.totalorder %s17, 1
      %p182 = scmp.ne.s32.totalorder %s177, %s179
      %p183 = scmp.eq.s32.totalorder %s17, 0
      %p184 = por %p182, %p183
      %p185 = scmp.ne.s32.totalorder %s177, %s179
      %p186 = scmp.eq.s32.totalorder %s22, 1
      %p187 = por %p185, %p186
      %p188 = scmp.ne.s32.totalorder %s179, %s180
      %p189 = scmp.eq.s32.totalorder %s22, 0
      %p190 = por %p188, %p189
      %p191 = scmp.ne.s32.totalorder %s179, %s180
      %p192 = scmp.eq.s32.totalorder %s23, 1
      %p193 = por %p191, %p192
      %p195 = scmp.ne.s32.totalorder %s180, %s194
      %p196 = scmp.eq.s32.totalorder %s23, 0
      %p197 = por %p195, %p196
      %s199 = sadd.s32 %s198, 1
      %p202 = scmp.eq.s32.totalorder %s17, 1
      %p203 = scmp.ne.s32.totalorder %s198, %s200
      %p204 = scmp.eq.s32.totalorder %s17, 0
      %p205 = por %p203, %p204
      %p206 = scmp.ne.s32.totalorder %s198, %s200
      %p207 = scmp.eq.s32.totalorder %s22, 1
      %p208 = por %p206, %p207
      %p209 = scmp.ne.s32.totalorder %s200, %s201
      %p210 = scmp.eq.s32.totalorder %s22, 0
      %p211 = por %p209, %p210
      %p212 = scmp.ne.s32.totalorder %s200, %s201
      %p213 = scmp.eq.s32.totalorder %s23, 1
      %p214 = por %p212, %p213
      %p216 = scmp.ne.s32.totalorder %s201, %s215
      %p217 = scmp.eq.s32.totalorder %s23, 0
      %p218 = por %p216, %p217
      %s219 = ssub.s32 %s17, %s24
      %p220 = scmp.eq.s32.totalorder %s219, 0
      %s222 = sadd.s32 %s221, 1
      %s223 = scalar_select %p220, %s221, %s222
      %p226 = pneg %p220
      %p227 = scmp.eq.s32.totalorder %s17, 1
      %p228 = por %p226, %p227
      %p229 = scmp.ne.s32.totalorder %s221, %s224
      %p230 = scmp.eq.s32.totalorder %s17, 0
      %p231 = por %p229, %p230
      %p232 = scmp.ne.s32.totalorder %s221, %s224
      %p233 = scmp.eq.s32.totalorder %s22, 1
      %p234 = por %p232, %p233
      %p235 = scmp.ne.s32.totalorder %s224, %s225
      %p236 = scmp.eq.s32.totalorder %s22, 0
      %p237 = por %p235, %p236
      %p238 = scmp.ne.s32.totalorder %s224, %s225
      %p239 = scmp.eq.s32.totalorder %s23, 1
      %p240 = por %p238, %p239
      %p242 = scmp.ne.s32.totalorder %s225, %s241
      %p243 = scmp.eq.s32.totalorder %s23, 0
      %p244 = por %p242, %p243
      %p245 = scmp.le.s32.totalorder 1, %s17
      %p246 = scmp.lt.s32.totalorder %s17, 3
      %p247 = pnand %p245, %p246
      %p248 = pneg %p247
      // Predicated region
      $region9: #{decoder_forward.1} parent=5 // pred_check
        _
      $region10: #{decoder_forward.1} parent=5 // pred_check_branch
        %250 = sbr.rel (%p247) target = $region12
      $region11: #{decoder_forward.1} parent=5 // pred_region
        %s251 = ssub.s32 %s17, 1
        // Predicated region
        $region13: #{decoder_forward.1} parent=11 // pred_check
          %p252 = pneg %p64
        $region14: #{decoder_forward.1} parent=11 // pred_check_branch
          %254 = sbr.rel (%p252) target = $region16
        $region15: #{decoder_forward.1} parent=11 // pred_region
          _
        $region16: #{decoder_forward.1} parent=11 // pred_fallthru
          _
        // Predicated region
        $region17: #{decoder_forward.1} parent=11 // pred_check
          %p255 = pneg %p85
        $region18: #{decoder_forward.1} parent=11 // pred_check_branch
          %257 = sbr.rel (%p255) target = $region20
        $region19: #{decoder_forward.1} parent=11 // pred_region
          _
        $region20: #{decoder_forward.1} parent=11 // pred_fallthru
          _
        // Predicated region
        $region21: #{decoder_forward.1} parent=11 // pred_check
          %p258 = pneg %p106
        $region22: #{decoder_forward.1} parent=11 // pred_check_branch
          %260 = sbr.rel (%p258) target = $region24
        $region23: #{decoder_forward.1} parent=11 // pred_region
          %262 = vsyncadd [#allocation6], 0
          %s263 = sshll.u32 %s3, 4
          %s264 = int_to_ptr.hbm [resolvable:$true] %s263
          %s265 = sshll.u32 [#allocation5], 4
          %s266 = int_to_ptr.vmem [resolvable:$true] %s265
          %271 = dma.hbm_to_vmem [thread:$0]  %s264, 9216, %s266, [#allocation6], 128, 128, 8
        $region24: #{decoder_forward.1} parent=11 // pred_fallthru
          _
        // Predicated region
        $region25: #{decoder_forward.1} parent=11 // pred_check
          %p272 = pneg %p127
        $region26: #{decoder_forward.1} parent=11 // pred_check_branch
          %274 = sbr.rel (%p272) target = $region28
        $region27: #{decoder_forward.1} parent=11 // pred_region
          _
        $region28: #{decoder_forward.1} parent=11 // pred_fallthru
          _
        // Predicated region
        $region29: #{decoder_forward.1} parent=11 // pred_check
          %p275 = pneg %p148
        $region30: #{decoder_forward.1} parent=11 // pred_check_branch
          %277 = sbr.rel (%p275) target = $region32
        $region31: #{decoder_forward.1} parent=11 // pred_region
          %279 = vsyncadd [#allocation8], 0
          %s280 = sshll.u32 %s5, 4
          %s281 = int_to_ptr.hbm [resolvable:$true] %s280
          %s282 = sshll.u32 [#allocation7], 4
          %s283 = int_to_ptr.vmem [resolvable:$true] %s282
          %288 = dma.hbm_to_vmem [thread:$0]  %s281, 4608, %s283, [#allocation8], 128, 128, 8
        $region32: #{decoder_forward.1} parent=11 // pred_fallthru
          _
        // Predicated region
        $region33: #{decoder_forward.1} parent=11 // pred_check
          %p289 = pneg %p169
        $region34: #{decoder_forward.1} parent=11 // pred_check_branch
          %291 = sbr.rel (%p289) target = $region36
        $region35: #{decoder_forward.1} parent=11 // pred_region
          _
        $region36: #{decoder_forward.1} parent=11 // pred_fallthru
          _
        // Predicated region
        $region37: #{decoder_forward.1} parent=11 // pred_check
          %p292 = pneg %p190
        $region38: #{decoder_forward.1} parent=11 // pred_check_branch
          %294 = sbr.rel (%p292) target = $region40
        $region39: #{decoder_forward.1} parent=11 // pred_region
          %296 = vsyncadd [#allocation8], 0
          %s297 = sshll.u32 %s7, 4
          %s298 = int_to_ptr.hbm [resolvable:$true] %s297
          %s299 = sshll.u32 [#allocation9], 4
          %s300 = int_to_ptr.vmem [resolvable:$true] %s299
          %305 = dma.hbm_to_vmem [thread:$0]  %s298, 9216, %s300, [#allocation8], 128, 128, 8
        $region40: #{decoder_forward.1} parent=11 // pred_fallthru
          _
        // Predicated region
        $region41: #{decoder_forward.1} parent=11 // pred_check
          %p306 = pneg %p211
        $region42: #{decoder_forward.1} parent=11 // pred_check_branch
          %308 = sbr.rel (%p306) target = $region44
        $region43: #{decoder_forward.1} parent=11 // pred_region
          _
        $region44: #{decoder_forward.1} parent=11 // pred_fallthru
          _
      $region12: #{decoder_forward.1} parent=5 // pred_fallthru
        _
      %p309 = scmp.lt.s32.totalorder %s17, 2
      // Predicated region
      $region45: #{decoder_forward.1} parent=5 // pred_check
        %p310 = pneg %p309
      $region46: #{decoder_forward.1} parent=5 // pred_check_branch
        %312 = sbr.rel (%p310) target = $region48
      $region47: #{decoder_forward.1} parent=5 // pred_region
        // Predicated region
        $region49: #{decoder_forward.1} parent=47 // pred_check
          %p313 = pneg %p37
        $region50: #{decoder_forward.1} parent=47 // pred_check_branch
          %315 = sbr.rel (%p313) target = $region52
        $region51: #{decoder_forward.1} parent=47 // pred_region
          %p316 = scmp.lt.s32.totalorder %s17, 1
          %s317 = scalar_select %p316, %s17, 1
          %s318 = smul.addr %s317, 8
          %s319 = smul.addr %s318, 8
          %s320 = scalar_lea.vmem %s0, %s319
        $region52: #{decoder_forward.1} parent=47 // pred_fallthru
          _
      $region48: #{decoder_forward.1} parent=5 // pred_fallthru
        _
      %p321 = scmp.le.s32.totalorder 1, %s17
      %p322 = scmp.lt.s32.totalorder %s17, 3
      %p323 = pnand %p321, %p322
      %p324 = pneg %p323
      // Predicated region
      $region53: #{decoder_forward.1} parent=5 // pred_check
        _
      $region54: #{decoder_forward.1} parent=5 // pred_check_branch
        %326 = sbr.rel (%p323) target = $region56
      $region55: #{decoder_forward.1} parent=5 // pred_region
        %s327 = ssub.s32 %s17, 1
        // Predicated region
        $region57: #{decoder_forward.1} parent=55 // pred_check
          %p328 = pneg %p106
        $region58: #{decoder_forward.1} parent=55 // pred_check_branch
          %330 = sbr.rel (%p328) target = $region60
        $region59: #{decoder_forward.1} parent=55 // pred_region
          %332 = dma.done [#allocation6], 9216
        $region60: #{decoder_forward.1} parent=55 // pred_fallthru
          _
        // Predicated region
        $region61: #{decoder_forward.1} parent=55 // pred_check
          %p333 = pneg %p148
        $region62: #{decoder_forward.1} parent=55 // pred_check_branch
          %335 = sbr.rel (%p333) target = $region64
        $region63: #{decoder_forward.1} parent=55 // pred_region
          %337 = dma.done [#allocation8], 4608
        $region64: #{decoder_forward.1} parent=55 // pred_fallthru
          _
        // Predicated region
        $region65: #{decoder_forward.1} parent=55 // pred_check
          %p338 = pneg %p190
        $region66: #{decoder_forward.1} parent=55 // pred_check_branch
          %340 = sbr.rel (%p338) target = $region68
        $region67: #{decoder_forward.1} parent=55 // pred_region
          %342 = dma.done [#allocation8], 9216
        $region68: #{decoder_forward.1} parent=55 // pred_fallthru
          _
        %p343 = scmp.lt.s32.totalorder %s22, 1
        %s344 = scalar_select %p343, %s22, 1
        %s345 = smul.addr %s344, 8
        %s346 = smul.addr %s345, 8
        %s347 = scalar_lea.vmem %s0, %s346
        %p348 = pneg %p43
        %p349 = pneg %p40
        %p350 = pneg %p64
        %p351 = pneg %p61
        %p352 = pneg %p85
        %p353 = pneg %p82
        %p354 = pneg %p106
        %p355 = pneg %p103
        %p356 = pneg %p127
        %p357 = pneg %p124
        %p358 = pneg %p148
        %p359 = pneg %p145
        %p360 = pneg %p169
        %p361 = pneg %p166
        %p362 = pneg %p190
        %p363 = pneg %p187
        %p364 = pneg %p211
        %p365 = pneg %p208
        %p366 = pneg %p237
        %p367 = pneg %p234
        %p368 = scmp.lt.s32.totalorder %s22, 1
        %s369 = scalar_select %p368, %s22, 1
        %s370 = smul.addr %s369, 8
        %s371 = smul.addr %s370, 8
        %s372 = scalar_lea.vmem %s9, %s371
        %p373 = scmp.lt.s32.totalorder %s22, 1
        %s374 = scalar_select %p373, %s22, 1
        %s375 = smul.addr %s374, 8
        %s376 = smul.addr %s375, 8
        %s377 = scalar_lea.vmem %s0, %s376
        %p378 = scmp.lt.s32.totalorder %s22, 1
        %s379 = scalar_select %p378, %s22, 1
        %s380 = smul.addr %s379, 8
        %s381 = smul.addr %s380, 8
        %s382 = scalar_lea.vmem %s9, %s381
        %vm383 = vcmask 31744
        %384 = vst.msk [vmem:[#allocation2] sm:$0xff] %vm383, 0.0
        %vm385 = vcmask 25600
        %386 = vst.msk [vmem:[#allocation2 + $0x8] sm:$0x3] %vm385, 0.0
        %s387 = scalar_lea.vmem [#allocation2], 144
        %388 = vst.msk [vmem:[%s387] sm:$0xff] %vm383, 0.0
        %389 = vst.msk [vmem:[%s387 + $0x8] sm:$0x3] %vm385, 0.0
        %s390 = scalar_lea.vmem [#allocation2], 16
        %vm391 = vcmask 24576
        %392 = vst.msk [vmem:[%s390] sm:$0x1] %vm391, 0.0
        %393 = vst.msk [vmem:[%s390 + $0x10] sm:$0x1] %vm391, 0.0
        %394 = vst.msk [vmem:[%s390 + $0x20] sm:$0x1] %vm391, 0.0
        %395 = vst.msk [vmem:[%s390 + $0x30] sm:$0x1] %vm391, 0.0
        %396 = vst.msk [vmem:[%s390 + $0x40] sm:$0x1] %vm391, 0.0
        %397 = vst.msk [vmem:[%s390 + $0x50] sm:$0x1] %vm391, 0.0
        %398 = vst.msk [vmem:[%s390 + $0x60] sm:$0x1] %vm391, 0.0
        %399 = vst.msk [vmem:[%s390 + $0x70] sm:$0x1] %vm391, 0.0
        %400 = vst.msk [vmem:[%s390 + $0x9] sm:$0x1] %vm391, 0.0
        %401 = vst.msk [vmem:[%s390 + $0x19] sm:$0x1] %vm391, 0.0
        %402 = vst.msk [vmem:[%s390 + $0x29] sm:$0x1] %vm391, 0.0
        %403 = vst.msk [vmem:[%s390 + $0x39] sm:$0x1] %vm391, 0.0
        %404 = vst.msk [vmem:[%s390 + $0x49] sm:$0x1] %vm391, 0.0
        %405 = vst.msk [vmem:[%s390 + $0x59] sm:$0x1] %vm391, 0.0
        %406 = vst.msk [vmem:[%s390 + $0x69] sm:$0x1] %vm391, 0.0
        %407 = vst.msk [vmem:[%s390 + $0x79] sm:$0x1] %vm391, 0.0
        %vm408 = vcmask 261120
        %409 = vst.msk [vmem:[#allocation3] sm:$0xff] %vm408, 0.0
        %vm410 = vcmask 254976
        %411 = vst.msk [vmem:[#allocation3 + $0x8] sm:$0x3] %vm410, 0.0
        %s412 = scalar_lea.vmem [#allocation3], 144
        %413 = vst.msk [vmem:[%s412] sm:$0xff] %vm408, 0.0
        %414 = vst.msk [vmem:[%s412 + $0x8] sm:$0x3] %vm410, 0.0
        %s415 = scalar_lea.vmem [#allocation3], 16
        %vm416 = vcmask 253952
        %417 = vst.msk [vmem:[%s415] sm:$0x1] %vm416, 0.0
        %418 = vst.msk [vmem:[%s415 + $0x10] sm:$0x1] %vm416, 0.0
        %419 = vst.msk [vmem:[%s415 + $0x20] sm:$0x1] %vm416, 0.0
        %420 = vst.msk [vmem:[%s415 + $0x30] sm:$0x1] %vm416, 0.0
        %421 = vst.msk [vmem:[%s415 + $0x40] sm:$0x1] %vm416, 0.0
        %422 = vst.msk [vmem:[%s415 + $0x50] sm:$0x1] %vm416, 0.0
        %423 = vst.msk [vmem:[%s415 + $0x60] sm:$0x1] %vm416, 0.0
        %424 = vst.msk [vmem:[%s415 + $0x70] sm:$0x1] %vm416, 0.0
        %425 = vst.msk [vmem:[%s415 + $0x9] sm:$0x1] %vm416, 0.0
        %426 = vst.msk [vmem:[%s415 + $0x19] sm:$0x1] %vm416, 0.0
        %427 = vst.msk [vmem:[%s415 + $0x29] sm:$0x1] %vm416, 0.0
        %428 = vst.msk [vmem:[%s415 + $0x39] sm:$0x1] %vm416, 0.0
        %429 = vst.msk [vmem:[%s415 + $0x49] sm:$0x1] %vm416, 0.0
        %430 = vst.msk [vmem:[%s415 + $0x59] sm:$0x1] %vm416, 0.0
        %431 = vst.msk [vmem:[%s415 + $0x69] sm:$0x1] %vm416, 0.0
        %432 = vst.msk [vmem:[%s415 + $0x79] sm:$0x1] %vm416, 0.0
        %vm433 = vcmask 130048
        %434 = vst.msk [vmem:[#allocation4] sm:$0xff] %vm433, 0.0
        %vm435 = vcmask 123904
        %436 = vst.msk [vmem:[#allocation4 + $0x8] sm:$0x3] %vm435, 0.0
        %s437 = scalar_lea.vmem [#allocation4], 144
        %438 = vst.msk [vmem:[%s437] sm:$0xff] %vm433, 0.0
        %439 = vst.msk [vmem:[%s437 + $0x8] sm:$0x3] %vm435, 0.0
        %s440 = scalar_lea.vmem [#allocation4], 16
        %vm441 = vcmask 122880
        %442 = vst.msk [vmem:[%s440] sm:$0x1] %vm441, 0.0
        %443 = vst.msk [vmem:[%s440 + $0x10] sm:$0x1] %vm441, 0.0
        %444 = vst.msk [vmem:[%s440 + $0x20] sm:$0x1] %vm441, 0.0
        %445 = vst.msk [vmem:[%s440 + $0x30] sm:$0x1] %vm441, 0.0
        %446 = vst.msk [vmem:[%s440 + $0x40] sm:$0x1] %vm441, 0.0
        %447 = vst.msk [vmem:[%s440 + $0x50] sm:$0x1] %vm441, 0.0
        %448 = vst.msk [vmem:[%s440 + $0x60] sm:$0x1] %vm441, 0.0
        %449 = vst.msk [vmem:[%s440 + $0x70] sm:$0x1] %vm441, 0.0
        %450 = vst.msk [vmem:[%s440 + $0x9] sm:$0x1] %vm441, 0.0
        %451 = vst.msk [vmem:[%s440 + $0x19] sm:$0x1] %vm441, 0.0
        %452 = vst.msk [vmem:[%s440 + $0x29] sm:$0x1] %vm441, 0.0
        %453 = vst.msk [vmem:[%s440 + $0x39] sm:$0x1] %vm441, 0.0
        %454 = vst.msk [vmem:[%s440 + $0x49] sm:$0x1] %vm441, 0.0
        %455 = vst.msk [vmem:[%s440 + $0x59] sm:$0x1] %vm441, 0.0
        %456 = vst.msk [vmem:[%s440 + $0x69] sm:$0x1] %vm441, 0.0
        %457 = vst.msk [vmem:[%s440 + $0x79] sm:$0x1] %vm441, 0.0
        %s458 = scalar_lea.vmem [#allocation4], 160
        %459 = vst.msk [vmem:[%s458] sm:$0xff] %vm433, 0.0
        %460 = vst.msk [vmem:[%s458 + $0x8] sm:$0x3] %vm435, 0.0
        %s461 = scalar_lea.vmem [#allocation4], 304
        %462 = vst.msk [vmem:[%s461] sm:$0xff] %vm433, 0.0
        %463 = vst.msk [vmem:[%s461 + $0x8] sm:$0x3] %vm435, 0.0
        %s464 = scalar_lea.vmem [#allocation4], 176
        %465 = vst.msk [vmem:[%s464] sm:$0x1] %vm441, 0.0
        %466 = vst.msk [vmem:[%s464 + $0x10] sm:$0x1] %vm441, 0.0
        %467 = vst.msk [vmem:[%s464 + $0x20] sm:$0x1] %vm441, 0.0
        %468 = vst.msk [vmem:[%s464 + $0x30] sm:$0x1] %vm441, 0.0
        %469 = vst.msk [vmem:[%s464 + $0x40] sm:$0x1] %vm441, 0.0
        %470 = vst.msk [vmem:[%s464 + $0x50] sm:$0x1] %vm441, 0.0
        %471 = vst.msk [vmem:[%s464 + $0x60] sm:$0x1] %vm441, 0.0
        %472 = vst.msk [vmem:[%s464 + $0x70] sm:$0x1] %vm441, 0.0
        %473 = vst.msk [vmem:[%s464 + $0x9] sm:$0x1] %vm441, 0.0
        %474 = vst.msk [vmem:[%s464 + $0x19] sm:$0x1] %vm441, 0.0
        %475 = vst.msk [vmem:[%s464 + $0x29] sm:$0x1] %vm441, 0.0
        %476 = vst.msk [vmem:[%s464 + $0x39] sm:$0x1] %vm441, 0.0
        %477 = vst.msk [vmem:[%s464 + $0x49] sm:$0x1] %vm441, 0.0
        %478 = vst.msk [vmem:[%s464 + $0x59] sm:$0x1] %vm441, 0.0
        %479 = vst.msk [vmem:[%s464 + $0x69] sm:$0x1] %vm441, 0.0
        %480 = vst.msk [vmem:[%s464 + $0x79] sm:$0x1] %vm441, 0.0
        %s481 = scalar_lea.vmem [#allocation4], 320
        %482 = vst.msk [vmem:[%s481] sm:$0xff] %vm433, 0.0
        %483 = vst.msk [vmem:[%s481 + $0x8] sm:$0x3] %vm435, 0.0
        %s484 = scalar_lea.vmem [#allocation4], 464
        %485 = vst.msk [vmem:[%s484] sm:$0xff] %vm433, 0.0
        %486 = vst.msk [vmem:[%s484 + $0x8] sm:$0x3] %vm435, 0.0
        %s487 = scalar_lea.vmem [#allocation4], 336
        %488 = vst.msk [vmem:[%s487] sm:$0x1] %vm441, 0.0
        %489 = vst.msk [vmem:[%s487 + $0x10] sm:$0x1] %vm441, 0.0
        %490 = vst.msk [vmem:[%s487 + $0x20] sm:$0x1] %vm441, 0.0
        %491 = vst.msk [vmem:[%s487 + $0x30] sm:$0x1] %vm441, 0.0
        %492 = vst.msk [vmem:[%s487 + $0x40] sm:$0x1] %vm441, 0.0
        %493 = vst.msk [vmem:[%s487 + $0x50] sm:$0x1] %vm441, 0.0
        %494 = vst.msk [vmem:[%s487 + $0x60] sm:$0x1] %vm441, 0.0
        %495 = vst.msk [vmem:[%s487 + $0x70] sm:$0x1] %vm441, 0.0
        %496 = vst.msk [vmem:[%s487 + $0x9] sm:$0x1] %vm441, 0.0
        %497 = vst.msk [vmem:[%s487 + $0x19] sm:$0x1] %vm441, 0.0
        %498 = vst.msk [vmem:[%s487 + $0x29] sm:$0x1] %vm441, 0.0
        %499 = vst.msk [vmem:[%s487 + $0x39] sm:$0x1] %vm441, 0.0
        %500 = vst.msk [vmem:[%s487 + $0x49] sm:$0x1] %vm441, 0.0
        %501 = vst.msk [vmem:[%s487 + $0x59] sm:$0x1] %vm441, 0.0
        %502 = vst.msk [vmem:[%s487 + $0x69] sm:$0x1] %vm441, 0.0
        %503 = vst.msk [vmem:[%s487 + $0x79] sm:$0x1] %vm441, 0.0
        %s504 = scalar_lea.vmem [#allocation4], 480
        %505 = vst.msk [vmem:[%s504] sm:$0xff] %vm433, 0.0
        %506 = vst.msk [vmem:[%s504 + $0x8] sm:$0x3] %vm435, 0.0
        %s507 = scalar_lea.vmem [#allocation4], 624
        %508 = vst.msk [vmem:[%s507] sm:$0xff] %vm433, 0.0
        %509 = vst.msk [vmem:[%s507 + $0x8] sm:$0x3] %vm435, 0.0
        %s510 = scalar_lea.vmem [#allocation4], 496
        %511 = vst.msk [vmem:[%s510] sm:$0x1] %vm441, 0.0
        %512 = vst.msk [vmem:[%s510 + $0x10] sm:$0x1] %vm441, 0.0
        %513 = vst.msk [vmem:[%s510 + $0x20] sm:$0x1] %vm441, 0.0
        %514 = vst.msk [vmem:[%s510 + $0x30] sm:$0x1] %vm441, 0.0
        %515 = vst.msk [vmem:[%s510 + $0x40] sm:$0x1] %vm441, 0.0
        %516 = vst.msk [vmem:[%s510 + $0x50] sm:$0x1] %vm441, 0.0
        %517 = vst.msk [vmem:[%s510 + $0x60] sm:$0x1] %vm441, 0.0
        %518 = vst.msk [vmem:[%s510 + $0x70] sm:$0x1] %vm441, 0.0
        %519 = vst.msk [vmem:[%s510 + $0x9] sm:$0x1] %vm441, 0.0
        %520 = vst.msk [vmem:[%s510 + $0x19] sm:$0x1] %vm441, 0.0
        %521 = vst.msk [vmem:[%s510 + $0x29] sm:$0x1] %vm441, 0.0
        %522 = vst.msk [vmem:[%s510 + $0x39] sm:$0x1] %vm441, 0.0
        %523 = vst.msk [vmem:[%s510 + $0x49] sm:$0x1] %vm441, 0.0
        %524 = vst.msk [vmem:[%s510 + $0x59] sm:$0x1] %vm441, 0.0
        %525 = vst.msk [vmem:[%s510 + $0x69] sm:$0x1] %vm441, 0.0
        %526 = vst.msk [vmem:[%s510 + $0x79] sm:$0x1] %vm441, 0.0
        %v527 = vld [vmem:[%s377] sm:$0xff]
        %v528 = vld [vmem:[%s377 + $0x8] sm:$0xff]
        %v529 = vld [vmem:[%s377 + $0x10] sm:$0xff]
        %v530 = vld [vmem:[%s377 + $0x18] sm:$0xff]
        %v531 = vld [vmem:[%s377 + $0x20] sm:$0xff]
        %v532 = vld [vmem:[%s377 + $0x28] sm:$0xff]
        %v533 = vld [vmem:[%s377 + $0x30] sm:$0xff]
        %v534 = vld [vmem:[%s377 + $0x38] sm:$0xff]
        %535 = vst.msk [vmem:[%s390 + $0x1] sm:$0xff] %vm383, %v527
        %536 = vst.msk [vmem:[%s390 + $0x11] sm:$0xff] %vm383, %v528
        %537 = vst.msk [vmem:[%s390 + $0x21] sm:$0xff] %vm383, %v529
        %538 = vst.msk [vmem:[%s390 + $0x31] sm:$0xff] %vm383, %v530
        %539 = vst.msk [vmem:[%s390 + $0x41] sm:$0xff] %vm383, %v531
        %540 = vst.msk [vmem:[%s390 + $0x51] sm:$0xff] %vm383, %v532
        %541 = vst.msk [vmem:[%s390 + $0x61] sm:$0xff] %vm383, %v533
        %542 = vst.msk [vmem:[%s390 + $0x71] sm:$0xff] %vm383, %v534
        %v543 = vld [vmem:[#allocation2] sm:$0xff]
        %v544 = vld [vmem:[#allocation2 + $0x8] sm:$0x3]
        %v545 = vld [vmem:[#allocation2 + $0x10] sm:$0xff]
        %v546 = vld [vmem:[#allocation2 + $0x18] sm:$0x3]
        %v547 = vld [vmem:[#allocation2 + $0x20] sm:$0xff]
        %v548 = vld [vmem:[#allocation2 + $0x28] sm:$0x3]
        %v549 = vld [vmem:[#allocation2 + $0x30] sm:$0xff]
        %v550 = vld [vmem:[#allocation2 + $0x38] sm:$0x3]
        %v551 = vld [vmem:[#allocation2 + $0x40] sm:$0xff]
        %v552 = vld [vmem:[#allocation2 + $0x48] sm:$0x3]
        %v553 = vld [vmem:[#allocation2 + $0x50] sm:$0xff]
        %v554 = vld [vmem:[#allocation2 + $0x58] sm:$0x3]
        %v555 = vld [vmem:[#allocation2 + $0x60] sm:$0xff]
        %v556 = vld [vmem:[#allocation2 + $0x68] sm:$0x3]
        %v557 = vld [vmem:[#allocation2 + $0x70] sm:$0xff]
        %v558 = vld [vmem:[#allocation2 + $0x78] sm:$0x3]
        %v559 = vld [vmem:[#allocation2 + $0x80] sm:$0xff]
        %v560 = vld [vmem:[#allocation2 + $0x88] sm:$0x3]
        %v561 = vld [vmem:[#allocation2 + $0x90] sm:$0xff]
        %v562 = vld [vmem:[#allocation2 + $0x98] sm:$0x3]
        %vm579 = vcmask 1046528
        %v580 = vrot.slane %v543, 1
        %v581 = vrot.slane %v544, 1
        %v582 = vsel %vm579, %v580, %v581
        %v583 = vrot.slane %v545, 1
        %v584 = vrot.slane %v546, 1
        %v585 = vsel %vm579, %v583, %v584
        %v586 = vrot.slane %v547, 1
        %v587 = vrot.slane %v548, 1
        %v588 = vsel %vm579, %v586, %v587
        %v589 = vrot.slane %v549, 1
        %v590 = vrot.slane %v550, 1
        %v591 = vsel %vm579, %v589, %v590
        %v592 = vrot.slane %v551, 1
        %v593 = vrot.slane %v552, 1
        %v594 = vsel %vm579, %v592, %v593
        %v595 = vrot.slane %v553, 1
        %v596 = vrot.slane %v554, 1
        %v597 = vsel %vm579, %v595, %v596
        %v598 = vrot.slane %v555, 1
        %v599 = vrot.slane %v556, 1
        %v600 = vsel %vm579, %v598, %v599
        %v601 = vrot.slane %v557, 1
        %v602 = vrot.slane %v558, 1
        %v603 = vsel %vm579, %v601, %v602
        %vm604 = vcmask 1045504
        %v605 = vrot.slane %v543, 2
        %v606 = vrot.slane %v544, 2
        %v607 = vsel %vm604, %v605, %v606
        %v608 = vrot.slane %v545, 2
        %v609 = vrot.slane %v546, 2
        %v610 = vsel %vm604, %v608, %v609
        %v611 = vrot.slane %v547, 2
        %v612 = vrot.slane %v548, 2
        %v613 = vsel %vm604, %v611, %v612
        %v614 = vrot.slane %v549, 2
        %v615 = vrot.slane %v550, 2
        %v616 = vsel %vm604, %v614, %v615
        %v617 = vrot.slane %v551, 2
        %v618 = vrot.slane %v552, 2
        %v619 = vsel %vm604, %v617, %v618
        %v620 = vrot.slane %v553, 2
        %v621 = vrot.slane %v554, 2
        %v622 = vsel %vm604, %v620, %v621
        %v623 = vrot.slane %v555, 2
        %v624 = vrot.slane %v556, 2
        %v625 = vsel %vm604, %v623, %v624
        %v626 = vrot.slane %v557, 2
        %v627 = vrot.slane %v558, 2
        %v628 = vsel %vm604, %v626, %v627
        %v631 = vrot.slane %v559, 1
        %v632 = vrot.slane %v560, 1
        %v633 = vsel %vm579, %v631, %v632
        %v634 = vrot.slane %v559, 2
        %v635 = vrot.slane %v560, 2
        %v636 = vsel %vm604, %v634, %v635
        %v639 = vrot.slane %v561, 1
        %v640 = vrot.slane %v562, 1
        %v641 = vsel %vm579, %v639, %v640
        %v642 = vrot.slane %v561, 2
        %v643 = vrot.slane %v562, 2
        %v644 = vsel %vm604, %v642, %v643
        %645 = vrot.lane.b32.xlu0 %v582, 4
        %v646 = vpop.permute.xlu0 %645
        %647 = vrot.lane.b32.xlu0 %v585, 4
        %v648 = vpop.permute.xlu0 %647
        %649 = vrot.lane.b32.xlu0 %v588, 4
        %v650 = vpop.permute.xlu0 %649
        %651 = vrot.lane.b32.xlu0 %v591, 4
        %v652 = vpop.permute.xlu0 %651
        %653 = vrot.lane.b32.xlu0 %v594, 4
        %v654 = vpop.permute.xlu0 %653
        %655 = vrot.lane.b32.xlu0 %v597, 4
        %v656 = vpop.permute.xlu0 %655
        %657 = vrot.lane.b32.xlu0 %v600, 4
        %v658 = vpop.permute.xlu0 %657
        %659 = vrot.lane.b32.xlu0 %v603, 4
        %v660 = vpop.permute.xlu0 %659
        %669 = vrot.lane.b32.xlu0 %v607, 8
        %v670 = vpop.permute.xlu0 %669
        %671 = vrot.lane.b32.xlu0 %v610, 8
        %v672 = vpop.permute.xlu0 %671
        %673 = vrot.lane.b32.xlu0 %v613, 8
        %v674 = vpop.permute.xlu0 %673
        %675 = vrot.lane.b32.xlu0 %v616, 8
        %v676 = vpop.permute.xlu0 %675
        %677 = vrot.lane.b32.xlu0 %v619, 8
        %v678 = vpop.permute.xlu0 %677
        %679 = vrot.lane.b32.xlu0 %v622, 8
        %v680 = vpop.permute.xlu0 %679
        %681 = vrot.lane.b32.xlu0 %v625, 8
        %v682 = vpop.permute.xlu0 %681
        %683 = vrot.lane.b32.xlu0 %v628, 8
        %v684 = vpop.permute.xlu0 %683
        %693 = vrot.lane.b32.xlu0 %v545, 12
        %v694 = vpop.permute.xlu0 %693
        %695 = vrot.lane.b32.xlu0 %v547, 12
        %v696 = vpop.permute.xlu0 %695
        %697 = vrot.lane.b32.xlu0 %v549, 12
        %v698 = vpop.permute.xlu0 %697
        %699 = vrot.lane.b32.xlu0 %v551, 12
        %v700 = vpop.permute.xlu0 %699
        %701 = vrot.lane.b32.xlu0 %v553, 12
        %v702 = vpop.permute.xlu0 %701
        %703 = vrot.lane.b32.xlu0 %v555, 12
        %v704 = vpop.permute.xlu0 %703
        %705 = vrot.lane.b32.xlu0 %v557, 12
        %v706 = vpop.permute.xlu0 %705
        %707 = vrot.lane.b32.xlu0 %v559, 12
        %v708 = vpop.permute.xlu0 %707
        %717 = vrot.lane.b32.xlu0 %v585, 16
        %v718 = vpop.permute.xlu0 %717
        %719 = vrot.lane.b32.xlu0 %v588, 16
        %v720 = vpop.permute.xlu0 %719
        %721 = vrot.lane.b32.xlu0 %v591, 16
        %v722 = vpop.permute.xlu0 %721
        %723 = vrot.lane.b32.xlu0 %v594, 16
        %v724 = vpop.permute.xlu0 %723
        %725 = vrot.lane.b32.xlu0 %v597, 16
        %v726 = vpop.permute.xlu0 %725
        %727 = vrot.lane.b32.xlu0 %v600, 16
        %v728 = vpop.permute.xlu0 %727
        %729 = vrot.lane.b32.xlu0 %v603, 16
        %v730 = vpop.permute.xlu0 %729
        %731 = vrot.lane.b32.xlu0 %v633, 16
        %v732 = vpop.permute.xlu0 %731
        %741 = vrot.lane.b32.xlu0 %v610, 20
        %v742 = vpop.permute.xlu0 %741
        %743 = vrot.lane.b32.xlu0 %v613, 20
        %v744 = vpop.permute.xlu0 %743
        %745 = vrot.lane.b32.xlu0 %v616, 20
        %v746 = vpop.permute.xlu0 %745
        %747 = vrot.lane.b32.xlu0 %v619, 20
        %v748 = vpop.permute.xlu0 %747
        %749 = vrot.lane.b32.xlu0 %v622, 20
        %v750 = vpop.permute.xlu0 %749
        %751 = vrot.lane.b32.xlu0 %v625, 20
        %v752 = vpop.permute.xlu0 %751
        %753 = vrot.lane.b32.xlu0 %v628, 20
        %v754 = vpop.permute.xlu0 %753
        %755 = vrot.lane.b32.xlu0 %v636, 20
        %v756 = vpop.permute.xlu0 %755
        %765 = vrot.lane.b32.xlu0 %v547, 24
        %v766 = vpop.permute.xlu0 %765
        %767 = vrot.lane.b32.xlu0 %v549, 24
        %v768 = vpop.permute.xlu0 %767
        %769 = vrot.lane.b32.xlu0 %v551, 24
        %v770 = vpop.permute.xlu0 %769
        %771 = vrot.lane.b32.xlu0 %v553, 24
        %v772 = vpop.permute.xlu0 %771
        %773 = vrot.lane.b32.xlu0 %v555, 24
        %v774 = vpop.permute.xlu0 %773
        %775 = vrot.lane.b32.xlu0 %v557, 24
        %v776 = vpop.permute.xlu0 %775
        %777 = vrot.lane.b32.xlu0 %v559, 24
        %v778 = vpop.permute.xlu0 %777
        %779 = vrot.lane.b32.xlu0 %v561, 24
        %v780 = vpop.permute.xlu0 %779
        %789 = vrot.lane.b32.xlu0 %v588, 28
        %v790 = vpop.permute.xlu0 %789
        %791 = vrot.lane.b32.xlu0 %v591, 28
        %v792 = vpop.permute.xlu0 %791
        %793 = vrot.lane.b32.xlu0 %v594, 28
        %v794 = vpop.permute.xlu0 %793
        %795 = vrot.lane.b32.xlu0 %v597, 28
        %v796 = vpop.permute.xlu0 %795
        %797 = vrot.lane.b32.xlu0 %v600, 28
        %v798 = vpop.permute.xlu0 %797
        %799 = vrot.lane.b32.xlu0 %v603, 28
        %v800 = vpop.permute.xlu0 %799
        %801 = vrot.lane.b32.xlu0 %v633, 28
        %v802 = vpop.permute.xlu0 %801
        %803 = vrot.lane.b32.xlu0 %v641, 28
        %v804 = vpop.permute.xlu0 %803
        %813 = vrot.lane.b32.xlu0 %v613, 32
        %v814 = vpop.permute.xlu0 %813
        %815 = vrot.lane.b32.xlu0 %v616, 32
        %v816 = vpop.permute.xlu0 %815
        %817 = vrot.lane.b32.xlu0 %v619, 32
        %v818 = vpop.permute.xlu0 %817
        %819 = vrot.lane.b32.xlu0 %v622, 32
        %v820 = vpop.permute.xlu0 %819
        %821 = vrot.lane.b32.xlu0 %v625, 32
        %v822 = vpop.permute.xlu0 %821
        %823 = vrot.lane.b32.xlu0 %v628, 32
        %v824 = vpop.permute.xlu0 %823
        %825 = vrot.lane.b32.xlu0 %v636, 32
        %v826 = vpop.permute.xlu0 %825
        %827 = vrot.lane.b32.xlu0 %v644, 32
        %v828 = vpop.permute.xlu0 %827
        %v837 = vsel %vm383, %v543, %v646
        %v838 = vsel %vm383, %v545, %v648
        %v839 = vsel %vm383, %v547, %v650
        %v840 = vsel %vm383, %v549, %v652
        %v841 = vsel %vm383, %v551, %v654
        %v842 = vsel %vm383, %v553, %v656
        %v843 = vsel %vm383, %v555, %v658
        %v844 = vsel %vm383, %v557, %v660
        %vm845 = vcmask 64512
        %v846 = vsel %vm845, %v837, %v670
        %v847 = vsel %vm845, %v838, %v672
        %v848 = vsel %vm845, %v839, %v674
        %v849 = vsel %vm845, %v840, %v676
        %v850 = vsel %vm845, %v841, %v678
        %v851 = vsel %vm845, %v842, %v680
        %v852 = vsel %vm845, %v843, %v682
        %v853 = vsel %vm845, %v844, %v684
        %vm854 = vcmask 97280
        %v855 = vsel %vm854, %v846, %v694
        %v856 = vsel %vm854, %v847, %v696
        %v857 = vsel %vm854, %v848, %v698
        %v858 = vsel %vm854, %v849, %v700
        %v859 = vsel %vm854, %v850, %v702
        %v860 = vsel %vm854, %v851, %v704
        %v861 = vsel %vm854, %v852, %v706
        %v862 = vsel %vm854, %v853, %v708
        %v863 = vsel %vm433, %v855, %v718
        %v864 = vsel %vm433, %v856, %v720
        %v865 = vsel %vm433, %v857, %v722
        %v866 = vsel %vm433, %v858, %v724
        %v867 = vsel %vm433, %v859, %v726
        %v868 = vsel %vm433, %v860, %v728
        %v869 = vsel %vm433, %v861, %v730
        %v870 = vsel %vm433, %v862, %v732
        %vm871 = vcmask 162816
        %v872 = vsel %vm871, %v863, %v742
        %v873 = vsel %vm871, %v864, %v744
        %v874 = vsel %vm871, %v865, %v746
        %v875 = vsel %vm871, %v866, %v748
        %v876 = vsel %vm871, %v867, %v750
        %v877 = vsel %vm871, %v868, %v752
        %v878 = vsel %vm871, %v869, %v754
        %v879 = vsel %vm871, %v870, %v756
        %vm880 = vcmask 195584
        %v881 = vsel %vm880, %v872, %v766
        %v882 = vsel %vm880, %v873, %v768
        %v883 = vsel %vm880, %v874, %v770
        %v884 = vsel %vm880, %v875, %v772
        %v885 = vsel %vm880, %v876, %v774
        %v886 = vsel %vm880, %v877, %v776
        %v887 = vsel %vm880, %v878, %v778
        %v888 = vsel %vm880, %v879, %v780
        %vm889 = vcmask 228352
        %v890 = vsel %vm889, %v881, %v790
        %v891 = vsel %vm889, %v882, %v792
        %v892 = vsel %vm889, %v883, %v794
        %v893 = vsel %vm889, %v884, %v796
        %v894 = vsel %vm889, %v885, %v798
        %v895 = vsel %vm889, %v886, %v800
        %v896 = vsel %vm889, %v887, %v802
        %v897 = vsel %vm889, %v888, %v804
        %v898 = vsel %vm408, %v890, %v814
        %v899 = vsel %vm408, %v891, %v816
        %v900 = vsel %vm408, %v892, %v818
        %v901 = vsel %vm408, %v893, %v820
        %v902 = vsel %vm408, %v894, %v822
        %v903 = vsel %vm408, %v895, %v824
        %v904 = vsel %vm408, %v896, %v826
        %v905 = vsel %vm408, %v897, %v828
        %v906 = vld [vmem:[%s1] sm:$0xff]
        %v907 = vld [vmem:[%s1 + $0x8] sm:$0xff]
        %v908 = vld [vmem:[%s1 + $0x10] sm:$0xff]
        %v909 = vld [vmem:[%s1 + $0x18] sm:$0xff]
        %v910 = vld [vmem:[%s1 + $0x20] sm:$0xf]
        %v911 = vld [vmem:[%s2] sm:$0x1]
        %v913 = vperm.slane %v911, 0
        %vm915 = vcmask 293888
        %v917 = vsel %vm915, %v898, 0
        %v920 = vsel %vm915, %v899, 0
        %v923 = vsel %vm915, %v900, 0
        %v926 = vsel %vm915, %v901, 0
        %v929 = vsel %vm915, %v902, 0
        %v932 = vsel %vm915, %v903, 0
        %v935 = vsel %vm915, %v904, 0
        %v938 = vsel %vm915, %v905, 0
        %vm940 = vcmask 1043456
        %v942 = vsel %vm940, %v910, 0
        %944 = vmatpush.msra.mxu0 0.0
        %945 = vmatpush.msra.mxu0 0.0
        %946 = vmatpush.msra.mxu0 0.0
        %947 = vmatpush.msra.mxu0 0.0
        %948 = vmatpush.msra.mxu0 0.0
        %949 = vmatpush.msra.mxu0 0.0
        %950 = vmatpush.msra.mxu0 0.0
        %951 = vmatpush.msra.mxu0 0.0
        %952 = vmatpush.msra.mxu0 0.0
        %953 = vmatpush.msra.mxu0 0.0
        %954 = vmatpush.msra.mxu0 0.0
        %955 = vmatpush.msra.mxu0 %v942
        %956 = vmatpush.msra.mxu0 %v909
        %957 = vmatpush.msra.mxu0 %v908
        %958 = vmatpush.msra.mxu0 %v907
        %959 = vmatpush.msra.mxu0 %v906
        %960 = vmatmul.f32.gmra.mxu0 %v917
        %v961 = vpop.f32.mrf.mxu0
        %v962 = vadd.f32 %v913, %v961
        %963 = vmatmul.f32.gmra.mxu0 %v920
        %v964 = vpop.f32.mrf.mxu0
        %v965 = vadd.f32 %v913, %v964
        %966 = vmatmul.f32.gmra.mxu0 %v923
        %v967 = vpop.f32.mrf.mxu0
        %v968 = vadd.f32 %v913, %v967
        %969 = vmatmul.f32.gmra.mxu0 %v926
        %v970 = vpop.f32.mrf.mxu0
        %v971 = vadd.f32 %v913, %v970
        %972 = vmatmul.f32.gmra.mxu0 %v929
        %v973 = vpop.f32.mrf.mxu0
        %v974 = vadd.f32 %v913, %v973
        %975 = vmatmul.f32.gmra.mxu0 %v932
        %v976 = vpop.f32.mrf.mxu0
        %v977 = vadd.f32 %v913, %v976
        %978 = vmatmul.f32.gmra.mxu0 %v935
        %v979 = vpop.f32.mrf.mxu0
        %v980 = vadd.f32 %v913, %v979
        %981 = vmatmul.f32.gmra.mxu0 %v938
        %v982 = vpop.f32.mrf.mxu0
        %v983 = vadd.f32 %v913, %v982
        %984 = vdwg.mxu0
        %985 = vst.msk [vmem:[%s415 + $0x1] sm:$0xff] %vm408, %v962
        %986 = vst.msk [vmem:[%s415 + $0x11] sm:$0xff] %vm408, %v965
        %987 = vst.msk [vmem:[%s415 + $0x21] sm:$0xff] %vm408, %v968
        %988 = vst.msk [vmem:[%s415 + $0x31] sm:$0xff] %vm408, %v971
        %989 = vst.msk [vmem:[%s415 + $0x41] sm:$0xff] %vm408, %v974
        %990 = vst.msk [vmem:[%s415 + $0x51] sm:$0xff] %vm408, %v977
        %991 = vst.msk [vmem:[%s415 + $0x61] sm:$0xff] %vm408, %v980
        %992 = vst.msk [vmem:[%s415 + $0x71] sm:$0xff] %vm408, %v983
        %v993 = vld [vmem:[#allocation3] sm:$0xff]
        %v994 = vld [vmem:[#allocation3 + $0x8] sm:$0x3]
        %v995 = vld [vmem:[#allocation3 + $0x10] sm:$0xff]
        %v996 = vld [vmem:[#allocation3 + $0x18] sm:$0x3]
        %v997 = vld [vmem:[#allocation3 + $0x20] sm:$0xff]
        %v998 = vld [vmem:[#allocation3 + $0x28] sm:$0x3]
        %v999 = vld [vmem:[#allocation3 + $0x30] sm:$0xff]
        %v1000 = vld [vmem:[#allocation3 + $0x38] sm:$0x3]
        %v1001 = vld [vmem:[#allocation3 + $0x40] sm:$0xff]
        %v1002 = vld [vmem:[#allocation3 + $0x48] sm:$0x3]
        %v1003 = vld [vmem:[#allocation3 + $0x50] sm:$0xff]
        %v1004 = vld [vmem:[#allocation3 + $0x58] sm:$0x3]
        %v1005 = vld [vmem:[#allocation3 + $0x60] sm:$0xff]
        %v1006 = vld [vmem:[#allocation3 + $0x68] sm:$0x3]
        %v1007 = vld [vmem:[#allocation3 + $0x70] sm:$0xff]
        %v1008 = vld [vmem:[#allocation3 + $0x78] sm:$0x3]
        %v1009 = vld [vmem:[#allocation3 + $0x80] sm:$0xff]
        %v1010 = vld [vmem:[#allocation3 + $0x88] sm:$0x3]
        %v1011 = vld [vmem:[#allocation3 + $0x90] sm:$0xff]
        %v1012 = vld [vmem:[#allocation3 + $0x98] sm:$0x3]
        %v1013 = vmax.f32 %v993, 0.0
        %v1014 = vmax.f32 %v994, 0.0
        %v1015 = vmax.f32 %v995, 0.0
        %v1016 = vmax.f32 %v996, 0.0
        %v1017 = vmax.f32 %v997, 0.0
        %v1018 = vmax.f32 %v998, 0.0
        %v1019 = vmax.f32 %v999, 0.0
        %v1020 = vmax.f32 %v1000, 0.0
        %v1021 = vmax.f32 %v1001, 0.0
        %v1022 = vmax.f32 %v1002, 0.0
        %v1023 = vmax.f32 %v1003, 0.0
        %v1024 = vmax.f32 %v1004, 0.0
        %v1025 = vmax.f32 %v1005, 0.0
        %v1026 = vmax.f32 %v1006, 0.0
        %v1027 = vmax.f32 %v1007, 0.0
        %v1028 = vmax.f32 %v1008, 0.0
        %v1029 = vmax.f32 %v1009, 0.0
        %v1030 = vmax.f32 %v1010, 0.0
        %v1031 = vmax.f32 %v1011, 0.0
        %v1032 = vmax.f32 %v1012, 0.0
        %v1049 = vrot.slane %v1013, 1
        %v1050 = vrot.slane %v1014, 1
        %v1051 = vsel %vm579, %v1049, %v1050
        %v1052 = vrot.slane %v1015, 1
        %v1053 = vrot.slane %v1016, 1
        %v1054 = vsel %vm579, %v1052, %v1053
        %v1055 = vrot.slane %v1017, 1
        %v1056 = vrot.slane %v1018, 1
        %v1057 = vsel %vm579, %v1055, %v1056
        %v1058 = vrot.slane %v1019, 1
        %v1059 = vrot.slane %v1020, 1
        %v1060 = vsel %vm579, %v1058, %v1059
        %v1061 = vrot.slane %v1021, 1
        %v1062 = vrot.slane %v1022, 1
        %v1063 = vsel %vm579, %v1061, %v1062
        %v1064 = vrot.slane %v1023, 1
        %v1065 = vrot.slane %v1024, 1
        %v1066 = vsel %vm579, %v1064, %v1065
        %v1067 = vrot.slane %v1025, 1
        %v1068 = vrot.slane %v1026, 1
        %v1069 = vsel %vm579, %v1067, %v1068
        %v1070 = vrot.slane %v1027, 1
        %v1071 = vrot.slane %v1028, 1
        %v1072 = vsel %vm579, %v1070, %v1071
        %v1073 = vrot.slane %v1013, 2
        %v1074 = vrot.slane %v1014, 2
        %v1075 = vsel %vm604, %v1073, %v1074
        %v1076 = vrot.slane %v1015, 2
        %v1077 = vrot.slane %v1016, 2
        %v1078 = vsel %vm604, %v1076, %v1077
        %v1079 = vrot.slane %v1017, 2
        %v1080 = vrot.slane %v1018, 2
        %v1081 = vsel %vm604, %v1079, %v1080
        %v1082 = vrot.slane %v1019, 2
        %v1083 = vrot.slane %v1020, 2
        %v1084 = vsel %vm604, %v1082, %v1083
        %v1085 = vrot.slane %v1021, 2
        %v1086 = vrot.slane %v1022, 2
        %v1087 = vsel %vm604, %v1085, %v1086
        %v1088 = vrot.slane %v1023, 2
        %v1089 = vrot.slane %v1024, 2
        %v1090 = vsel %vm604, %v1088, %v1089
        %v1091 = vrot.slane %v1025, 2
        %v1092 = vrot.slane %v1026, 2
        %v1093 = vsel %vm604, %v1091, %v1092
        %v1094 = vrot.slane %v1027, 2
        %v1095 = vrot.slane %v1028, 2
        %v1096 = vsel %vm604, %v1094, %v1095
        %v1099 = vrot.slane %v1029, 1
        %v1100 = vrot.slane %v1030, 1
        %v1101 = vsel %vm579, %v1099, %v1100
        %v1110 = vrot.slane %v1029, 2
        %v1111 = vrot.slane %v1030, 2
        %v1112 = vsel %vm604, %v1110, %v1111
        %v1115 = vrot.slane %v1031, 1
        %v1116 = vrot.slane %v1032, 1
        %v1117 = vsel %vm579, %v1115, %v1116
        %v1118 = vrot.slane %v1031, 2
        %v1119 = vrot.slane %v1032, 2
        %v1120 = vsel %vm604, %v1118, %v1119
        %1121 = vrot.lane.b32.xlu0 %v1051, 32
        %v1122 = vpop.permute.xlu0 %1121
        %1123 = vrot.lane.b32.xlu0 %v1054, 32
        %v1124 = vpop.permute.xlu0 %1123
        %1125 = vrot.lane.b32.xlu0 %v1057, 32
        %v1126 = vpop.permute.xlu0 %1125
        %1127 = vrot.lane.b32.xlu0 %v1060, 32
        %v1128 = vpop.permute.xlu0 %1127
        %1129 = vrot.lane.b32.xlu0 %v1063, 32
        %v1130 = vpop.permute.xlu0 %1129
        %1131 = vrot.lane.b32.xlu0 %v1066, 32
        %v1132 = vpop.permute.xlu0 %1131
        %1133 = vrot.lane.b32.xlu0 %v1069, 32
        %v1134 = vpop.permute.xlu0 %1133
        %1135 = vrot.lane.b32.xlu0 %v1072, 32
        %v1136 = vpop.permute.xlu0 %1135
        %1145 = vrot.lane.b32.xlu0 %v1075, 64
        %v1146 = vpop.permute.xlu0 %1145
        %1147 = vrot.lane.b32.xlu0 %v1078, 64
        %v1148 = vpop.permute.xlu0 %1147
        %1149 = vrot.lane.b32.xlu0 %v1081, 64
        %v1150 = vpop.permute.xlu0 %1149
        %1151 = vrot.lane.b32.xlu0 %v1084, 64
        %v1152 = vpop.permute.xlu0 %1151
        %1153 = vrot.lane.b32.xlu0 %v1087, 64
        %v1154 = vpop.permute.xlu0 %1153
        %1155 = vrot.lane.b32.xlu0 %v1090, 64
        %v1156 = vpop.permute.xlu0 %1155
        %1157 = vrot.lane.b32.xlu0 %v1093, 64
        %v1158 = vpop.permute.xlu0 %1157
        %1159 = vrot.lane.b32.xlu0 %v1096, 64
        %v1160 = vpop.permute.xlu0 %1159
        %1169 = vrot.lane.b32.xlu0 %v1015, 96
        %v1170 = vpop.permute.xlu0 %1169
        %1171 = vrot.lane.b32.xlu0 %v1017, 96
        %v1172 = vpop.permute.xlu0 %1171
        %1173 = vrot.lane.b32.xlu0 %v1019, 96
        %v1174 = vpop.permute.xlu0 %1173
        %1175 = vrot.lane.b32.xlu0 %v1021, 96
        %v1176 = vpop.permute.xlu0 %1175
        %1177 = vrot.lane.b32.xlu0 %v1023, 96
        %v1178 = vpop.permute.xlu0 %1177
        %1179 = vrot.lane.b32.xlu0 %v1025, 96
        %v1180 = vpop.permute.xlu0 %1179
        %1181 = vrot.lane.b32.xlu0 %v1027, 96
        %v1182 = vpop.permute.xlu0 %1181
        %1183 = vrot.lane.b32.xlu0 %v1029, 96
        %v1184 = vpop.permute.xlu0 %1183
        %1193 = vrot.lane.b32.xlu0 %v1078, 32
        %v1194 = vpop.permute.xlu0 %1193
        %1195 = vrot.lane.b32.xlu0 %v1081, 32
        %v1196 = vpop.permute.xlu0 %1195
        %1197 = vrot.lane.b32.xlu0 %v1084, 32
        %v1198 = vpop.permute.xlu0 %1197
        %1199 = vrot.lane.b32.xlu0 %v1087, 32
        %v1200 = vpop.permute.xlu0 %1199
        %1201 = vrot.lane.b32.xlu0 %v1090, 32
        %v1202 = vpop.permute.xlu0 %1201
        %1203 = vrot.lane.b32.xlu0 %v1093, 32
        %v1204 = vpop.permute.xlu0 %1203
        %1205 = vrot.lane.b32.xlu0 %v1096, 32
        %v1206 = vpop.permute.xlu0 %1205
        %1207 = vrot.lane.b32.xlu0 %v1112, 32
        %v1208 = vpop.permute.xlu0 %1207
        %1217 = vrot.lane.b32.xlu0 %v1017, 64
        %v1218 = vpop.permute.xlu0 %1217
        %1219 = vrot.lane.b32.xlu0 %v1019, 64
        %v1220 = vpop.permute.xlu0 %1219
        %1221 = vrot.lane.b32.xlu0 %v1021, 64
        %v1222 = vpop.permute.xlu0 %1221
        %1223 = vrot.lane.b32.xlu0 %v1023, 64
        %v1224 = vpop.permute.xlu0 %1223
        %1225 = vrot.lane.b32.xlu0 %v1025, 64
        %v1226 = vpop.permute.xlu0 %1225
        %1227 = vrot.lane.b32.xlu0 %v1027, 64
        %v1228 = vpop.permute.xlu0 %1227
        %1229 = vrot.lane.b32.xlu0 %v1029, 64
        %v1230 = vpop.permute.xlu0 %1229
        %1231 = vrot.lane.b32.xlu0 %v1031, 64
        %v1232 = vpop.permute.xlu0 %1231
        %1241 = vrot.lane.b32.xlu0 %v1057, 96
        %v1242 = vpop.permute.xlu0 %1241
        %1243 = vrot.lane.b32.xlu0 %v1060, 96
        %v1244 = vpop.permute.xlu0 %1243
        %1245 = vrot.lane.b32.xlu0 %v1063, 96
        %v1246 = vpop.permute.xlu0 %1245
        %1247 = vrot.lane.b32.xlu0 %v1066, 96
        %v1248 = vpop.permute.xlu0 %1247
        %1249 = vrot.lane.b32.xlu0 %v1069, 96
        %v1250 = vpop.permute.xlu0 %1249
        %1251 = vrot.lane.b32.xlu0 %v1072, 96
        %v1252 = vpop.permute.xlu0 %1251
        %1253 = vrot.lane.b32.xlu0 %v1101, 96
        %v1254 = vpop.permute.xlu0 %1253
        %1255 = vrot.lane.b32.xlu0 %v1117, 96
        %v1256 = vpop.permute.xlu0 %1255
        %v1265 = vsel %vm408, %v1013, %v1122
        %v1266 = vsel %vm408, %v1015, %v1124
        %v1267 = vsel %vm408, %v1017, %v1126
        %v1268 = vsel %vm408, %v1019, %v1128
        %v1269 = vsel %vm408, %v1021, %v1130
        %v1270 = vsel %vm408, %v1023, %v1132
        %v1271 = vsel %vm408, %v1025, %v1134
        %v1272 = vsel %vm408, %v1027, %v1136
        %vm1273 = vcmask 523264
        %v1274 = vsel %vm1273, %v1265, %v1146
        %v1275 = vsel %vm1273, %v1266, %v1148
        %v1276 = vsel %vm1273, %v1267, %v1150
        %v1277 = vsel %vm1273, %v1268, %v1152
        %v1278 = vsel %vm1273, %v1269, %v1154
        %v1279 = vsel %vm1273, %v1270, %v1156
        %v1280 = vsel %vm1273, %v1271, %v1158
        %v1281 = vsel %vm1273, %v1272, %v1160
        %vm1282 = vcmask 785408
        %v1283 = vsel %vm1282, %v1274, %v1170
        %v1284 = vsel %vm1282, %v1275, %v1172
        %v1285 = vsel %vm1282, %v1276, %v1174
        %v1286 = vsel %vm1282, %v1277, %v1176
        %v1287 = vsel %vm1282, %v1278, %v1178
        %v1288 = vsel %vm1282, %v1279, %v1180
        %v1289 = vsel %vm1282, %v1280, %v1182
        %v1290 = vsel %vm1282, %v1281, %v1184
        %v1291 = vsel %vm408, %v1054, %v1194
        %v1292 = vsel %vm408, %v1057, %v1196
        %v1293 = vsel %vm408, %v1060, %v1198
        %v1294 = vsel %vm408, %v1063, %v1200
        %v1295 = vsel %vm408, %v1066, %v1202
        %v1296 = vsel %vm408, %v1069, %v1204
        %v1297 = vsel %vm408, %v1072, %v1206
        %v1298 = vsel %vm408, %v1101, %v1208
        %v1299 = vsel %vm1273, %v1291, %v1218
        %v1300 = vsel %vm1273, %v1292, %v1220
        %v1301 = vsel %vm1273, %v1293, %v1222
        %v1302 = vsel %vm1273, %v1294, %v1224
        %v1303 = vsel %vm1273, %v1295, %v1226
        %v1304 = vsel %vm1273, %v1296, %v1228
        %v1305 = vsel %vm1273, %v1297, %v1230
        %v1306 = vsel %vm1273, %v1298, %v1232
        %v1307 = vsel %vm1282, %v1299, %v1242
        %v1308 = vsel %vm1282, %v1300, %v1244
        %v1309 = vsel %vm1282, %v1301, %v1246
        %v1310 = vsel %vm1282, %v1302, %v1248
        %v1311 = vsel %vm1282, %v1303, %v1250
        %v1312 = vsel %vm1282, %v1304, %v1252
        %v1313 = vsel %vm1282, %v1305, %v1254
        %v1314 = vsel %vm1282, %v1306, %v1256
        %v1315 = vld [vmem:[#allocation5] sm:$0xff]
        %v1316 = vld [vmem:[#allocation5 + $0x8] sm:$0xff]
        %v1317 = vld [vmem:[#allocation5 + $0x10] sm:$0xff]
        %v1318 = vld [vmem:[#allocation5 + $0x18] sm:$0xff]
        %v1319 = vld [vmem:[#allocation5 + $0x20] sm:$0xff]
        %v1320 = vld [vmem:[#allocation5 + $0x28] sm:$0xff]
        %v1321 = vld [vmem:[#allocation5 + $0x30] sm:$0xff]
        %v1322 = vld [vmem:[#allocation5 + $0x38] sm:$0xff]
        %v1323 = vld [vmem:[#allocation5 + $0x40] sm:$0xff]
        %v1324 = vld [vmem:[#allocation5 + $0x48] sm:$0xff]
        %v1325 = vld [vmem:[#allocation5 + $0x50] sm:$0xff]
        %v1326 = vld [vmem:[#allocation5 + $0x58] sm:$0xff]
        %v1327 = vld [vmem:[#allocation5 + $0x60] sm:$0xff]
        %v1328 = vld [vmem:[#allocation5 + $0x68] sm:$0xff]
        %v1329 = vld [vmem:[#allocation5 + $0x70] sm:$0xff]
        %v1330 = vld [vmem:[#allocation5 + $0x78] sm:$0xff]
        %v1331 = vld [vmem:[#allocation5 + $0x80] sm:$0xff]
        %v1332 = vld [vmem:[#allocation5 + $0x88] sm:$0xff]
        %v1333 = vld [vmem:[#allocation5 + $0x90] sm:$0xff]
        %v1334 = vld [vmem:[#allocation5 + $0x98] sm:$0xff]
        %v1335 = vld [vmem:[#allocation5 + $0xa0] sm:$0xff]
        %v1336 = vld [vmem:[#allocation5 + $0xa8] sm:$0xff]
        %v1337 = vld [vmem:[#allocation5 + $0xb0] sm:$0xff]
        %v1338 = vld [vmem:[#allocation5 + $0xb8] sm:$0xff]
        %v1339 = vld [vmem:[#allocation5 + $0xc0] sm:$0xff]
        %v1340 = vld [vmem:[#allocation5 + $0xc8] sm:$0xff]
        %v1341 = vld [vmem:[#allocation5 + $0xd0] sm:$0xff]
        %v1342 = vld [vmem:[#allocation5 + $0xd8] sm:$0xff]
        %v1343 = vld [vmem:[#allocation5 + $0xe0] sm:$0xff]
        %v1344 = vld [vmem:[#allocation5 + $0xe8] sm:$0xff]
        %v1345 = vld [vmem:[#allocation5 + $0xf0] sm:$0xff]
        %v1346 = vld [vmem:[#allocation5 + $0xf8] sm:$0xff]
        %v1347 = vld [vmem:[#allocation5 + $0x100] sm:$0xff]
        %v1348 = vld [vmem:[#allocation5 + $0x108] sm:$0xff]
        %v1349 = vld [vmem:[#allocation5 + $0x110] sm:$0xff]
        %v1350 = vld [vmem:[#allocation5 + $0x118] sm:$0xff]
        %v1351 = vsel %vm408, %v1081, 0
        %v1353 = vsel %vm408, %v1084, 0
        %v1355 = vsel %vm408, %v1087, 0
        %v1357 = vsel %vm408, %v1090, 0
        %v1359 = vsel %vm408, %v1093, 0
        %v1361 = vsel %vm408, %v1096, 0
        %v1363 = vsel %vm408, %v1112, 0
        %v1365 = vsel %vm408, %v1120, 0
        %1367 = vmatpush.msra.mxu0 %v1330
        %1368 = vmatpush.msra.mxu0 %v1329
        %1369 = vmatpush.msra.mxu0 %v1328
        %1370 = vmatpush.msra.mxu0 %v1327
        %1371 = vmatpush.msra.mxu0 %v1326
        %1372 = vmatpush.msra.mxu0 %v1325
        %1373 = vmatpush.msra.mxu0 %v1324
        %1374 = vmatpush.msra.mxu0 %v1323
        %1375 = vmatpush.msra.mxu0 %v1322
        %1376 = vmatpush.msra.mxu0 %v1321
        %1377 = vmatpush.msra.mxu0 %v1320
        %1378 = vmatpush.msra.mxu0 %v1319
        %1379 = vmatpush.msra.mxu0 %v1318
        %1380 = vmatpush.msra.mxu0 %v1317
        %1381 = vmatpush.msra.mxu0 %v1316
        %1382 = vmatpush.msra.mxu0 %v1315
        %1383 = vmatmul.f32.gmra.mxu0 %v1283
        %v1384 = vpop.f32.mrf.mxu0
        %v1385 = vadd.f32 0.0, %v1384
        %1386 = vmatmul.f32.gmra.mxu0 %v1284
        %v1387 = vpop.f32.mrf.mxu0
        %v1388 = vadd.f32 0.0, %v1387
        %1389 = vmatmul.f32.gmra.mxu0 %v1285
        %v1390 = vpop.f32.mrf.mxu0
        %v1391 = vadd.f32 0.0, %v1390
        %1392 = vmatmul.f32.gmra.mxu0 %v1286
        %v1393 = vpop.f32.mrf.mxu0
        %v1394 = vadd.f32 0.0, %v1393
        %1395 = vmatmul.f32.gmra.mxu0 %v1287
        %v1396 = vpop.f32.mrf.mxu0
        %v1397 = vadd.f32 0.0, %v1396
        %1398 = vmatmul.f32.gmra.mxu0 %v1288
        %v1399 = vpop.f32.mrf.mxu0
        %v1400 = vadd.f32 0.0, %v1399
        %1401 = vmatmul.f32.gmra.mxu0 %v1289
        %v1402 = vpop.f32.mrf.mxu0
        %v1403 = vadd.f32 0.0, %v1402
        %1404 = vmatmul.f32.gmra.mxu0 %v1290
        %v1405 = vpop.f32.mrf.mxu0
        %v1406 = vadd.f32 0.0, %v1405
        %1407 = vdwg.mxu0
        %1408 = vmatpush.msra.mxu0 %v1346
        %1409 = vmatpush.msra.mxu0 %v1345
        %1410 = vmatpush.msra.mxu0 %v1344
        %1411 = vmatpush.msra.mxu0 %v1343
        %1412 = vmatpush.msra.mxu0 %v1342
        %1413 = vmatpush.msra.mxu0 %v1341
        %1414 = vmatpush.msra.mxu0 %v1340
        %1415 = vmatpush.msra.mxu0 %v1339
        %1416 = vmatpush.msra.mxu0 %v1338
        %1417 = vmatpush.msra.mxu0 %v1337
        %1418 = vmatpush.msra.mxu0 %v1336
        %1419 = vmatpush.msra.mxu0 %v1335
        %1420 = vmatpush.msra.mxu0 %v1334
        %1421 = vmatpush.msra.mxu0 %v1333
        %1422 = vmatpush.msra.mxu0 %v1332
        %1423 = vmatpush.msra.mxu0 %v1331
        %1424 = vmatmul.f32.gmra.mxu0 %v1307
        %v1425 = vpop.f32.mrf.mxu0
        %v1426 = vadd.f32 %v1385, %v1425
        %1427 = vmatmul.f32.gmra.mxu0 %v1308
        %v1428 = vpop.f32.mrf.mxu0
        %v1429 = vadd.f32 %v1388, %v1428
        %1430 = vmatmul.f32.gmra.mxu0 %v1309
        %v1431 = vpop.f32.mrf.mxu0
        %v1432 = vadd.f32 %v1391, %v1431
        %1433 = vmatmul.f32.gmra.mxu0 %v1310
        %v1434 = vpop.f32.mrf.mxu0
        %v1435 = vadd.f32 %v1394, %v1434
        %1436 = vmatmul.f32.gmra.mxu0 %v1311
        %v1437 = vpop.f32.mrf.mxu0
        %v1438 = vadd.f32 %v1397, %v1437
        %1439 = vmatmul.f32.gmra.mxu0 %v1312
        %v1440 = vpop.f32.mrf.mxu0
        %v1441 = vadd.f32 %v1400, %v1440
        %1442 = vmatmul.f32.gmra.mxu0 %v1313
        %v1443 = vpop.f32.mrf.mxu0
        %v1444 = vadd.f32 %v1403, %v1443
        %1445 = vmatmul.f32.gmra.mxu0 %v1314
        %v1446 = vpop.f32.mrf.mxu0
        %v1447 = vadd.f32 %v1406, %v1446
        %1448 = vdwg.mxu0
        %1449 = vmatpush.msra.mxu0 0.0
        %1450 = vmatpush.msra.mxu0 0.0
        %1451 = vmatpush.msra.mxu0 0.0
        %1452 = vmatpush.msra.mxu0 0.0
        %1453 = vmatpush.msra.mxu0 0.0
        %1454 = vmatpush.msra.mxu0 0.0
        %1455 = vmatpush.msra.mxu0 0.0
        %1456 = vmatpush.msra.mxu0 0.0
        %1457 = vmatpush.msra.mxu0 0.0
        %1458 = vmatpush.msra.mxu0 0.0
        %1459 = vmatpush.msra.mxu0 0.0
        %1460 = vmatpush.msra.mxu0 0.0
        %1461 = vmatpush.msra.mxu0 %v1350
        %1462 = vmatpush.msra.mxu0 %v1349
        %1463 = vmatpush.msra.mxu0 %v1348
        %1464 = vmatpush.msra.mxu0 %v1347
        %1465 = vmatmul.f32.gmra.mxu0 %v1351
        %v1466 = vpop.f32.mrf.mxu0
        %v1467 = vadd.f32 %v1426, %v1466
        %1468 = vmatmul.f32.gmra.mxu0 %v1353
        %v1469 = vpop.f32.mrf.mxu0
        %v1470 = vadd.f32 %v1429, %v1469
        %1471 = vmatmul.f32.gmra.mxu0 %v1355
        %v1472 = vpop.f32.mrf.mxu0
        %v1473 = vadd.f32 %v1432, %v1472
        %1474 = vmatmul.f32.gmra.mxu0 %v1357
        %v1475 = vpop.f32.mrf.mxu0
        %v1476 = vadd.f32 %v1435, %v1475
        %1477 = vmatmul.f32.gmra.mxu0 %v1359
        %v1478 = vpop.f32.mrf.mxu0
        %v1479 = vadd.f32 %v1438, %v1478
        %1480 = vmatmul.f32.gmra.mxu0 %v1361
        %v1481 = vpop.f32.mrf.mxu0
        %v1482 = vadd.f32 %v1441, %v1481
        %1483 = vmatmul.f32.gmra.mxu0 %v1363
        %v1484 = vpop.f32.mrf.mxu0
        %v1485 = vadd.f32 %v1444, %v1484
        %1486 = vmatmul.f32.gmra.mxu0 %v1365
        %v1487 = vpop.f32.mrf.mxu0
        %v1488 = vadd.f32 %v1447, %v1487
        %1489 = vdwg.mxu0
        %v1490 = vmax.f32 %v1467, 0.0
        %v1491 = vmax.f32 %v1470, 0.0
        %v1492 = vmax.f32 %v1473, 0.0
        %v1493 = vmax.f32 %v1476, 0.0
        %v1494 = vmax.f32 %v1479, 0.0
        %v1495 = vmax.f32 %v1482, 0.0
        %v1496 = vmax.f32 %v1485, 0.0
        %v1497 = vmax.f32 %v1488, 0.0
        %v1498 = vld [vmem:[%s4] sm:$0xff]
        %v1500 = vsel %vm845, %v1490, 0
        %v1503 = vsel %vm845, %v1491, 0
        %v1506 = vsel %vm845, %v1492, 0
        %v1509 = vsel %vm845, %v1493, 0
        %v1512 = vsel %vm845, %v1494, 0
        %v1515 = vsel %vm845, %v1495, 0
        %v1518 = vsel %vm845, %v1496, 0
        %v1521 = vsel %vm845, %v1497, 0
        %1523 = vmatpush.msra.mxu0 0.0
        %1524 = vmatpush.msra.mxu0 0.0
        %1525 = vmatpush.msra.mxu0 0.0
        %1526 = vmatpush.msra.mxu0 0.0
        %1527 = vmatpush.msra.mxu0 0.0
        %1528 = vmatpush.msra.mxu0 0.0
        %1529 = vmatpush.msra.mxu0 0.0
        %1530 = vmatpush.msra.mxu0 0.0
        %1531 = vmatpush.msra.mxu0 0.0
        %1532 = vmatpush.msra.mxu0 0.0
        %1533 = vmatpush.msra.mxu0 0.0
        %1534 = vmatpush.msra.mxu0 0.0
        %1535 = vmatpush.msra.mxu0 0.0
        %1536 = vmatpush.msra.mxu0 0.0
        %1537 = vmatpush.msra.mxu0 0.0
        %1538 = vmatpush.msra.mxu0 %v1498
        %1539 = vmatmul.f32.gmra.mxu0 %v1500
        %v1540 = vpop.f32.mrf.mxu0
        %v1541 = vadd.f32 0.0, %v1540
        %1542 = vmatmul.f32.gmra.mxu0 %v1503
        %v1543 = vpop.f32.mrf.mxu0
        %v1544 = vadd.f32 0.0, %v1543
        %1545 = vmatmul.f32.gmra.mxu0 %v1506
        %v1546 = vpop.f32.mrf.mxu0
        %v1547 = vadd.f32 0.0, %v1546
        %1548 = vmatmul.f32.gmra.mxu0 %v1509
        %v1549 = vpop.f32.mrf.mxu0
        %v1550 = vadd.f32 0.0, %v1549
        %1551 = vmatmul.f32.gmra.mxu0 %v1512
        %v1552 = vpop.f32.mrf.mxu0
        %v1553 = vadd.f32 0.0, %v1552
        %1554 = vmatmul.f32.gmra.mxu0 %v1515
        %v1555 = vpop.f32.mrf.mxu0
        %v1556 = vadd.f32 0.0, %v1555
        %1557 = vmatmul.f32.gmra.mxu0 %v1518
        %v1558 = vpop.f32.mrf.mxu0
        %v1559 = vadd.f32 0.0, %v1558
        %1560 = vmatmul.f32.gmra.mxu0 %v1521
        %v1561 = vpop.f32.mrf.mxu0
        %v1562 = vadd.f32 0.0, %v1561
        %1563 = vdwg.mxu0
        %v1580 = vrot.slane %v995, 1
        %v1581 = vrot.slane %v996, 1
        %v1582 = vsel %vm579, %v1580, %v1581
        %v1583 = vrot.slane %v997, 1
        %v1584 = vrot.slane %v998, 1
        %v1585 = vsel %vm579, %v1583, %v1584
        %v1586 = vrot.slane %v999, 1
        %v1587 = vrot.slane %v1000, 1
        %v1588 = vsel %vm579, %v1586, %v1587
        %v1589 = vrot.slane %v1001, 1
        %v1590 = vrot.slane %v1002, 1
        %v1591 = vsel %vm579, %v1589, %v1590
        %v1592 = vrot.slane %v1003, 1
        %v1593 = vrot.slane %v1004, 1
        %v1594 = vsel %vm579, %v1592, %v1593
        %v1595 = vrot.slane %v1005, 1
        %v1596 = vrot.slane %v1006, 1
        %v1597 = vsel %vm579, %v1595, %v1596
        %v1598 = vrot.slane %v1007, 1
        %v1599 = vrot.slane %v1008, 1
        %v1600 = vsel %vm579, %v1598, %v1599
        %v1601 = vrot.slane %v1009, 1
        %v1602 = vrot.slane %v1010, 1
        %v1603 = vsel %vm579, %v1601, %v1602
        %v1612 = vadd.f32 %v1582, %v1541
        %v1613 = vadd.f32 %v1585, %v1544
        %v1614 = vadd.f32 %v1588, %v1547
        %v1615 = vadd.f32 %v1591, %v1550
        %v1616 = vadd.f32 %v1594, %v1553
        %v1617 = vadd.f32 %v1597, %v1556
        %v1618 = vadd.f32 %v1600, %v1559
        %v1619 = vadd.f32 %v1603, %v1562
        %1620 = vst.msk [vmem:[%s415 + $0x1] sm:$0xff] %vm408, %v1612
        %1621 = vst.msk [vmem:[%s415 + $0x11] sm:$0xff] %vm408, %v1613
        %1622 = vst.msk [vmem:[%s415 + $0x21] sm:$0xff] %vm408, %v1614
        %1623 = vst.msk [vmem:[%s415 + $0x31] sm:$0xff] %vm408, %v1615
        %1624 = vst.msk [vmem:[%s415 + $0x41] sm:$0xff] %vm408, %v1616
        %1625 = vst.msk [vmem:[%s415 + $0x51] sm:$0xff] %vm408, %v1617
        %1626 = vst.msk [vmem:[%s415 + $0x61] sm:$0xff] %vm408, %v1618
        %1627 = vst.msk [vmem:[%s415 + $0x71] sm:$0xff] %vm408, %v1619
        %v1628 = vld [vmem:[#allocation3] sm:$0xff]
        %v1629 = vld [vmem:[#allocation3 + $0x8] sm:$0x3]
        %v1630 = vld [vmem:[#allocation3 + $0x10] sm:$0xff]
        %v1631 = vld [vmem:[#allocation3 + $0x18] sm:$0x3]
        %v1632 = vld [vmem:[#allocation3 + $0x20] sm:$0xff]
        %v1633 = vld [vmem:[#allocation3 + $0x28] sm:$0x3]
        %v1634 = vld [vmem:[#allocation3 + $0x30] sm:$0xff]
        %v1635 = vld [vmem:[#allocation3 + $0x38] sm:$0x3]
        %v1636 = vld [vmem:[#allocation3 + $0x40] sm:$0xff]
        %v1637 = vld [vmem:[#allocation3 + $0x48] sm:$0x3]
        %v1638 = vld [vmem:[#allocation3 + $0x50] sm:$0xff]
        %v1639 = vld [vmem:[#allocation3 + $0x58] sm:$0x3]
        %v1640 = vld [vmem:[#allocation3 + $0x60] sm:$0xff]
        %v1641 = vld [vmem:[#allocation3 + $0x68] sm:$0x3]
        %v1642 = vld [vmem:[#allocation3 + $0x70] sm:$0xff]
        %v1643 = vld [vmem:[#allocation3 + $0x78] sm:$0x3]
        %v1644 = vld [vmem:[#allocation3 + $0x80] sm:$0xff]
        %v1645 = vld [vmem:[#allocation3 + $0x88] sm:$0x3]
        %v1646 = vld [vmem:[#allocation3 + $0x90] sm:$0xff]
        %v1647 = vld [vmem:[#allocation3 + $0x98] sm:$0x3]
        %v1648 = vmax.f32 %v1628, 0.0
        %v1649 = vmax.f32 %v1629, 0.0
        %v1650 = vmax.f32 %v1630, 0.0
        %v1651 = vmax.f32 %v1631, 0.0
        %v1652 = vmax.f32 %v1632, 0.0
        %v1653 = vmax.f32 %v1633, 0.0
        %v1654 = vmax.f32 %v1634, 0.0
        %v1655 = vmax.f32 %v1635, 0.0
        %v1656 = vmax.f32 %v1636, 0.0
        %v1657 = vmax.f32 %v1637, 0.0
        %v1658 = vmax.f32 %v1638, 0.0
        %v1659 = vmax.f32 %v1639, 0.0
        %v1660 = vmax.f32 %v1640, 0.0
        %v1661 = vmax.f32 %v1641, 0.0
        %v1662 = vmax.f32 %v1642, 0.0
        %v1663 = vmax.f32 %v1643, 0.0
        %v1664 = vmax.f32 %v1644, 0.0
        %v1665 = vmax.f32 %v1645, 0.0
        %v1666 = vmax.f32 %v1646, 0.0
        %v1667 = vmax.f32 %v1647, 0.0
        %v1684 = vrot.slane %v1648, 1
        %v1685 = vrot.slane %v1649, 1
        %v1686 = vsel %vm579, %v1684, %v1685
        %v1687 = vrot.slane %v1650, 1
        %v1688 = vrot.slane %v1651, 1
        %v1689 = vsel %vm579, %v1687, %v1688
        %v1690 = vrot.slane %v1652, 1
        %v1691 = vrot.slane %v1653, 1
        %v1692 = vsel %vm579, %v1690, %v1691
        %v1693 = vrot.slane %v1654, 1
        %v1694 = vrot.slane %v1655, 1
        %v1695 = vsel %vm579, %v1693, %v1694
        %v1696 = vrot.slane %v1656, 1
        %v1697 = vrot.slane %v1657, 1
        %v1698 = vsel %vm579, %v1696, %v1697
        %v1699 = vrot.slane %v1658, 1
        %v1700 = vrot.slane %v1659, 1
        %v1701 = vsel %vm579, %v1699, %v1700
        %v1702 = vrot.slane %v1660, 1
        %v1703 = vrot.slane %v1661, 1
        %v1704 = vsel %vm579, %v1702, %v1703
        %v1705 = vrot.slane %v1662, 1
        %v1706 = vrot.slane %v1663, 1
        %v1707 = vsel %vm579, %v1705, %v1706
        %v1708 = vrot.slane %v1648, 2
        %v1709 = vrot.slane %v1649, 2
        %v1710 = vsel %vm604, %v1708, %v1709
        %v1711 = vrot.slane %v1650, 2
        %v1712 = vrot.slane %v1651, 2
        %v1713 = vsel %vm604, %v1711, %v1712
        %v1714 = vrot.slane %v1652, 2
        %v1715 = vrot.slane %v1653, 2
        %v1716 = vsel %vm604, %v1714, %v1715
        %v1717 = vrot.slane %v1654, 2
        %v1718 = vrot.slane %v1655, 2
        %v1719 = vsel %vm604, %v1717, %v1718
        %v1720 = vrot.slane %v1656, 2
        %v1721 = vrot.slane %v1657, 2
        %v1722 = vsel %vm604, %v1720, %v1721
        %v1723 = vrot.slane %v1658, 2
        %v1724 = vrot.slane %v1659, 2
        %v1725 = vsel %vm604, %v1723, %v1724
        %v1726 = vrot.slane %v1660, 2
        %v1727 = vrot.slane %v1661, 2
        %v1728 = vsel %vm604, %v1726, %v1727
        %v1729 = vrot.slane %v1662, 2
        %v1730 = vrot.slane %v1663, 2
        %v1731 = vsel %vm604, %v1729, %v1730
        %v1734 = vrot.slane %v1664, 1
        %v1735 = vrot.slane %v1665, 1
        %v1736 = vsel %vm579, %v1734, %v1735
        %v1745 = vrot.slane %v1664, 2
        %v1746 = vrot.slane %v1665, 2
        %v1747 = vsel %vm604, %v1745, %v1746
        %v1750 = vrot.slane %v1666, 1
        %v1751 = vrot.slane %v1667, 1
        %v1752 = vsel %vm579, %v1750, %v1751
        %v1753 = vrot.slane %v1666, 2
        %v1754 = vrot.slane %v1667, 2
        %v1755 = vsel %vm604, %v1753, %v1754
        %1756 = vrot.lane.b32.xlu0 %v1686, 32
        %v1757 = vpop.permute.xlu0 %1756
        %1758 = vrot.lane.b32.xlu0 %v1689, 32
        %v1759 = vpop.permute.xlu0 %1758
        %1760 = vrot.lane.b32.xlu0 %v1692, 32
        %v1761 = vpop.permute.xlu0 %1760
        %1762 = vrot.lane.b32.xlu0 %v1695, 32
        %v1763 = vpop.permute.xlu0 %1762
        %1764 = vrot.lane.b32.xlu0 %v1698, 32
        %v1765 = vpop.permute.xlu0 %1764
        %1766 = vrot.lane.b32.xlu0 %v1701, 32
        %v1767 = vpop.permute.xlu0 %1766
        %1768 = vrot.lane.b32.xlu0 %v1704, 32
        %v1769 = vpop.permute.xlu0 %1768
        %1770 = vrot.lane.b32.xlu0 %v1707, 32
        %v1771 = vpop.permute.xlu0 %1770
        %1780 = vrot.lane.b32.xlu0 %v1710, 64
        %v1781 = vpop.permute.xlu0 %1780
        %1782 = vrot.lane.b32.xlu0 %v1713, 64
        %v1783 = vpop.permute.xlu0 %1782
        %1784 = vrot.lane.b32.xlu0 %v1716, 64
        %v1785 = vpop.permute.xlu0 %1784
        %1786 = vrot.lane.b32.xlu0 %v1719, 64
        %v1787 = vpop.permute.xlu0 %1786
        %1788 = vrot.lane.b32.xlu0 %v1722, 64
        %v1789 = vpop.permute.xlu0 %1788
        %1790 = vrot.lane.b32.xlu0 %v1725, 64
        %v1791 = vpop.permute.xlu0 %1790
        %1792 = vrot.lane.b32.xlu0 %v1728, 64
        %v1793 = vpop.permute.xlu0 %1792
        %1794 = vrot.lane.b32.xlu0 %v1731, 64
        %v1795 = vpop.permute.xlu0 %1794
        %1804 = vrot.lane.b32.xlu0 %v1650, 96
        %v1805 = vpop.permute.xlu0 %1804
        %1806 = vrot.lane.b32.xlu0 %v1652, 96
        %v1807 = vpop.permute.xlu0 %1806
        %1808 = vrot.lane.b32.xlu0 %v1654, 96
        %v1809 = vpop.permute.xlu0 %1808
        %1810 = vrot.lane.b32.xlu0 %v1656, 96
        %v1811 = vpop.permute.xlu0 %1810
        %1812 = vrot.lane.b32.xlu0 %v1658, 96
        %v1813 = vpop.permute.xlu0 %1812
        %1814 = vrot.lane.b32.xlu0 %v1660, 96
        %v1815 = vpop.permute.xlu0 %1814
        %1816 = vrot.lane.b32.xlu0 %v1662, 96
        %v1817 = vpop.permute.xlu0 %1816
        %1818 = vrot.lane.b32.xlu0 %v1664, 96
        %v1819 = vpop.permute.xlu0 %1818
        %1828 = vrot.lane.b32.xlu0 %v1713, 32
        %v1829 = vpop.permute.xlu0 %1828
        %1830 = vrot.lane.b32.xlu0 %v1716, 32
        %v1831 = vpop.permute.xlu0 %1830
        %1832 = vrot.lane.b32.xlu0 %v1719, 32
        %v1833 = vpop.permute.xlu0 %1832
        %1834 = vrot.lane.b32.xlu0 %v1722, 32
        %v1835 = vpop.permute.xlu0 %1834
        %1836 = vrot.lane.b32.xlu0 %v1725, 32
        %v1837 = vpop.permute.xlu0 %1836
        %1838 = vrot.lane.b32.xlu0 %v1728, 32
        %v1839 = vpop.permute.xlu0 %1838
        %1840 = vrot.lane.b32.xlu0 %v1731, 32
        %v1841 = vpop.permute.xlu0 %1840
        %1842 = vrot.lane.b32.xlu0 %v1747, 32
        %v1843 = vpop.permute.xlu0 %1842
        %1852 = vrot.lane.b32.xlu0 %v1652, 64
        %v1853 = vpop.permute.xlu0 %1852
        %1854 = vrot.lane.b32.xlu0 %v1654, 64
        %v1855 = vpop.permute.xlu0 %1854
        %1856 = vrot.lane.b32.xlu0 %v1656, 64
        %v1857 = vpop.permute.xlu0 %1856
        %1858 = vrot.lane.b32.xlu0 %v1658, 64
        %v1859 = vpop.permute.xlu0 %1858
        %1860 = vrot.lane.b32.xlu0 %v1660, 64
        %v1861 = vpop.permute.xlu0 %1860
        %1862 = vrot.lane.b32.xlu0 %v1662, 64
        %v1863 = vpop.permute.xlu0 %1862
        %1864 = vrot.lane.b32.xlu0 %v1664, 64
        %v1865 = vpop.permute.xlu0 %1864
        %1866 = vrot.lane.b32.xlu0 %v1666, 64
        %v1867 = vpop.permute.xlu0 %1866
        %1876 = vrot.lane.b32.xlu0 %v1692, 96
        %v1877 = vpop.permute.xlu0 %1876
        %1878 = vrot.lane.b32.xlu0 %v1695, 96
        %v1879 = vpop.permute.xlu0 %1878
        %1880 = vrot.lane.b32.xlu0 %v1698, 96
        %v1881 = vpop.permute.xlu0 %1880
        %1882 = vrot.lane.b32.xlu0 %v1701, 96
        %v1883 = vpop.permute.xlu0 %1882
        %1884 = vrot.lane.b32.xlu0 %v1704, 96
        %v1885 = vpop.permute.xlu0 %1884
        %1886 = vrot.lane.b32.xlu0 %v1707, 96
        %v1887 = vpop.permute.xlu0 %1886
        %1888 = vrot.lane.b32.xlu0 %v1736, 96
        %v1889 = vpop.permute.xlu0 %1888
        %1890 = vrot.lane.b32.xlu0 %v1752, 96
        %v1891 = vpop.permute.xlu0 %1890
        %v1900 = vsel %vm408, %v1648, %v1757
        %v1901 = vsel %vm408, %v1650, %v1759
        %v1902 = vsel %vm408, %v1652, %v1761
        %v1903 = vsel %vm408, %v1654, %v1763
        %v1904 = vsel %vm408, %v1656, %v1765
        %v1905 = vsel %vm408, %v1658, %v1767
        %v1906 = vsel %vm408, %v1660, %v1769
        %v1907 = vsel %vm408, %v1662, %v1771
        %v1908 = vsel %vm1273, %v1900, %v1781
        %v1909 = vsel %vm1273, %v1901, %v1783
        %v1910 = vsel %vm1273, %v1902, %v1785
        %v1911 = vsel %vm1273, %v1903, %v1787
        %v1912 = vsel %vm1273, %v1904, %v1789
        %v1913 = vsel %vm1273, %v1905, %v1791
        %v1914 = vsel %vm1273, %v1906, %v1793
        %v1915 = vsel %vm1273, %v1907, %v1795
        %v1916 = vsel %vm1282, %v1908, %v1805
        %v1917 = vsel %vm1282, %v1909, %v1807
        %v1918 = vsel %vm1282, %v1910, %v1809
        %v1919 = vsel %vm1282, %v1911, %v1811
        %v1920 = vsel %vm1282, %v1912, %v1813
        %v1921 = vsel %vm1282, %v1913, %v1815
        %v1922 = vsel %vm1282, %v1914, %v1817
        %v1923 = vsel %vm1282, %v1915, %v1819
        %v1924 = vsel %vm408, %v1689, %v1829
        %v1925 = vsel %vm408, %v1692, %v1831
        %v1926 = vsel %vm408, %v1695, %v1833
        %v1927 = vsel %vm408, %v1698, %v1835
        %v1928 = vsel %vm408, %v1701, %v1837
        %v1929 = vsel %vm408, %v1704, %v1839
        %v1930 = vsel %vm408, %v1707, %v1841
        %v1931 = vsel %vm408, %v1736, %v1843
        %v1932 = vsel %vm1273, %v1924, %v1853
        %v1933 = vsel %vm1273, %v1925, %v1855
        %v1934 = vsel %vm1273, %v1926, %v1857
        %v1935 = vsel %vm1273, %v1927, %v1859
        %v1936 = vsel %vm1273, %v1928, %v1861
        %v1937 = vsel %vm1273, %v1929, %v1863
        %v1938 = vsel %vm1273, %v1930, %v1865
        %v1939 = vsel %vm1273, %v1931, %v1867
        %v1940 = vsel %vm1282, %v1932, %v1877
        %v1941 = vsel %vm1282, %v1933, %v1879
        %v1942 = vsel %vm1282, %v1934, %v1881
        %v1943 = vsel %vm1282, %v1935, %v1883
        %v1944 = vsel %vm1282, %v1936, %v1885
        %v1945 = vsel %vm1282, %v1937, %v1887
        %v1946 = vsel %vm1282, %v1938, %v1889
        %v1947 = vsel %vm1282, %v1939, %v1891
        %s1948 = scalar_lea.vmem [#allocation5], 288
        %v1949 = vld [vmem:[%s1948] sm:$0xff]
        %v1950 = vld [vmem:[%s1948 + $0x8] sm:$0xff]
        %v1951 = vld [vmem:[%s1948 + $0x10] sm:$0xff]
        %v1952 = vld [vmem:[%s1948 + $0x18] sm:$0xff]
        %v1953 = vld [vmem:[%s1948 + $0x20] sm:$0xff]
        %v1954 = vld [vmem:[%s1948 + $0x28] sm:$0xff]
        %v1955 = vld [vmem:[%s1948 + $0x30] sm:$0xff]
        %v1956 = vld [vmem:[%s1948 + $0x38] sm:$0xff]
        %v1957 = vld [vmem:[%s1948 + $0x40] sm:$0xff]
        %v1958 = vld [vmem:[%s1948 + $0x48] sm:$0xff]
        %v1959 = vld [vmem:[%s1948 + $0x50] sm:$0xff]
        %v1960 = vld [vmem:[%s1948 + $0x58] sm:$0xff]
        %v1961 = vld [vmem:[%s1948 + $0x60] sm:$0xff]
        %v1962 = vld [vmem:[%s1948 + $0x68] sm:$0xff]
        %v1963 = vld [vmem:[%s1948 + $0x70] sm:$0xff]
        %v1964 = vld [vmem:[%s1948 + $0x78] sm:$0xff]
        %v1965 = vld [vmem:[%s1948 + $0x80] sm:$0xff]
        %v1966 = vld [vmem:[%s1948 + $0x88] sm:$0xff]
        %v1967 = vld [vmem:[%s1948 + $0x90] sm:$0xff]
        %v1968 = vld [vmem:[%s1948 + $0x98] sm:$0xff]
        %v1969 = vld [vmem:[%s1948 + $0xa0] sm:$0xff]
        %v1970 = vld [vmem:[%s1948 + $0xa8] sm:$0xff]
        %v1971 = vld [vmem:[%s1948 + $0xb0] sm:$0xff]
        %v1972 = vld [vmem:[%s1948 + $0xb8] sm:$0xff]
        %v1973 = vld [vmem:[%s1948 + $0xc0] sm:$0xff]
        %v1974 = vld [vmem:[%s1948 + $0xc8] sm:$0xff]
        %v1975 = vld [vmem:[%s1948 + $0xd0] sm:$0xff]
        %v1976 = vld [vmem:[%s1948 + $0xd8] sm:$0xff]
        %v1977 = vld [vmem:[%s1948 + $0xe0] sm:$0xff]
        %v1978 = vld [vmem:[%s1948 + $0xe8] sm:$0xff]
        %v1979 = vld [vmem:[%s1948 + $0xf0] sm:$0xff]
        %v1980 = vld [vmem:[%s1948 + $0xf8] sm:$0xff]
        %v1981 = vld [vmem:[%s1948 + $0x100] sm:$0xff]
        %v1982 = vld [vmem:[%s1948 + $0x108] sm:$0xff]
        %v1983 = vld [vmem:[%s1948 + $0x110] sm:$0xff]
        %v1984 = vld [vmem:[%s1948 + $0x118] sm:$0xff]
        %v1985 = vsel %vm408, %v1716, 0
        %v1987 = vsel %vm408, %v1719, 0
        %v1989 = vsel %vm408, %v1722, 0
        %v1991 = vsel %vm408, %v1725, 0
        %v1993 = vsel %vm408, %v1728, 0
        %v1995 = vsel %vm408, %v1731, 0
        %v1997 = vsel %vm408, %v1747, 0
        %v1999 = vsel %vm408, %v1755, 0
        %2001 = vmatpush.msra.mxu0 %v1964
        %2002 = vmatpush.msra.mxu0 %v1963
        %2003 = vmatpush.msra.mxu0 %v1962
        %2004 = vmatpush.msra.mxu0 %v1961
        %2005 = vmatpush.msra.mxu0 %v1960
        %2006 = vmatpush.msra.mxu0 %v1959
        %2007 = vmatpush.msra.mxu0 %v1958
        %2008 = vmatpush.msra.mxu0 %v1957
        %2009 = vmatpush.msra.mxu0 %v1956
        %2010 = vmatpush.msra.mxu0 %v1955
        %2011 = vmatpush.msra.mxu0 %v1954
        %2012 = vmatpush.msra.mxu0 %v1953
        %2013 = vmatpush.msra.mxu0 %v1952
        %2014 = vmatpush.msra.mxu0 %v1951
        %2015 = vmatpush.msra.mxu0 %v1950
        %2016 = vmatpush.msra.mxu0 %v1949
        %2017 = vmatmul.f32.gmra.mxu0 %v1916
        %v2018 = vpop.f32.mrf.mxu0
        %v2019 = vadd.f32 0.0, %v2018
        %2020 = vmatmul.f32.gmra.mxu0 %v1917
        %v2021 = vpop.f32.mrf.mxu0
        %v2022 = vadd.f32 0.0, %v2021
        %2023 = vmatmul.f32.gmra.mxu0 %v1918
        %v2024 = vpop.f32.mrf.mxu0
        %v2025 = vadd.f32 0.0, %v2024
        %2026 = vmatmul.f32.gmra.mxu0 %v1919
        %v2027 = vpop.f32.mrf.mxu0
        %v2028 = vadd.f32 0.0, %v2027
        %2029 = vmatmul.f32.gmra.mxu0 %v1920
        %v2030 = vpop.f32.mrf.mxu0
        %v2031 = vadd.f32 0.0, %v2030
        %2032 = vmatmul.f32.gmra.mxu0 %v1921
        %v2033 = vpop.f32.mrf.mxu0
        %v2034 = vadd.f32 0.0, %v2033
        %2035 = vmatmul.f32.gmra.mxu0 %v1922
        %v2036 = vpop.f32.mrf.mxu0
        %v2037 = vadd.f32 0.0, %v2036
        %2038 = vmatmul.f32.gmra.mxu0 %v1923
        %v2039 = vpop.f32.mrf.mxu0
        %v2040 = vadd.f32 0.0, %v2039
        %2041 = vdwg.mxu0
        %2042 = vmatpush.msra.mxu0 %v1980
        %2043 = vmatpush.msra.mxu0 %v1979
        %2044 = vmatpush.msra.mxu0 %v1978
        %2045 = vmatpush.msra.mxu0 %v1977
        %2046 = vmatpush.msra.mxu0 %v1976
        %2047 = vmatpush.msra.mxu0 %v1975
        %2048 = vmatpush.msra.mxu0 %v1974
        %2049 = vmatpush.msra.mxu0 %v1973
        %2050 = vmatpush.msra.mxu0 %v1972
        %2051 = vmatpush.msra.mxu0 %v1971
        %2052 = vmatpush.msra.mxu0 %v1970
        %2053 = vmatpush.msra.mxu0 %v1969
        %2054 = vmatpush.msra.mxu0 %v1968
        %2055 = vmatpush.msra.mxu0 %v1967
        %2056 = vmatpush.msra.mxu0 %v1966
        %2057 = vmatpush.msra.mxu0 %v1965
        %2058 = vmatmul.f32.gmra.mxu0 %v1940
        %v2059 = vpop.f32.mrf.mxu0
        %v2060 = vadd.f32 %v2019, %v2059
        %2061 = vmatmul.f32.gmra.mxu0 %v1941
        %v2062 = vpop.f32.mrf.mxu0
        %v2063 = vadd.f32 %v2022, %v2062
        %2064 = vmatmul.f32.gmra.mxu0 %v1942
        %v2065 = vpop.f32.mrf.mxu0
        %v2066 = vadd.f32 %v2025, %v2065
        %2067 = vmatmul.f32.gmra.mxu0 %v1943
        %v2068 = vpop.f32.mrf.mxu0
        %v2069 = vadd.f32 %v2028, %v2068
        %2070 = vmatmul.f32.gmra.mxu0 %v1944
        %v2071 = vpop.f32.mrf.mxu0
        %v2072 = vadd.f32 %v2031, %v2071
        %2073 = vmatmul.f32.gmra.mxu0 %v1945
        %v2074 = vpop.f32.mrf.mxu0
        %v2075 = vadd.f32 %v2034, %v2074
        %2076 = vmatmul.f32.gmra.mxu0 %v1946
        %v2077 = vpop.f32.mrf.mxu0
        %v2078 = vadd.f32 %v2037, %v2077
        %2079 = vmatmul.f32.gmra.mxu0 %v1947
        %v2080 = vpop.f32.mrf.mxu0
        %v2081 = vadd.f32 %v2040, %v2080
        %2082 = vdwg.mxu0
        %2083 = vmatpush.msra.mxu0 0.0
        %2084 = vmatpush.msra.mxu0 0.0
        %2085 = vmatpush.msra.mxu0 0.0
        %2086 = vmatpush.msra.mxu0 0.0
        %2087 = vmatpush.msra.mxu0 0.0
        %2088 = vmatpush.msra.mxu0 0.0
        %2089 = vmatpush.msra.mxu0 0.0
        %2090 = vmatpush.msra.mxu0 0.0
        %2091 = vmatpush.msra.mxu0 0.0
        %2092 = vmatpush.msra.mxu0 0.0
        %2093 = vmatpush.msra.mxu0 0.0
        %2094 = vmatpush.msra.mxu0 0.0
        %2095 = vmatpush.msra.mxu0 %v1984
        %2096 = vmatpush.msra.mxu0 %v1983
        %2097 = vmatpush.msra.mxu0 %v1982
        %2098 = vmatpush.msra.mxu0 %v1981
        %2099 = vmatmul.f32.gmra.mxu0 %v1985
        %v2100 = vpop.f32.mrf.mxu0
        %v2101 = vadd.f32 %v2060, %v2100
        %2102 = vmatmul.f32.gmra.mxu0 %v1987
        %v2103 = vpop.f32.mrf.mxu0
        %v2104 = vadd.f32 %v2063, %v2103
        %2105 = vmatmul.f32.gmra.mxu0 %v1989
        %v2106 = vpop.f32.mrf.mxu0
        %v2107 = vadd.f32 %v2066, %v2106
        %2108 = vmatmul.f32.gmra.mxu0 %v1991
        %v2109 = vpop.f32.mrf.mxu0
        %v2110 = vadd.f32 %v2069, %v2109
        %2111 = vmatmul.f32.gmra.mxu0 %v1993
        %v2112 = vpop.f32.mrf.mxu0
        %v2113 = vadd.f32 %v2072, %v2112
        %2114 = vmatmul.f32.gmra.mxu0 %v1995
        %v2115 = vpop.f32.mrf.mxu0
        %v2116 = vadd.f32 %v2075, %v2115
        %2117 = vmatmul.f32.gmra.mxu0 %v1997
        %v2118 = vpop.f32.mrf.mxu0
        %v2119 = vadd.f32 %v2078, %v2118
        %2120 = vmatmul.f32.gmra.mxu0 %v1999
        %v2121 = vpop.f32.mrf.mxu0
        %v2122 = vadd.f32 %v2081, %v2121
        %2123 = vdwg.mxu0
        %v2124 = vmax.f32 %v2101, 0.0
        %v2125 = vmax.f32 %v2104, 0.0
        %v2126 = vmax.f32 %v2107, 0.0
        %v2127 = vmax.f32 %v2110, 0.0
        %v2128 = vmax.f32 %v2113, 0.0
        %v2129 = vmax.f32 %v2116, 0.0
        %v2130 = vmax.f32 %v2119, 0.0
        %v2131 = vmax.f32 %v2122, 0.0
        %s2132 = scalar_lea.vmem %s4, 8
        %v2133 = vld [vmem:[%s2132] sm:$0xff]
        %v2135 = vsel %vm845, %v2124, 0
        %v2138 = vsel %vm845, %v2125, 0
        %v2141 = vsel %vm845, %v2126, 0
        %v2144 = vsel %vm845, %v2127, 0
        %v2147 = vsel %vm845, %v2128, 0
        %v2150 = vsel %vm845, %v2129, 0
        %v2153 = vsel %vm845, %v2130, 0
        %v2156 = vsel %vm845, %v2131, 0
        %2158 = vmatpush.msra.mxu0 0.0
        %2159 = vmatpush.msra.mxu0 0.0
        %2160 = vmatpush.msra.mxu0 0.0
        %2161 = vmatpush.msra.mxu0 0.0
        %2162 = vmatpush.msra.mxu0 0.0
        %2163 = vmatpush.msra.mxu0 0.0
        %2164 = vmatpush.msra.mxu0 0.0
        %2165 = vmatpush.msra.mxu0 0.0
        %2166 = vmatpush.msra.mxu0 0.0
        %2167 = vmatpush.msra.mxu0 0.0
        %2168 = vmatpush.msra.mxu0 0.0
        %2169 = vmatpush.msra.mxu0 0.0
        %2170 = vmatpush.msra.mxu0 0.0
        %2171 = vmatpush.msra.mxu0 0.0
        %2172 = vmatpush.msra.mxu0 0.0
        %2173 = vmatpush.msra.mxu0 %v2133
        %2174 = vmatmul.f32.gmra.mxu0 %v2135
        %v2175 = vpop.f32.mrf.mxu0
        %v2176 = vadd.f32 0.0, %v2175
        %2177 = vmatmul.f32.gmra.mxu0 %v2138
        %v2178 = vpop.f32.mrf.mxu0
        %v2179 = vadd.f32 0.0, %v2178
        %2180 = vmatmul.f32.gmra.mxu0 %v2141
        %v2181 = vpop.f32.mrf.mxu0
        %v2182 = vadd.f32 0.0, %v2181
        %2183 = vmatmul.f32.gmra.mxu0 %v2144
        %v2184 = vpop.f32.mrf.mxu0
        %v2185 = vadd.f32 0.0, %v2184
        %2186 = vmatmul.f32.gmra.mxu0 %v2147
        %v2187 = vpop.f32.mrf.mxu0
        %v2188 = vadd.f32 0.0, %v2187
        %2189 = vmatmul.f32.gmra.mxu0 %v2150
        %v2190 = vpop.f32.mrf.mxu0
        %v2191 = vadd.f32 0.0, %v2190
        %2192 = vmatmul.f32.gmra.mxu0 %v2153
        %v2193 = vpop.f32.mrf.mxu0
        %v2194 = vadd.f32 0.0, %v2193
        %2195 = vmatmul.f32.gmra.mxu0 %v2156
        %v2196 = vpop.f32.mrf.mxu0
        %v2197 = vadd.f32 0.0, %v2196
        %2198 = vdwg.mxu0
        %v2215 = vrot.slane %v1630, 1
        %v2216 = vrot.slane %v1631, 1
        %v2217 = vsel %vm579, %v2215, %v2216
        %v2218 = vrot.slane %v1632, 1
        %v2219 = vrot.slane %v1633, 1
        %v2220 = vsel %vm579, %v2218, %v2219
        %v2221 = vrot.slane %v1634, 1
        %v2222 = vrot.slane %v1635, 1
        %v2223 = vsel %vm579, %v2221, %v2222
        %v2224 = vrot.slane %v1636, 1
        %v2225 = vrot.slane %v1637, 1
        %v2226 = vsel %vm579, %v2224, %v2225
        %v2227 = vrot.slane %v1638, 1
        %v2228 = vrot.slane %v1639, 1
        %v2229 = vsel %vm579, %v2227, %v2228
        %v2230 = vrot.slane %v1640, 1
        %v2231 = vrot.slane %v1641, 1
        %v2232 = vsel %vm579, %v2230, %v2231
        %v2233 = vrot.slane %v1642, 1
        %v2234 = vrot.slane %v1643, 1
        %v2235 = vsel %vm579, %v2233, %v2234
        %v2236 = vrot.slane %v1644, 1
        %v2237 = vrot.slane %v1645, 1
        %v2238 = vsel %vm579, %v2236, %v2237
        %v2247 = vadd.f32 %v2217, %v2176
        %v2248 = vadd.f32 %v2220, %v2179
        %v2249 = vadd.f32 %v2223, %v2182
        %v2250 = vadd.f32 %v2226, %v2185
        %v2251 = vadd.f32 %v2229, %v2188
        %v2252 = vadd.f32 %v2232, %v2191
        %v2253 = vadd.f32 %v2235, %v2194
        %v2254 = vadd.f32 %v2238, %v2197
        %2255 = vst.msk [vmem:[%s415 + $0x1] sm:$0xff] %vm408, %v2247
        %2256 = vst.msk [vmem:[%s415 + $0x11] sm:$0xff] %vm408, %v2248
        %2257 = vst.msk [vmem:[%s415 + $0x21] sm:$0xff] %vm408, %v2249
        %2258 = vst.msk [vmem:[%s415 + $0x31] sm:$0xff] %vm408, %v2250
        %2259 = vst.msk [vmem:[%s415 + $0x41] sm:$0xff] %vm408, %v2251
        %2260 = vst.msk [vmem:[%s415 + $0x51] sm:$0xff] %vm408, %v2252
        %2261 = vst.msk [vmem:[%s415 + $0x61] sm:$0xff] %vm408, %v2253
        %2262 = vst.msk [vmem:[%s415 + $0x71] sm:$0xff] %vm408, %v2254
        %v2263 = vld [vmem:[#allocation3] sm:$0xff]
        %v2264 = vld [vmem:[#allocation3 + $0x8] sm:$0x3]
        %v2265 = vld [vmem:[#allocation3 + $0x10] sm:$0xff]
        %v2266 = vld [vmem:[#allocation3 + $0x18] sm:$0x3]
        %v2267 = vld [vmem:[#allocation3 + $0x20] sm:$0xff]
        %v2268 = vld [vmem:[#allocation3 + $0x28] sm:$0x3]
        %v2269 = vld [vmem:[#allocation3 + $0x30] sm:$0xff]
        %v2270 = vld [vmem:[#allocation3 + $0x38] sm:$0x3]
        %v2271 = vld [vmem:[#allocation3 + $0x40] sm:$0xff]
        %v2272 = vld [vmem:[#allocation3 + $0x48] sm:$0x3]
        %v2273 = vld [vmem:[#allocation3 + $0x50] sm:$0xff]
        %v2274 = vld [vmem:[#allocation3 + $0x58] sm:$0x3]
        %v2275 = vld [vmem:[#allocation3 + $0x60] sm:$0xff]
        %v2276 = vld [vmem:[#allocation3 + $0x68] sm:$0x3]
        %v2277 = vld [vmem:[#allocation3 + $0x70] sm:$0xff]
        %v2278 = vld [vmem:[#allocation3 + $0x78] sm:$0x3]
        %v2279 = vld [vmem:[#allocation3 + $0x80] sm:$0xff]
        %v2280 = vld [vmem:[#allocation3 + $0x88] sm:$0x3]
        %v2281 = vld [vmem:[#allocation3 + $0x90] sm:$0xff]
        %v2282 = vld [vmem:[#allocation3 + $0x98] sm:$0x3]
        %v2283 = vmax.f32 %v2263, 0.0
        %v2284 = vmax.f32 %v2264, 0.0
        %v2285 = vmax.f32 %v2265, 0.0
        %v2286 = vmax.f32 %v2266, 0.0
        %v2287 = vmax.f32 %v2267, 0.0
        %v2288 = vmax.f32 %v2268, 0.0
        %v2289 = vmax.f32 %v2269, 0.0
        %v2290 = vmax.f32 %v2270, 0.0
        %v2291 = vmax.f32 %v2271, 0.0
        %v2292 = vmax.f32 %v2272, 0.0
        %v2293 = vmax.f32 %v2273, 0.0
        %v2294 = vmax.f32 %v2274, 0.0
        %v2295 = vmax.f32 %v2275, 0.0
        %v2296 = vmax.f32 %v2276, 0.0
        %v2297 = vmax.f32 %v2277, 0.0
        %v2298 = vmax.f32 %v2278, 0.0
        %v2299 = vmax.f32 %v2279, 0.0
        %v2300 = vmax.f32 %v2280, 0.0
        %v2301 = vmax.f32 %v2281, 0.0
        %v2302 = vmax.f32 %v2282, 0.0
        %v2319 = vrot.slane %v2283, 1
        %v2320 = vrot.slane %v2284, 1
        %v2321 = vsel %vm579, %v2319, %v2320
        %v2322 = vrot.slane %v2285, 1
        %v2323 = vrot.slane %v2286, 1
        %v2324 = vsel %vm579, %v2322, %v2323
        %v2325 = vrot.slane %v2287, 1
        %v2326 = vrot.slane %v2288, 1
        %v2327 = vsel %vm579, %v2325, %v2326
        %v2328 = vrot.slane %v2289, 1
        %v2329 = vrot.slane %v2290, 1
        %v2330 = vsel %vm579, %v2328, %v2329
        %v2331 = vrot.slane %v2291, 1
        %v2332 = vrot.slane %v2292, 1
        %v2333 = vsel %vm579, %v2331, %v2332
        %v2334 = vrot.slane %v2293, 1
        %v2335 = vrot.slane %v2294, 1
        %v2336 = vsel %vm579, %v2334, %v2335
        %v2337 = vrot.slane %v2295, 1
        %v2338 = vrot.slane %v2296, 1
        %v2339 = vsel %vm579, %v2337, %v2338
        %v2340 = vrot.slane %v2297, 1
        %v2341 = vrot.slane %v2298, 1
        %v2342 = vsel %vm579, %v2340, %v2341
        %v2343 = vrot.slane %v2283, 2
        %v2344 = vrot.slane %v2284, 2
        %v2345 = vsel %vm604, %v2343, %v2344
        %v2346 = vrot.slane %v2285, 2
        %v2347 = vrot.slane %v2286, 2
        %v2348 = vsel %vm604, %v2346, %v2347
        %v2349 = vrot.slane %v2287, 2
        %v2350 = vrot.slane %v2288, 2
        %v2351 = vsel %vm604, %v2349, %v2350
        %v2352 = vrot.slane %v2289, 2
        %v2353 = vrot.slane %v2290, 2
        %v2354 = vsel %vm604, %v2352, %v2353
        %v2355 = vrot.slane %v2291, 2
        %v2356 = vrot.slane %v2292, 2
        %v2357 = vsel %vm604, %v2355, %v2356
        %v2358 = vrot.slane %v2293, 2
        %v2359 = vrot.slane %v2294, 2
        %v2360 = vsel %vm604, %v2358, %v2359
        %v2361 = vrot.slane %v2295, 2
        %v2362 = vrot.slane %v2296, 2
        %v2363 = vsel %vm604, %v2361, %v2362
        %v2364 = vrot.slane %v2297, 2
        %v2365 = vrot.slane %v2298, 2
        %v2366 = vsel %vm604, %v2364, %v2365
        %v2369 = vrot.slane %v2299, 1
        %v2370 = vrot.slane %v2300, 1
        %v2371 = vsel %vm579, %v2369, %v2370
        %v2380 = vrot.slane %v2299, 2
        %v2381 = vrot.slane %v2300, 2
        %v2382 = vsel %vm604, %v2380, %v2381
        %v2385 = vrot.slane %v2301, 1
        %v2386 = vrot.slane %v2302, 1
        %v2387 = vsel %vm579, %v2385, %v2386
        %v2388 = vrot.slane %v2301, 2
        %v2389 = vrot.slane %v2302, 2
        %v2390 = vsel %vm604, %v2388, %v2389
        %2391 = vrot.lane.b32.xlu0 %v2321, 32
        %v2392 = vpop.permute.xlu0 %2391
        %2393 = vrot.lane.b32.xlu0 %v2324, 32
        %v2394 = vpop.permute.xlu0 %2393
        %2395 = vrot.lane.b32.xlu0 %v2327, 32
        %v2396 = vpop.permute.xlu0 %2395
        %2397 = vrot.lane.b32.xlu0 %v2330, 32
        %v2398 = vpop.permute.xlu0 %2397
        %2399 = vrot.lane.b32.xlu0 %v2333, 32
        %v2400 = vpop.permute.xlu0 %2399
        %2401 = vrot.lane.b32.xlu0 %v2336, 32
        %v2402 = vpop.permute.xlu0 %2401
        %2403 = vrot.lane.b32.xlu0 %v2339, 32
        %v2404 = vpop.permute.xlu0 %2403
        %2405 = vrot.lane.b32.xlu0 %v2342, 32
        %v2406 = vpop.permute.xlu0 %2405
        %2415 = vrot.lane.b32.xlu0 %v2345, 64
        %v2416 = vpop.permute.xlu0 %2415
        %2417 = vrot.lane.b32.xlu0 %v2348, 64
        %v2418 = vpop.permute.xlu0 %2417
        %2419 = vrot.lane.b32.xlu0 %v2351, 64
        %v2420 = vpop.permute.xlu0 %2419
        %2421 = vrot.lane.b32.xlu0 %v2354, 64
        %v2422 = vpop.permute.xlu0 %2421
        %2423 = vrot.lane.b32.xlu0 %v2357, 64
        %v2424 = vpop.permute.xlu0 %2423
        %2425 = vrot.lane.b32.xlu0 %v2360, 64
        %v2426 = vpop.permute.xlu0 %2425
        %2427 = vrot.lane.b32.xlu0 %v2363, 64
        %v2428 = vpop.permute.xlu0 %2427
        %2429 = vrot.lane.b32.xlu0 %v2366, 64
        %v2430 = vpop.permute.xlu0 %2429
        %2439 = vrot.lane.b32.xlu0 %v2285, 96
        %v2440 = vpop.permute.xlu0 %2439
        %2441 = vrot.lane.b32.xlu0 %v2287, 96
        %v2442 = vpop.permute.xlu0 %2441
        %2443 = vrot.lane.b32.xlu0 %v2289, 96
        %v2444 = vpop.permute.xlu0 %2443
        %2445 = vrot.lane.b32.xlu0 %v2291, 96
        %v2446 = vpop.permute.xlu0 %2445
        %2447 = vrot.lane.b32.xlu0 %v2293, 96
        %v2448 = vpop.permute.xlu0 %2447
        %2449 = vrot.lane.b32.xlu0 %v2295, 96
        %v2450 = vpop.permute.xlu0 %2449
        %2451 = vrot.lane.b32.xlu0 %v2297, 96
        %v2452 = vpop.permute.xlu0 %2451
        %2453 = vrot.lane.b32.xlu0 %v2299, 96
        %v2454 = vpop.permute.xlu0 %2453
        %2463 = vrot.lane.b32.xlu0 %v2348, 32
        %v2464 = vpop.permute.xlu0 %2463
        %2465 = vrot.lane.b32.xlu0 %v2351, 32
        %v2466 = vpop.permute.xlu0 %2465
        %2467 = vrot.lane.b32.xlu0 %v2354, 32
        %v2468 = vpop.permute.xlu0 %2467
        %2469 = vrot.lane.b32.xlu0 %v2357, 32
        %v2470 = vpop.permute.xlu0 %2469
        %2471 = vrot.lane.b32.xlu0 %v2360, 32
        %v2472 = vpop.permute.xlu0 %2471
        %2473 = vrot.lane.b32.xlu0 %v2363, 32
        %v2474 = vpop.permute.xlu0 %2473
        %2475 = vrot.lane.b32.xlu0 %v2366, 32
        %v2476 = vpop.permute.xlu0 %2475
        %2477 = vrot.lane.b32.xlu0 %v2382, 32
        %v2478 = vpop.permute.xlu0 %2477
        %2487 = vrot.lane.b32.xlu0 %v2287, 64
        %v2488 = vpop.permute.xlu0 %2487
        %2489 = vrot.lane.b32.xlu0 %v2289, 64
        %v2490 = vpop.permute.xlu0 %2489
        %2491 = vrot.lane.b32.xlu0 %v2291, 64
        %v2492 = vpop.permute.xlu0 %2491
        %2493 = vrot.lane.b32.xlu0 %v2293, 64
        %v2494 = vpop.permute.xlu0 %2493
        %2495 = vrot.lane.b32.xlu0 %v2295, 64
        %v2496 = vpop.permute.xlu0 %2495
        %2497 = vrot.lane.b32.xlu0 %v2297, 64
        %v2498 = vpop.permute.xlu0 %2497
        %2499 = vrot.lane.b32.xlu0 %v2299, 64
        %v2500 = vpop.permute.xlu0 %2499
        %2501 = vrot.lane.b32.xlu0 %v2301, 64
        %v2502 = vpop.permute.xlu0 %2501
        %2511 = vrot.lane.b32.xlu0 %v2327, 96
        %v2512 = vpop.permute.xlu0 %2511
        %2513 = vrot.lane.b32.xlu0 %v2330, 96
        %v2514 = vpop.permute.xlu0 %2513
        %2515 = vrot.lane.b32.xlu0 %v2333, 96
        %v2516 = vpop.permute.xlu0 %2515
        %2517 = vrot.lane.b32.xlu0 %v2336, 96
        %v2518 = vpop.permute.xlu0 %2517
        %2519 = vrot.lane.b32.xlu0 %v2339, 96
        %v2520 = vpop.permute.xlu0 %2519
        %2521 = vrot.lane.b32.xlu0 %v2342, 96
        %v2522 = vpop.permute.xlu0 %2521
        %2523 = vrot.lane.b32.xlu0 %v2371, 96
        %v2524 = vpop.permute.xlu0 %2523
        %2525 = vrot.lane.b32.xlu0 %v2387, 96
        %v2526 = vpop.permute.xlu0 %2525
        %v2535 = vsel %vm408, %v2283, %v2392
        %v2536 = vsel %vm408, %v2285, %v2394
        %v2537 = vsel %vm408, %v2287, %v2396
        %v2538 = vsel %vm408, %v2289, %v2398
        %v2539 = vsel %vm408, %v2291, %v2400
        %v2540 = vsel %vm408, %v2293, %v2402
        %v2541 = vsel %vm408, %v2295, %v2404
        %v2542 = vsel %vm408, %v2297, %v2406
        %v2543 = vsel %vm1273, %v2535, %v2416
        %v2544 = vsel %vm1273, %v2536, %v2418
        %v2545 = vsel %vm1273, %v2537, %v2420
        %v2546 = vsel %vm1273, %v2538, %v2422
        %v2547 = vsel %vm1273, %v2539, %v2424
        %v2548 = vsel %vm1273, %v2540, %v2426
        %v2549 = vsel %vm1273, %v2541, %v2428
        %v2550 = vsel %vm1273, %v2542, %v2430
        %v2551 = vsel %vm1282, %v2543, %v2440
        %v2552 = vsel %vm1282, %v2544, %v2442
        %v2553 = vsel %vm1282, %v2545, %v2444
        %v2554 = vsel %vm1282, %v2546, %v2446
        %v2555 = vsel %vm1282, %v2547, %v2448
        %v2556 = vsel %vm1282, %v2548, %v2450
        %v2557 = vsel %vm1282, %v2549, %v2452
        %v2558 = vsel %vm1282, %v2550, %v2454
        %v2559 = vsel %vm408, %v2324, %v2464
        %v2560 = vsel %vm408, %v2327, %v2466
        %v2561 = vsel %vm408, %v2330, %v2468
        %v2562 = vsel %vm408, %v2333, %v2470
        %v2563 = vsel %vm408, %v2336, %v2472
        %v2564 = vsel %vm408, %v2339, %v2474
        %v2565 = vsel %vm408, %v2342, %v2476
        %v2566 = vsel %vm408, %v2371, %v2478
        %v2567 = vsel %vm1273, %v2559, %v2488
        %v2568 = vsel %vm1273, %v2560, %v2490
        %v2569 = vsel %vm1273, %v2561, %v2492
        %v2570 = vsel %vm1273, %v2562, %v2494
        %v2571 = vsel %vm1273, %v2563, %v2496
        %v2572 = vsel %vm1273, %v2564, %v2498
        %v2573 = vsel %vm1273, %v2565, %v2500
        %v2574 = vsel %vm1273, %v2566, %v2502
        %v2575 = vsel %vm1282, %v2567, %v2512
        %v2576 = vsel %vm1282, %v2568, %v2514
        %v2577 = vsel %vm1282, %v2569, %v2516
        %v2578 = vsel %vm1282, %v2570, %v2518
        %v2579 = vsel %vm1282, %v2571, %v2520
        %v2580 = vsel %vm1282, %v2572, %v2522
        %v2581 = vsel %vm1282, %v2573, %v2524
        %v2582 = vsel %vm1282, %v2574, %v2526
        %v2583 = vld [vmem:[#allocation7] sm:$0xff]
        %v2584 = vld [vmem:[#allocation7 + $0x8] sm:$0xff]
        %v2585 = vld [vmem:[#allocation7 + $0x10] sm:$0xff]
        %v2586 = vld [vmem:[#allocation7 + $0x18] sm:$0xff]
        %v2587 = vld [vmem:[#allocation7 + $0x20] sm:$0xff]
        %v2588 = vld [vmem:[#allocation7 + $0x28] sm:$0xff]
        %v2589 = vld [vmem:[#allocation7 + $0x30] sm:$0xff]
        %v2590 = vld [vmem:[#allocation7 + $0x38] sm:$0xff]
        %v2591 = vld [vmem:[#allocation7 + $0x40] sm:$0xff]
        %v2592 = vld [vmem:[#allocation7 + $0x48] sm:$0xff]
        %v2593 = vld [vmem:[#allocation7 + $0x50] sm:$0xff]
        %v2594 = vld [vmem:[#allocation7 + $0x58] sm:$0xff]
        %v2595 = vld [vmem:[#allocation7 + $0x60] sm:$0xff]
        %v2596 = vld [vmem:[#allocation7 + $0x68] sm:$0xff]
        %v2597 = vld [vmem:[#allocation7 + $0x70] sm:$0xff]
        %v2598 = vld [vmem:[#allocation7 + $0x78] sm:$0xff]
        %v2599 = vld [vmem:[#allocation7 + $0x80] sm:$0xff]
        %v2600 = vld [vmem:[#allocation7 + $0x88] sm:$0xff]
        %v2601 = vld [vmem:[#allocation7 + $0x90] sm:$0xff]
        %v2602 = vld [vmem:[#allocation7 + $0x98] sm:$0xff]
        %v2603 = vld [vmem:[#allocation7 + $0xa0] sm:$0xff]
        %v2604 = vld [vmem:[#allocation7 + $0xa8] sm:$0xff]
        %v2605 = vld [vmem:[#allocation7 + $0xb0] sm:$0xff]
        %v2606 = vld [vmem:[#allocation7 + $0xb8] sm:$0xff]
        %v2607 = vld [vmem:[#allocation7 + $0xc0] sm:$0xff]
        %v2608 = vld [vmem:[#allocation7 + $0xc8] sm:$0xff]
        %v2609 = vld [vmem:[#allocation7 + $0xd0] sm:$0xff]
        %v2610 = vld [vmem:[#allocation7 + $0xd8] sm:$0xff]
        %v2611 = vld [vmem:[#allocation7 + $0xe0] sm:$0xff]
        %v2612 = vld [vmem:[#allocation7 + $0xe8] sm:$0xff]
        %v2613 = vld [vmem:[#allocation7 + $0xf0] sm:$0xff]
        %v2614 = vld [vmem:[#allocation7 + $0xf8] sm:$0xff]
        %v2615 = vld [vmem:[#allocation7 + $0x100] sm:$0xff]
        %v2616 = vld [vmem:[#allocation7 + $0x108] sm:$0xff]
        %v2617 = vld [vmem:[#allocation7 + $0x110] sm:$0xff]
        %v2618 = vld [vmem:[#allocation7 + $0x118] sm:$0xff]
        %v2619 = vld [vmem:[%s6] sm:$0x1]
        %v2621 = vperm.slane %v2619, 0
        %v2623 = vsel %vm408, %v2351, 0
        %v2625 = vsel %vm408, %v2354, 0
        %v2627 = vsel %vm408, %v2357, 0
        %v2629 = vsel %vm408, %v2360, 0
        %v2631 = vsel %vm408, %v2363, 0
        %v2633 = vsel %vm408, %v2366, 0
        %v2635 = vsel %vm408, %v2382, 0
        %v2637 = vsel %vm408, %v2390, 0
        %2639 = vmatpush.msra.mxu0 %v2598
        %2640 = vmatpush.msra.mxu0 %v2597
        %2641 = vmatpush.msra.mxu0 %v2596
        %2642 = vmatpush.msra.mxu0 %v2595
        %2643 = vmatpush.msra.mxu0 %v2594
        %2644 = vmatpush.msra.mxu0 %v2593
        %2645 = vmatpush.msra.mxu0 %v2592
        %2646 = vmatpush.msra.mxu0 %v2591
        %2647 = vmatpush.msra.mxu0 %v2590
        %2648 = vmatpush.msra.mxu0 %v2589
        %2649 = vmatpush.msra.mxu0 %v2588
        %2650 = vmatpush.msra.mxu0 %v2587
        %2651 = vmatpush.msra.mxu0 %v2586
        %2652 = vmatpush.msra.mxu0 %v2585
        %2653 = vmatpush.msra.mxu0 %v2584
        %2654 = vmatpush.msra.mxu0 %v2583
        %2655 = vmatmul.f32.gmra.mxu0 %v2551
        %v2656 = vpop.f32.mrf.mxu0
        %v2657 = vadd.f32 %v2621, %v2656
        %2658 = vmatmul.f32.gmra.mxu0 %v2552
        %v2659 = vpop.f32.mrf.mxu0
        %v2660 = vadd.f32 %v2621, %v2659
        %2661 = vmatmul.f32.gmra.mxu0 %v2553
        %v2662 = vpop.f32.mrf.mxu0
        %v2663 = vadd.f32 %v2621, %v2662
        %2664 = vmatmul.f32.gmra.mxu0 %v2554
        %v2665 = vpop.f32.mrf.mxu0
        %v2666 = vadd.f32 %v2621, %v2665
        %2667 = vmatmul.f32.gmra.mxu0 %v2555
        %v2668 = vpop.f32.mrf.mxu0
        %v2669 = vadd.f32 %v2621, %v2668
        %2670 = vmatmul.f32.gmra.mxu0 %v2556
        %v2671 = vpop.f32.mrf.mxu0
        %v2672 = vadd.f32 %v2621, %v2671
        %2673 = vmatmul.f32.gmra.mxu0 %v2557
        %v2674 = vpop.f32.mrf.mxu0
        %v2675 = vadd.f32 %v2621, %v2674
        %2676 = vmatmul.f32.gmra.mxu0 %v2558
        %v2677 = vpop.f32.mrf.mxu0
        %v2678 = vadd.f32 %v2621, %v2677
        %2679 = vdwg.mxu0
        %2680 = vmatpush.msra.mxu0 %v2614
        %2681 = vmatpush.msra.mxu0 %v2613
        %2682 = vmatpush.msra.mxu0 %v2612
        %2683 = vmatpush.msra.mxu0 %v2611
        %2684 = vmatpush.msra.mxu0 %v2610
        %2685 = vmatpush.msra.mxu0 %v2609
        %2686 = vmatpush.msra.mxu0 %v2608
        %2687 = vmatpush.msra.mxu0 %v2607
        %2688 = vmatpush.msra.mxu0 %v2606
        %2689 = vmatpush.msra.mxu0 %v2605
        %2690 = vmatpush.msra.mxu0 %v2604
        %2691 = vmatpush.msra.mxu0 %v2603
        %2692 = vmatpush.msra.mxu0 %v2602
        %2693 = vmatpush.msra.mxu0 %v2601
        %2694 = vmatpush.msra.mxu0 %v2600
        %2695 = vmatpush.msra.mxu0 %v2599
        %2696 = vmatmul.f32.gmra.mxu0 %v2575
        %v2697 = vpop.f32.mrf.mxu0
        %v2698 = vadd.f32 %v2657, %v2697
        %2699 = vmatmul.f32.gmra.mxu0 %v2576
        %v2700 = vpop.f32.mrf.mxu0
        %v2701 = vadd.f32 %v2660, %v2700
        %2702 = vmatmul.f32.gmra.mxu0 %v2577
        %v2703 = vpop.f32.mrf.mxu0
        %v2704 = vadd.f32 %v2663, %v2703
        %2705 = vmatmul.f32.gmra.mxu0 %v2578
        %v2706 = vpop.f32.mrf.mxu0
        %v2707 = vadd.f32 %v2666, %v2706
        %2708 = vmatmul.f32.gmra.mxu0 %v2579
        %v2709 = vpop.f32.mrf.mxu0
        %v2710 = vadd.f32 %v2669, %v2709
        %2711 = vmatmul.f32.gmra.mxu0 %v2580
        %v2712 = vpop.f32.mrf.mxu0
        %v2713 = vadd.f32 %v2672, %v2712
        %2714 = vmatmul.f32.gmra.mxu0 %v2581
        %v2715 = vpop.f32.mrf.mxu0
        %v2716 = vadd.f32 %v2675, %v2715
        %2717 = vmatmul.f32.gmra.mxu0 %v2582
        %v2718 = vpop.f32.mrf.mxu0
        %v2719 = vadd.f32 %v2678, %v2718
        %2720 = vdwg.mxu0
        %2721 = vmatpush.msra.mxu0 0.0
        %2722 = vmatpush.msra.mxu0 0.0
        %2723 = vmatpush.msra.mxu0 0.0
        %2724 = vmatpush.msra.mxu0 0.0
        %2725 = vmatpush.msra.mxu0 0.0
        %2726 = vmatpush.msra.mxu0 0.0
        %2727 = vmatpush.msra.mxu0 0.0
        %2728 = vmatpush.msra.mxu0 0.0
        %2729 = vmatpush.msra.mxu0 0.0
        %2730 = vmatpush.msra.mxu0 0.0
        %2731 = vmatpush.msra.mxu0 0.0
        %2732 = vmatpush.msra.mxu0 0.0
        %2733 = vmatpush.msra.mxu0 %v2618
        %2734 = vmatpush.msra.mxu0 %v2617
        %2735 = vmatpush.msra.mxu0 %v2616
        %2736 = vmatpush.msra.mxu0 %v2615
        %2737 = vmatmul.f32.gmra.mxu0 %v2623
        %v2738 = vpop.f32.mrf.mxu0
        %v2739 = vadd.f32 %v2698, %v2738
        %2740 = vmatmul.f32.gmra.mxu0 %v2625
        %v2741 = vpop.f32.mrf.mxu0
        %v2742 = vadd.f32 %v2701, %v2741
        %2743 = vmatmul.f32.gmra.mxu0 %v2627
        %v2744 = vpop.f32.mrf.mxu0
        %v2745 = vadd.f32 %v2704, %v2744
        %2746 = vmatmul.f32.gmra.mxu0 %v2629
        %v2747 = vpop.f32.mrf.mxu0
        %v2748 = vadd.f32 %v2707, %v2747
        %2749 = vmatmul.f32.gmra.mxu0 %v2631
        %v2750 = vpop.f32.mrf.mxu0
        %v2751 = vadd.f32 %v2710, %v2750
        %2752 = vmatmul.f32.gmra.mxu0 %v2633
        %v2753 = vpop.f32.mrf.mxu0
        %v2754 = vadd.f32 %v2713, %v2753
        %2755 = vmatmul.f32.gmra.mxu0 %v2635
        %v2756 = vpop.f32.mrf.mxu0
        %v2757 = vadd.f32 %v2716, %v2756
        %2758 = vmatmul.f32.gmra.mxu0 %v2637
        %v2759 = vpop.f32.mrf.mxu0
        %v2760 = vadd.f32 %v2719, %v2759
        %2761 = vdwg.mxu0
        %v2762 = vmax.f32 %v2739, 0.0
        %v2763 = vmax.f32 %v2742, 0.0
        %v2764 = vmax.f32 %v2745, 0.0
        %v2765 = vmax.f32 %v2748, 0.0
        %v2766 = vmax.f32 %v2751, 0.0
        %v2767 = vmax.f32 %v2754, 0.0
        %v2768 = vmax.f32 %v2757, 0.0
        %v2769 = vmax.f32 %v2760, 0.0
        %2770 = vst.msk [vmem:[%s440 + $0x1] sm:$0xff] %vm433, %v2762
        %2771 = vst.msk [vmem:[%s440 + $0x11] sm:$0xff] %vm433, %v2763
        %2772 = vst.msk [vmem:[%s440 + $0x21] sm:$0xff] %vm433, %v2764
        %2773 = vst.msk [vmem:[%s440 + $0x31] sm:$0xff] %vm433, %v2765
        %2774 = vst.msk [vmem:[%s440 + $0x41] sm:$0xff] %vm433, %v2766
        %2775 = vst.msk [vmem:[%s440 + $0x51] sm:$0xff] %vm433, %v2767
        %2776 = vst.msk [vmem:[%s440 + $0x61] sm:$0xff] %vm433, %v2768
        %2777 = vst.msk [vmem:[%s440 + $0x71] sm:$0xff] %vm433, %v2769
        %2786 = vrot.lane.b32.xlu0 %v2762, 112
        %v2787 = vpop.permute.xlu0 %2786
        %2788 = vrot.lane.b32.xlu0 %v2763, 112
        %v2789 = vpop.permute.xlu0 %2788
        %2790 = vrot.lane.b32.xlu0 %v2764, 112
        %v2791 = vpop.permute.xlu0 %2790
        %2792 = vrot.lane.b32.xlu0 %v2765, 112
        %v2793 = vpop.permute.xlu0 %2792
        %2794 = vrot.lane.b32.xlu0 %v2766, 112
        %v2795 = vpop.permute.xlu0 %2794
        %2796 = vrot.lane.b32.xlu0 %v2767, 112
        %v2797 = vpop.permute.xlu0 %2796
        %2798 = vrot.lane.b32.xlu0 %v2768, 112
        %v2799 = vpop.permute.xlu0 %2798
        %2800 = vrot.lane.b32.xlu0 %v2769, 112
        %v2801 = vpop.permute.xlu0 %2800
        %2810 = vst.msk [vmem:[%s464 + $0x1] sm:$0xff] %vm433, %v2787
        %2811 = vst.msk [vmem:[%s464 + $0x11] sm:$0xff] %vm433, %v2789
        %2812 = vst.msk [vmem:[%s464 + $0x21] sm:$0xff] %vm433, %v2791
        %2813 = vst.msk [vmem:[%s464 + $0x31] sm:$0xff] %vm433, %v2793
        %2814 = vst.msk [vmem:[%s464 + $0x41] sm:$0xff] %vm433, %v2795
        %2815 = vst.msk [vmem:[%s464 + $0x51] sm:$0xff] %vm433, %v2797
        %2816 = vst.msk [vmem:[%s464 + $0x61] sm:$0xff] %vm433, %v2799
        %2817 = vst.msk [vmem:[%s464 + $0x71] sm:$0xff] %vm433, %v2801
        %2818 = vrot.lane.b32.xlu0 %v2762, 96
        %v2819 = vpop.permute.xlu0 %2818
        %2820 = vrot.lane.b32.xlu0 %v2763, 96
        %v2821 = vpop.permute.xlu0 %2820
        %2822 = vrot.lane.b32.xlu0 %v2764, 96
        %v2823 = vpop.permute.xlu0 %2822
        %2824 = vrot.lane.b32.xlu0 %v2765, 96
        %v2825 = vpop.permute.xlu0 %2824
        %2826 = vrot.lane.b32.xlu0 %v2766, 96
        %v2827 = vpop.permute.xlu0 %2826
        %2828 = vrot.lane.b32.xlu0 %v2767, 96
        %v2829 = vpop.permute.xlu0 %2828
        %2830 = vrot.lane.b32.xlu0 %v2768, 96
        %v2831 = vpop.permute.xlu0 %2830
        %2832 = vrot.lane.b32.xlu0 %v2769, 96
        %v2833 = vpop.permute.xlu0 %2832
        %2842 = vst.msk [vmem:[%s487 + $0x1] sm:$0xff] %vm433, %v2819
        %2843 = vst.msk [vmem:[%s487 + $0x11] sm:$0xff] %vm433, %v2821
        %2844 = vst.msk [vmem:[%s487 + $0x21] sm:$0xff] %vm433, %v2823
        %2845 = vst.msk [vmem:[%s487 + $0x31] sm:$0xff] %vm433, %v2825
        %2846 = vst.msk [vmem:[%s487 + $0x41] sm:$0xff] %vm433, %v2827
        %2847 = vst.msk [vmem:[%s487 + $0x51] sm:$0xff] %vm433, %v2829
        %2848 = vst.msk [vmem:[%s487 + $0x61] sm:$0xff] %vm433, %v2831
        %2849 = vst.msk [vmem:[%s487 + $0x71] sm:$0xff] %vm433, %v2833
        %2850 = vrot.lane.b32.xlu0 %v2762, 80
        %v2851 = vpop.permute.xlu0 %2850
        %2852 = vrot.lane.b32.xlu0 %v2763, 80
        %v2853 = vpop.permute.xlu0 %2852
        %2854 = vrot.lane.b32.xlu0 %v2764, 80
        %v2855 = vpop.permute.xlu0 %2854
        %2856 = vrot.lane.b32.xlu0 %v2765, 80
        %v2857 = vpop.permute.xlu0 %2856
        %2858 = vrot.lane.b32.xlu0 %v2766, 80
        %v2859 = vpop.permute.xlu0 %2858
        %2860 = vrot.lane.b32.xlu0 %v2767, 80
        %v2861 = vpop.permute.xlu0 %2860
        %2862 = vrot.lane.b32.xlu0 %v2768, 80
        %v2863 = vpop.permute.xlu0 %2862
        %2864 = vrot.lane.b32.xlu0 %v2769, 80
        %v2865 = vpop.permute.xlu0 %2864
        %2874 = vst.msk [vmem:[%s510 + $0x1] sm:$0xff] %vm433, %v2851
        %2875 = vst.msk [vmem:[%s510 + $0x11] sm:$0xff] %vm433, %v2853
        %2876 = vst.msk [vmem:[%s510 + $0x21] sm:$0xff] %vm433, %v2855
        %2877 = vst.msk [vmem:[%s510 + $0x31] sm:$0xff] %vm433, %v2857
        %2878 = vst.msk [vmem:[%s510 + $0x41] sm:$0xff] %vm433, %v2859
        %2879 = vst.msk [vmem:[%s510 + $0x51] sm:$0xff] %vm433, %v2861
        %2880 = vst.msk [vmem:[%s510 + $0x61] sm:$0xff] %vm433, %v2863
        %2881 = vst.msk [vmem:[%s510 + $0x71] sm:$0xff] %vm433, %v2865
        %v2882 = vld [vmem:[#allocation4] sm:$0xff]
        %v2883 = vld [vmem:[#allocation4 + $0x8] sm:$0x3]
        %v2884 = vld [vmem:[#allocation4 + $0x10] sm:$0xff]
        %v2885 = vld [vmem:[#allocation4 + $0x18] sm:$0x3]
        %v2886 = vld [vmem:[#allocation4 + $0x20] sm:$0xff]
        %v2887 = vld [vmem:[#allocation4 + $0x28] sm:$0x3]
        %v2888 = vld [vmem:[#allocation4 + $0x30] sm:$0xff]
        %v2889 = vld [vmem:[#allocation4 + $0x38] sm:$0x3]
        %v2890 = vld [vmem:[#allocation4 + $0x40] sm:$0xff]
        %v2891 = vld [vmem:[#allocation4 + $0x48] sm:$0x3]
        %v2892 = vld [vmem:[#allocation4 + $0x50] sm:$0xff]
        %v2893 = vld [vmem:[#allocation4 + $0x58] sm:$0x3]
        %v2894 = vld [vmem:[#allocation4 + $0x60] sm:$0xff]
        %v2895 = vld [vmem:[#allocation4 + $0x68] sm:$0x3]
        %v2896 = vld [vmem:[#allocation4 + $0x70] sm:$0xff]
        %v2897 = vld [vmem:[#allocation4 + $0x78] sm:$0x3]
        %v2898 = vld [vmem:[#allocation4 + $0x80] sm:$0xff]
        %v2899 = vld [vmem:[#allocation4 + $0x88] sm:$0x3]
        %v2900 = vld [vmem:[#allocation4 + $0x90] sm:$0xff]
        %v2901 = vld [vmem:[#allocation4 + $0x98] sm:$0x3]
        %v2918 = vrot.slane %v2882, 1
        %v2919 = vrot.slane %v2883, 1
        %v2920 = vsel %vm579, %v2918, %v2919
        %v2921 = vrot.slane %v2884, 1
        %v2922 = vrot.slane %v2885, 1
        %v2923 = vsel %vm579, %v2921, %v2922
        %v2924 = vrot.slane %v2886, 1
        %v2925 = vrot.slane %v2887, 1
        %v2926 = vsel %vm579, %v2924, %v2925
        %v2927 = vrot.slane %v2888, 1
        %v2928 = vrot.slane %v2889, 1
        %v2929 = vsel %vm579, %v2927, %v2928
        %v2930 = vrot.slane %v2890, 1
        %v2931 = vrot.slane %v2891, 1
        %v2932 = vsel %vm579, %v2930, %v2931
        %v2933 = vrot.slane %v2892, 1
        %v2934 = vrot.slane %v2893, 1
        %v2935 = vsel %vm579, %v2933, %v2934
        %v2936 = vrot.slane %v2894, 1
        %v2937 = vrot.slane %v2895, 1
        %v2938 = vsel %vm579, %v2936, %v2937
        %v2939 = vrot.slane %v2896, 1
        %v2940 = vrot.slane %v2897, 1
        %v2941 = vsel %vm579, %v2939, %v2940
        %v2942 = vrot.slane %v2882, 2
        %v2943 = vrot.slane %v2883, 2
        %v2944 = vsel %vm604, %v2942, %v2943
        %v2945 = vrot.slane %v2884, 2
        %v2946 = vrot.slane %v2885, 2
        %v2947 = vsel %vm604, %v2945, %v2946
        %v2948 = vrot.slane %v2886, 2
        %v2949 = vrot.slane %v2887, 2
        %v2950 = vsel %vm604, %v2948, %v2949
        %v2951 = vrot.slane %v2888, 2
        %v2952 = vrot.slane %v2889, 2
        %v2953 = vsel %vm604, %v2951, %v2952
        %v2954 = vrot.slane %v2890, 2
        %v2955 = vrot.slane %v2891, 2
        %v2956 = vsel %vm604, %v2954, %v2955
        %v2957 = vrot.slane %v2892, 2
        %v2958 = vrot.slane %v2893, 2
        %v2959 = vsel %vm604, %v2957, %v2958
        %v2960 = vrot.slane %v2894, 2
        %v2961 = vrot.slane %v2895, 2
        %v2962 = vsel %vm604, %v2960, %v2961
        %v2963 = vrot.slane %v2896, 2
        %v2964 = vrot.slane %v2897, 2
        %v2965 = vsel %vm604, %v2963, %v2964
        %v2968 = vrot.slane %v2898, 1
        %v2969 = vrot.slane %v2899, 1
        %v2970 = vsel %vm579, %v2968, %v2969
        %v2971 = vrot.slane %v2898, 2
        %v2972 = vrot.slane %v2899, 2
        %v2973 = vsel %vm604, %v2971, %v2972
        %v2976 = vrot.slane %v2900, 1
        %v2977 = vrot.slane %v2901, 1
        %v2978 = vsel %vm579, %v2976, %v2977
        %v2979 = vrot.slane %v2900, 2
        %v2980 = vrot.slane %v2901, 2
        %v2981 = vsel %vm604, %v2979, %v2980
        %2982 = vrot.lane.b32.xlu0 %v2920, 16
        %v2983 = vpop.permute.xlu0 %2982
        %2984 = vrot.lane.b32.xlu0 %v2923, 16
        %v2985 = vpop.permute.xlu0 %2984
        %2986 = vrot.lane.b32.xlu0 %v2926, 16
        %v2987 = vpop.permute.xlu0 %2986
        %2988 = vrot.lane.b32.xlu0 %v2929, 16
        %v2989 = vpop.permute.xlu0 %2988
        %2990 = vrot.lane.b32.xlu0 %v2932, 16
        %v2991 = vpop.permute.xlu0 %2990
        %2992 = vrot.lane.b32.xlu0 %v2935, 16
        %v2993 = vpop.permute.xlu0 %2992
        %2994 = vrot.lane.b32.xlu0 %v2938, 16
        %v2995 = vpop.permute.xlu0 %2994
        %2996 = vrot.lane.b32.xlu0 %v2941, 16
        %v2997 = vpop.permute.xlu0 %2996
        %3006 = vrot.lane.b32.xlu0 %v2944, 32
        %v3007 = vpop.permute.xlu0 %3006
        %3008 = vrot.lane.b32.xlu0 %v2947, 32
        %v3009 = vpop.permute.xlu0 %3008
        %3010 = vrot.lane.b32.xlu0 %v2950, 32
        %v3011 = vpop.permute.xlu0 %3010
        %3012 = vrot.lane.b32.xlu0 %v2953, 32
        %v3013 = vpop.permute.xlu0 %3012
        %3014 = vrot.lane.b32.xlu0 %v2956, 32
        %v3015 = vpop.permute.xlu0 %3014
        %3016 = vrot.lane.b32.xlu0 %v2959, 32
        %v3017 = vpop.permute.xlu0 %3016
        %3018 = vrot.lane.b32.xlu0 %v2962, 32
        %v3019 = vpop.permute.xlu0 %3018
        %3020 = vrot.lane.b32.xlu0 %v2965, 32
        %v3021 = vpop.permute.xlu0 %3020
        %3030 = vrot.lane.b32.xlu0 %v2884, 48
        %v3031 = vpop.permute.xlu0 %3030
        %3032 = vrot.lane.b32.xlu0 %v2886, 48
        %v3033 = vpop.permute.xlu0 %3032
        %3034 = vrot.lane.b32.xlu0 %v2888, 48
        %v3035 = vpop.permute.xlu0 %3034
        %3036 = vrot.lane.b32.xlu0 %v2890, 48
        %v3037 = vpop.permute.xlu0 %3036
        %3038 = vrot.lane.b32.xlu0 %v2892, 48
        %v3039 = vpop.permute.xlu0 %3038
        %3040 = vrot.lane.b32.xlu0 %v2894, 48
        %v3041 = vpop.permute.xlu0 %3040
        %3042 = vrot.lane.b32.xlu0 %v2896, 48
        %v3043 = vpop.permute.xlu0 %3042
        %3044 = vrot.lane.b32.xlu0 %v2898, 48
        %v3045 = vpop.permute.xlu0 %3044
        %3054 = vrot.lane.b32.xlu0 %v2923, 64
        %v3055 = vpop.permute.xlu0 %3054
        %3056 = vrot.lane.b32.xlu0 %v2926, 64
        %v3057 = vpop.permute.xlu0 %3056
        %3058 = vrot.lane.b32.xlu0 %v2929, 64
        %v3059 = vpop.permute.xlu0 %3058
        %3060 = vrot.lane.b32.xlu0 %v2932, 64
        %v3061 = vpop.permute.xlu0 %3060
        %3062 = vrot.lane.b32.xlu0 %v2935, 64
        %v3063 = vpop.permute.xlu0 %3062
        %3064 = vrot.lane.b32.xlu0 %v2938, 64
        %v3065 = vpop.permute.xlu0 %3064
        %3066 = vrot.lane.b32.xlu0 %v2941, 64
        %v3067 = vpop.permute.xlu0 %3066
        %3068 = vrot.lane.b32.xlu0 %v2970, 64
        %v3069 = vpop.permute.xlu0 %3068
        %3078 = vrot.lane.b32.xlu0 %v2947, 80
        %v3079 = vpop.permute.xlu0 %3078
        %3080 = vrot.lane.b32.xlu0 %v2950, 80
        %v3081 = vpop.permute.xlu0 %3080
        %3082 = vrot.lane.b32.xlu0 %v2953, 80
        %v3083 = vpop.permute.xlu0 %3082
        %3084 = vrot.lane.b32.xlu0 %v2956, 80
        %v3085 = vpop.permute.xlu0 %3084
        %3086 = vrot.lane.b32.xlu0 %v2959, 80
        %v3087 = vpop.permute.xlu0 %3086
        %3088 = vrot.lane.b32.xlu0 %v2962, 80
        %v3089 = vpop.permute.xlu0 %3088
        %3090 = vrot.lane.b32.xlu0 %v2965, 80
        %v3091 = vpop.permute.xlu0 %3090
        %3092 = vrot.lane.b32.xlu0 %v2973, 80
        %v3093 = vpop.permute.xlu0 %3092
        %3102 = vrot.lane.b32.xlu0 %v2886, 96
        %v3103 = vpop.permute.xlu0 %3102
        %3104 = vrot.lane.b32.xlu0 %v2888, 96
        %v3105 = vpop.permute.xlu0 %3104
        %3106 = vrot.lane.b32.xlu0 %v2890, 96
        %v3107 = vpop.permute.xlu0 %3106
        %3108 = vrot.lane.b32.xlu0 %v2892, 96
        %v3109 = vpop.permute.xlu0 %3108
        %3110 = vrot.lane.b32.xlu0 %v2894, 96
        %v3111 = vpop.permute.xlu0 %3110
        %3112 = vrot.lane.b32.xlu0 %v2896, 96
        %v3113 = vpop.permute.xlu0 %3112
        %3114 = vrot.lane.b32.xlu0 %v2898, 96
        %v3115 = vpop.permute.xlu0 %3114
        %3116 = vrot.lane.b32.xlu0 %v2900, 96
        %v3117 = vpop.permute.xlu0 %3116
        %3126 = vrot.lane.b32.xlu0 %v2926, 112
        %v3127 = vpop.permute.xlu0 %3126
        %3128 = vrot.lane.b32.xlu0 %v2929, 112
        %v3129 = vpop.permute.xlu0 %3128
        %3130 = vrot.lane.b32.xlu0 %v2932, 112
        %v3131 = vpop.permute.xlu0 %3130
        %3132 = vrot.lane.b32.xlu0 %v2935, 112
        %v3133 = vpop.permute.xlu0 %3132
        %3134 = vrot.lane.b32.xlu0 %v2938, 112
        %v3135 = vpop.permute.xlu0 %3134
        %3136 = vrot.lane.b32.xlu0 %v2941, 112
        %v3137 = vpop.permute.xlu0 %3136
        %3138 = vrot.lane.b32.xlu0 %v2970, 112
        %v3139 = vpop.permute.xlu0 %3138
        %3140 = vrot.lane.b32.xlu0 %v2978, 112
        %v3141 = vpop.permute.xlu0 %3140
        %v3150 = vsel %vm433, %v2882, %v2983
        %v3151 = vsel %vm433, %v2884, %v2985
        %v3152 = vsel %vm433, %v2886, %v2987
        %v3153 = vsel %vm433, %v2888, %v2989
        %v3154 = vsel %vm433, %v2890, %v2991
        %v3155 = vsel %vm433, %v2892, %v2993
        %v3156 = vsel %vm433, %v2894, %v2995
        %v3157 = vsel %vm433, %v2896, %v2997
        %v3158 = vsel %vm408, %v3150, %v3007
        %v3159 = vsel %vm408, %v3151, %v3009
        %v3160 = vsel %vm408, %v3152, %v3011
        %v3161 = vsel %vm408, %v3153, %v3013
        %v3162 = vsel %vm408, %v3154, %v3015
        %v3163 = vsel %vm408, %v3155, %v3017
        %v3164 = vsel %vm408, %v3156, %v3019
        %v3165 = vsel %vm408, %v3157, %v3021
        %vm3166 = vcmask 392192
        %v3167 = vsel %vm3166, %v3158, %v3031
        %v3168 = vsel %vm3166, %v3159, %v3033
        %v3169 = vsel %vm3166, %v3160, %v3035
        %v3170 = vsel %vm3166, %v3161, %v3037
        %v3171 = vsel %vm3166, %v3162, %v3039
        %v3172 = vsel %vm3166, %v3163, %v3041
        %v3173 = vsel %vm3166, %v3164, %v3043
        %v3174 = vsel %vm3166, %v3165, %v3045
        %v3175 = vsel %vm1273, %v3167, %v3055
        %v3176 = vsel %vm1273, %v3168, %v3057
        %v3177 = vsel %vm1273, %v3169, %v3059
        %v3178 = vsel %vm1273, %v3170, %v3061
        %v3179 = vsel %vm1273, %v3171, %v3063
        %v3180 = vsel %vm1273, %v3172, %v3065
        %v3181 = vsel %vm1273, %v3173, %v3067
        %v3182 = vsel %vm1273, %v3174, %v3069
        %vm3183 = vcmask 654336
        %v3184 = vsel %vm3183, %v3175, %v3079
        %v3185 = vsel %vm3183, %v3176, %v3081
        %v3186 = vsel %vm3183, %v3177, %v3083
        %v3187 = vsel %vm3183, %v3178, %v3085
        %v3188 = vsel %vm3183, %v3179, %v3087
        %v3189 = vsel %vm3183, %v3180, %v3089
        %v3190 = vsel %vm3183, %v3181, %v3091
        %v3191 = vsel %vm3183, %v3182, %v3093
        %v3192 = vsel %vm1282, %v3184, %v3103
        %v3193 = vsel %vm1282, %v3185, %v3105
        %v3194 = vsel %vm1282, %v3186, %v3107
        %v3195 = vsel %vm1282, %v3187, %v3109
        %v3196 = vsel %vm1282, %v3188, %v3111
        %v3197 = vsel %vm1282, %v3189, %v3113
        %v3198 = vsel %vm1282, %v3190, %v3115
        %v3199 = vsel %vm1282, %v3191, %v3117
        %vm3200 = vcmask 916480
        %v3201 = vsel %vm3200, %v3192, %v3127
        %v3202 = vsel %vm3200, %v3193, %v3129
        %v3203 = vsel %vm3200, %v3194, %v3131
        %v3204 = vsel %vm3200, %v3195, %v3133
        %v3205 = vsel %vm3200, %v3196, %v3135
        %v3206 = vsel %vm3200, %v3197, %v3137
        %v3207 = vsel %vm3200, %v3198, %v3139
        %v3208 = vsel %vm3200, %v3199, %v3141
        %v3209 = vld [vmem:[#allocation9] sm:$0xff]
        %v3210 = vld [vmem:[#allocation9 + $0x8] sm:$0xff]
        %v3211 = vld [vmem:[#allocation9 + $0x10] sm:$0xff]
        %v3212 = vld [vmem:[#allocation9 + $0x18] sm:$0xff]
        %v3213 = vld [vmem:[#allocation9 + $0x20] sm:$0xff]
        %v3214 = vld [vmem:[#allocation9 + $0x28] sm:$0xff]
        %v3215 = vld [vmem:[#allocation9 + $0x30] sm:$0xff]
        %v3216 = vld [vmem:[#allocation9 + $0x38] sm:$0xff]
        %v3217 = vld [vmem:[#allocation9 + $0x40] sm:$0xff]
        %v3218 = vld [vmem:[#allocation9 + $0x48] sm:$0xff]
        %v3219 = vld [vmem:[#allocation9 + $0x50] sm:$0xff]
        %v3220 = vld [vmem:[#allocation9 + $0x58] sm:$0xff]
        %v3221 = vld [vmem:[#allocation9 + $0x60] sm:$0xff]
        %v3222 = vld [vmem:[#allocation9 + $0x68] sm:$0xff]
        %v3223 = vld [vmem:[#allocation9 + $0x70] sm:$0xff]
        %v3224 = vld [vmem:[#allocation9 + $0x78] sm:$0xff]
        %v3225 = vld [vmem:[#allocation9 + $0x80] sm:$0xff]
        %v3226 = vld [vmem:[#allocation9 + $0x88] sm:$0xff]
        %v3227 = vld [vmem:[%s458] sm:$0xff]
        %v3228 = vld [vmem:[%s458 + $0x8] sm:$0x3]
        %v3229 = vld [vmem:[%s458 + $0x10] sm:$0xff]
        %v3230 = vld [vmem:[%s458 + $0x18] sm:$0x3]
        %v3231 = vld [vmem:[%s458 + $0x20] sm:$0xff]
        %v3232 = vld [vmem:[%s458 + $0x28] sm:$0x3]
        %v3233 = vld [vmem:[%s458 + $0x30] sm:$0xff]
        %v3234 = vld [vmem:[%s458 + $0x38] sm:$0x3]
        %v3235 = vld [vmem:[%s458 + $0x40] sm:$0xff]
        %v3236 = vld [vmem:[%s458 + $0x48] sm:$0x3]
        %v3237 = vld [vmem:[%s458 + $0x50] sm:$0xff]
        %v3238 = vld [vmem:[%s458 + $0x58] sm:$0x3]
        %v3239 = vld [vmem:[%s458 + $0x60] sm:$0xff]
        %v3240 = vld [vmem:[%s458 + $0x68] sm:$0x3]
        %v3241 = vld [vmem:[%s458 + $0x70] sm:$0xff]
        %v3242 = vld [vmem:[%s458 + $0x78] sm:$0x3]
        %v3243 = vld [vmem:[%s458 + $0x80] sm:$0xff]
        %v3244 = vld [vmem:[%s458 + $0x88] sm:$0x3]
        %v3245 = vld [vmem:[%s458 + $0x90] sm:$0xff]
        %v3246 = vld [vmem:[%s458 + $0x98] sm:$0x3]
        %v3263 = vrot.slane %v3227, 1
        %v3264 = vrot.slane %v3228, 1
        %v3265 = vsel %vm579, %v3263, %v3264
        %v3266 = vrot.slane %v3229, 1
        %v3267 = vrot.slane %v3230, 1
        %v3268 = vsel %vm579, %v3266, %v3267
        %v3269 = vrot.slane %v3231, 1
        %v3270 = vrot.slane %v3232, 1
        %v3271 = vsel %vm579, %v3269, %v3270
        %v3272 = vrot.slane %v3233, 1
        %v3273 = vrot.slane %v3234, 1
        %v3274 = vsel %vm579, %v3272, %v3273
        %v3275 = vrot.slane %v3235, 1
        %v3276 = vrot.slane %v3236, 1
        %v3277 = vsel %vm579, %v3275, %v3276
        %v3278 = vrot.slane %v3237, 1
        %v3279 = vrot.slane %v3238, 1
        %v3280 = vsel %vm579, %v3278, %v3279
        %v3281 = vrot.slane %v3239, 1
        %v3282 = vrot.slane %v3240, 1
        %v3283 = vsel %vm579, %v3281, %v3282
        %v3284 = vrot.slane %v3241, 1
        %v3285 = vrot.slane %v3242, 1
        %v3286 = vsel %vm579, %v3284, %v3285
        %v3287 = vrot.slane %v3227, 2
        %v3288 = vrot.slane %v3228, 2
        %v3289 = vsel %vm604, %v3287, %v3288
        %v3290 = vrot.slane %v3229, 2
        %v3291 = vrot.slane %v3230, 2
        %v3292 = vsel %vm604, %v3290, %v3291
        %v3293 = vrot.slane %v3231, 2
        %v3294 = vrot.slane %v3232, 2
        %v3295 = vsel %vm604, %v3293, %v3294
        %v3296 = vrot.slane %v3233, 2
        %v3297 = vrot.slane %v3234, 2
        %v3298 = vsel %vm604, %v3296, %v3297
        %v3299 = vrot.slane %v3235, 2
        %v3300 = vrot.slane %v3236, 2
        %v3301 = vsel %vm604, %v3299, %v3300
        %v3302 = vrot.slane %v3237, 2
        %v3303 = vrot.slane %v3238, 2
        %v3304 = vsel %vm604, %v3302, %v3303
        %v3305 = vrot.slane %v3239, 2
        %v3306 = vrot.slane %v3240, 2
        %v3307 = vsel %vm604, %v3305, %v3306
        %v3308 = vrot.slane %v3241, 2
        %v3309 = vrot.slane %v3242, 2
        %v3310 = vsel %vm604, %v3308, %v3309
        %v3313 = vrot.slane %v3243, 1
        %v3314 = vrot.slane %v3244, 1
        %v3315 = vsel %vm579, %v3313, %v3314
        %v3316 = vrot.slane %v3243, 2
        %v3317 = vrot.slane %v3244, 2
        %v3318 = vsel %vm604, %v3316, %v3317
        %v3321 = vrot.slane %v3245, 1
        %v3322 = vrot.slane %v3246, 1
        %v3323 = vsel %vm579, %v3321, %v3322
        %v3324 = vrot.slane %v3245, 2
        %v3325 = vrot.slane %v3246, 2
        %v3326 = vsel %vm604, %v3324, %v3325
        %3327 = vrot.lane.b32.xlu0 %v3265, 16
        %v3328 = vpop.permute.xlu0 %3327
        %3329 = vrot.lane.b32.xlu0 %v3268, 16
        %v3330 = vpop.permute.xlu0 %3329
        %3331 = vrot.lane.b32.xlu0 %v3271, 16
        %v3332 = vpop.permute.xlu0 %3331
        %3333 = vrot.lane.b32.xlu0 %v3274, 16
        %v3334 = vpop.permute.xlu0 %3333
        %3335 = vrot.lane.b32.xlu0 %v3277, 16
        %v3336 = vpop.permute.xlu0 %3335
        %3337 = vrot.lane.b32.xlu0 %v3280, 16
        %v3338 = vpop.permute.xlu0 %3337
        %3339 = vrot.lane.b32.xlu0 %v3283, 16
        %v3340 = vpop.permute.xlu0 %3339
        %3341 = vrot.lane.b32.xlu0 %v3286, 16
        %v3342 = vpop.permute.xlu0 %3341
        %3351 = vrot.lane.b32.xlu0 %v3289, 32
        %v3352 = vpop.permute.xlu0 %3351
        %3353 = vrot.lane.b32.xlu0 %v3292, 32
        %v3354 = vpop.permute.xlu0 %3353
        %3355 = vrot.lane.b32.xlu0 %v3295, 32
        %v3356 = vpop.permute.xlu0 %3355
        %3357 = vrot.lane.b32.xlu0 %v3298, 32
        %v3358 = vpop.permute.xlu0 %3357
        %3359 = vrot.lane.b32.xlu0 %v3301, 32
        %v3360 = vpop.permute.xlu0 %3359
        %3361 = vrot.lane.b32.xlu0 %v3304, 32
        %v3362 = vpop.permute.xlu0 %3361
        %3363 = vrot.lane.b32.xlu0 %v3307, 32
        %v3364 = vpop.permute.xlu0 %3363
        %3365 = vrot.lane.b32.xlu0 %v3310, 32
        %v3366 = vpop.permute.xlu0 %3365
        %3375 = vrot.lane.b32.xlu0 %v3229, 48
        %v3376 = vpop.permute.xlu0 %3375
        %3377 = vrot.lane.b32.xlu0 %v3231, 48
        %v3378 = vpop.permute.xlu0 %3377
        %3379 = vrot.lane.b32.xlu0 %v3233, 48
        %v3380 = vpop.permute.xlu0 %3379
        %3381 = vrot.lane.b32.xlu0 %v3235, 48
        %v3382 = vpop.permute.xlu0 %3381
        %3383 = vrot.lane.b32.xlu0 %v3237, 48
        %v3384 = vpop.permute.xlu0 %3383
        %3385 = vrot.lane.b32.xlu0 %v3239, 48
        %v3386 = vpop.permute.xlu0 %3385
        %3387 = vrot.lane.b32.xlu0 %v3241, 48
        %v3388 = vpop.permute.xlu0 %3387
        %3389 = vrot.lane.b32.xlu0 %v3243, 48
        %v3390 = vpop.permute.xlu0 %3389
        %3399 = vrot.lane.b32.xlu0 %v3268, 64
        %v3400 = vpop.permute.xlu0 %3399
        %3401 = vrot.lane.b32.xlu0 %v3271, 64
        %v3402 = vpop.permute.xlu0 %3401
        %3403 = vrot.lane.b32.xlu0 %v3274, 64
        %v3404 = vpop.permute.xlu0 %3403
        %3405 = vrot.lane.b32.xlu0 %v3277, 64
        %v3406 = vpop.permute.xlu0 %3405
        %3407 = vrot.lane.b32.xlu0 %v3280, 64
        %v3408 = vpop.permute.xlu0 %3407
        %3409 = vrot.lane.b32.xlu0 %v3283, 64
        %v3410 = vpop.permute.xlu0 %3409
        %3411 = vrot.lane.b32.xlu0 %v3286, 64
        %v3412 = vpop.permute.xlu0 %3411
        %3413 = vrot.lane.b32.xlu0 %v3315, 64
        %v3414 = vpop.permute.xlu0 %3413
        %3423 = vrot.lane.b32.xlu0 %v3292, 80
        %v3424 = vpop.permute.xlu0 %3423
        %3425 = vrot.lane.b32.xlu0 %v3295, 80
        %v3426 = vpop.permute.xlu0 %3425
        %3427 = vrot.lane.b32.xlu0 %v3298, 80
        %v3428 = vpop.permute.xlu0 %3427
        %3429 = vrot.lane.b32.xlu0 %v3301, 80
        %v3430 = vpop.permute.xlu0 %3429
        %3431 = vrot.lane.b32.xlu0 %v3304, 80
        %v3432 = vpop.permute.xlu0 %3431
        %3433 = vrot.lane.b32.xlu0 %v3307, 80
        %v3434 = vpop.permute.xlu0 %3433
        %3435 = vrot.lane.b32.xlu0 %v3310, 80
        %v3436 = vpop.permute.xlu0 %3435
        %3437 = vrot.lane.b32.xlu0 %v3318, 80
        %v3438 = vpop.permute.xlu0 %3437
        %3447 = vrot.lane.b32.xlu0 %v3231, 96
        %v3448 = vpop.permute.xlu0 %3447
        %3449 = vrot.lane.b32.xlu0 %v3233, 96
        %v3450 = vpop.permute.xlu0 %3449
        %3451 = vrot.lane.b32.xlu0 %v3235, 96
        %v3452 = vpop.permute.xlu0 %3451
        %3453 = vrot.lane.b32.xlu0 %v3237, 96
        %v3454 = vpop.permute.xlu0 %3453
        %3455 = vrot.lane.b32.xlu0 %v3239, 96
        %v3456 = vpop.permute.xlu0 %3455
        %3457 = vrot.lane.b32.xlu0 %v3241, 96
        %v3458 = vpop.permute.xlu0 %3457
        %3459 = vrot.lane.b32.xlu0 %v3243, 96
        %v3460 = vpop.permute.xlu0 %3459
        %3461 = vrot.lane.b32.xlu0 %v3245, 96
        %v3462 = vpop.permute.xlu0 %3461
        %3471 = vrot.lane.b32.xlu0 %v3271, 112
        %v3472 = vpop.permute.xlu0 %3471
        %3473 = vrot.lane.b32.xlu0 %v3274, 112
        %v3474 = vpop.permute.xlu0 %3473
        %3475 = vrot.lane.b32.xlu0 %v3277, 112
        %v3476 = vpop.permute.xlu0 %3475
        %3477 = vrot.lane.b32.xlu0 %v3280, 112
        %v3478 = vpop.permute.xlu0 %3477
        %3479 = vrot.lane.b32.xlu0 %v3283, 112
        %v3480 = vpop.permute.xlu0 %3479
        %3481 = vrot.lane.b32.xlu0 %v3286, 112
        %v3482 = vpop.permute.xlu0 %3481
        %3483 = vrot.lane.b32.xlu0 %v3315, 112
        %v3484 = vpop.permute.xlu0 %3483
        %3485 = vrot.lane.b32.xlu0 %v3323, 112
        %v3486 = vpop.permute.xlu0 %3485
        %v3495 = vsel %vm433, %v3227, %v3328
        %v3496 = vsel %vm433, %v3229, %v3330
        %v3497 = vsel %vm433, %v3231, %v3332
        %v3498 = vsel %vm433, %v3233, %v3334
        %v3499 = vsel %vm433, %v3235, %v3336
        %v3500 = vsel %vm433, %v3237, %v3338
        %v3501 = vsel %vm433, %v3239, %v3340
        %v3502 = vsel %vm433, %v3241, %v3342
        %v3503 = vsel %vm408, %v3495, %v3352
        %v3504 = vsel %vm408, %v3496, %v3354
        %v3505 = vsel %vm408, %v3497, %v3356
        %v3506 = vsel %vm408, %v3498, %v3358
        %v3507 = vsel %vm408, %v3499, %v3360
        %v3508 = vsel %vm408, %v3500, %v3362
        %v3509 = vsel %vm408, %v3501, %v3364
        %v3510 = vsel %vm408, %v3502, %v3366
        %v3511 = vsel %vm3166, %v3503, %v3376
        %v3512 = vsel %vm3166, %v3504, %v3378
        %v3513 = vsel %vm3166, %v3505, %v3380
        %v3514 = vsel %vm3166, %v3506, %v3382
        %v3515 = vsel %vm3166, %v3507, %v3384
        %v3516 = vsel %vm3166, %v3508, %v3386
        %v3517 = vsel %vm3166, %v3509, %v3388
        %v3518 = vsel %vm3166, %v3510, %v3390
        %v3519 = vsel %vm1273, %v3511, %v3400
        %v3520 = vsel %vm1273, %v3512, %v3402
        %v3521 = vsel %vm1273, %v3513, %v3404
        %v3522 = vsel %vm1273, %v3514, %v3406
        %v3523 = vsel %vm1273, %v3515, %v3408
        %v3524 = vsel %vm1273, %v3516, %v3410
        %v3525 = vsel %vm1273, %v3517, %v3412
        %v3526 = vsel %vm1273, %v3518, %v3414
        %v3527 = vsel %vm3183, %v3519, %v3424
        %v3528 = vsel %vm3183, %v3520, %v3426
        %v3529 = vsel %vm3183, %v3521, %v3428
        %v3530 = vsel %vm3183, %v3522, %v3430
        %v3531 = vsel %vm3183, %v3523, %v3432
        %v3532 = vsel %vm3183, %v3524, %v3434
        %v3533 = vsel %vm3183, %v3525, %v3436
        %v3534 = vsel %vm3183, %v3526, %v3438
        %v3535 = vsel %vm1282, %v3527, %v3448
        %v3536 = vsel %vm1282, %v3528, %v3450
        %v3537 = vsel %vm1282, %v3529, %v3452
        %v3538 = vsel %vm1282, %v3530, %v3454
        %v3539 = vsel %vm1282, %v3531, %v3456
        %v3540 = vsel %vm1282, %v3532, %v3458
        %v3541 = vsel %vm1282, %v3533, %v3460
        %v3542 = vsel %vm1282, %v3534, %v3462
        %v3543 = vsel %vm3200, %v3535, %v3472
        %v3544 = vsel %vm3200, %v3536, %v3474
        %v3545 = vsel %vm3200, %v3537, %v3476
        %v3546 = vsel %vm3200, %v3538, %v3478
        %v3547 = vsel %vm3200, %v3539, %v3480
        %v3548 = vsel %vm3200, %v3540, %v3482
        %v3549 = vsel %vm3200, %v3541, %v3484
        %v3550 = vsel %vm3200, %v3542, %v3486
        %s3551 = scalar_lea.vmem [#allocation9], 144
        %v3552 = vld [vmem:[%s3551] sm:$0xff]
        %v3553 = vld [vmem:[%s3551 + $0x8] sm:$0xff]
        %v3554 = vld [vmem:[%s3551 + $0x10] sm:$0xff]
        %v3555 = vld [vmem:[%s3551 + $0x18] sm:$0xff]
        %v3556 = vld [vmem:[%s3551 + $0x20] sm:$0xff]
        %v3557 = vld [vmem:[%s3551 + $0x28] sm:$0xff]
        %v3558 = vld [vmem:[%s3551 + $0x30] sm:$0xff]
        %v3559 = vld [vmem:[%s3551 + $0x38] sm:$0xff]
        %v3560 = vld [vmem:[%s3551 + $0x40] sm:$0xff]
        %v3561 = vld [vmem:[%s3551 + $0x48] sm:$0xff]
        %v3562 = vld [vmem:[%s3551 + $0x50] sm:$0xff]
        %v3563 = vld [vmem:[%s3551 + $0x58] sm:$0xff]
        %v3564 = vld [vmem:[%s3551 + $0x60] sm:$0xff]
        %v3565 = vld [vmem:[%s3551 + $0x68] sm:$0xff]
        %v3566 = vld [vmem:[%s3551 + $0x70] sm:$0xff]
        %v3567 = vld [vmem:[%s3551 + $0x78] sm:$0xff]
        %v3568 = vld [vmem:[%s3551 + $0x80] sm:$0xff]
        %v3569 = vld [vmem:[%s3551 + $0x88] sm:$0xff]
        %v3570 = vsel %vm433, %v3295, 0
        %v3572 = vsel %vm433, %v3298, 0
        %v3574 = vsel %vm433, %v3301, 0
        %v3576 = vsel %vm433, %v3304, 0
        %v3578 = vsel %vm433, %v3307, 0
        %v3580 = vsel %vm433, %v3310, 0
        %v3582 = vsel %vm433, %v3318, 0
        %v3584 = vsel %vm433, %v3326, 0
        %3586 = vmatpush.msra.mxu0 %v3567
        %3587 = vmatpush.msra.mxu0 %v3566
        %3588 = vmatpush.msra.mxu0 %v3565
        %3589 = vmatpush.msra.mxu0 %v3564
        %3590 = vmatpush.msra.mxu0 %v3563
        %3591 = vmatpush.msra.mxu0 %v3562
        %3592 = vmatpush.msra.mxu0 %v3561
        %3593 = vmatpush.msra.mxu0 %v3560
        %3594 = vmatpush.msra.mxu0 %v3559
        %3595 = vmatpush.msra.mxu0 %v3558
        %3596 = vmatpush.msra.mxu0 %v3557
        %3597 = vmatpush.msra.mxu0 %v3556
        %3598 = vmatpush.msra.mxu0 %v3555
        %3599 = vmatpush.msra.mxu0 %v3554
        %3600 = vmatpush.msra.mxu0 %v3553
        %3601 = vmatpush.msra.mxu0 %v3552
        %3602 = vmatmul.f32.gmra.mxu0 %v3543
        %v3603 = vpop.f32.mrf.mxu0
        %v3604 = vadd.f32 0.0, %v3603
        %3605 = vmatmul.f32.gmra.mxu0 %v3544
        %v3606 = vpop.f32.mrf.mxu0
        %v3607 = vadd.f32 0.0, %v3606
        %3608 = vmatmul.f32.gmra.mxu0 %v3545
        %v3609 = vpop.f32.mrf.mxu0
        %v3610 = vadd.f32 0.0, %v3609
        %3611 = vmatmul.f32.gmra.mxu0 %v3546
        %v3612 = vpop.f32.mrf.mxu0
        %v3613 = vadd.f32 0.0, %v3612
        %3614 = vmatmul.f32.gmra.mxu0 %v3547
        %v3615 = vpop.f32.mrf.mxu0
        %v3616 = vadd.f32 0.0, %v3615
        %3617 = vmatmul.f32.gmra.mxu0 %v3548
        %v3618 = vpop.f32.mrf.mxu0
        %v3619 = vadd.f32 0.0, %v3618
        %3620 = vmatmul.f32.gmra.mxu0 %v3549
        %v3621 = vpop.f32.mrf.mxu0
        %v3622 = vadd.f32 0.0, %v3621
        %3623 = vmatmul.f32.gmra.mxu0 %v3550
        %v3624 = vpop.f32.mrf.mxu0
        %v3625 = vadd.f32 0.0, %v3624
        %3626 = vdwg.mxu0
        %3627 = vmatpush.msra.mxu0 0.0
        %3628 = vmatpush.msra.mxu0 0.0
        %3629 = vmatpush.msra.mxu0 0.0
        %3630 = vmatpush.msra.mxu0 0.0
        %3631 = vmatpush.msra.mxu0 0.0
        %3632 = vmatpush.msra.mxu0 0.0
        %3633 = vmatpush.msra.mxu0 0.0
        %3634 = vmatpush.msra.mxu0 0.0
        %3635 = vmatpush.msra.mxu0 0.0
        %3636 = vmatpush.msra.mxu0 0.0
        %3637 = vmatpush.msra.mxu0 0.0
        %3638 = vmatpush.msra.mxu0 0.0
        %3639 = vmatpush.msra.mxu0 0.0
        %3640 = vmatpush.msra.mxu0 0.0
        %3641 = vmatpush.msra.mxu0 %v3569
        %3642 = vmatpush.msra.mxu0 %v3568
        %3643 = vmatmul.f32.gmra.mxu0 %v3570
        %v3644 = vpop.f32.mrf.mxu0
        %v3645 = vadd.f32 %v3604, %v3644
        %3646 = vmatmul.f32.gmra.mxu0 %v3572
        %v3647 = vpop.f32.mrf.mxu0
        %v3648 = vadd.f32 %v3607, %v3647
        %3649 = vmatmul.f32.gmra.mxu0 %v3574
        %v3650 = vpop.f32.mrf.mxu0
        %v3651 = vadd.f32 %v3610, %v3650
        %3652 = vmatmul.f32.gmra.mxu0 %v3576
        %v3653 = vpop.f32.mrf.mxu0
        %v3654 = vadd.f32 %v3613, %v3653
        %3655 = vmatmul.f32.gmra.mxu0 %v3578
        %v3656 = vpop.f32.mrf.mxu0
        %v3657 = vadd.f32 %v3616, %v3656
        %3658 = vmatmul.f32.gmra.mxu0 %v3580
        %v3659 = vpop.f32.mrf.mxu0
        %v3660 = vadd.f32 %v3619, %v3659
        %3661 = vmatmul.f32.gmra.mxu0 %v3582
        %v3662 = vpop.f32.mrf.mxu0
        %v3663 = vadd.f32 %v3622, %v3662
        %3664 = vmatmul.f32.gmra.mxu0 %v3584
        %v3665 = vpop.f32.mrf.mxu0
        %v3666 = vadd.f32 %v3625, %v3665
        %3667 = vdwg.mxu0
        %v3668 = vsel %vm433, %v2950, 0
        %v3670 = vsel %vm433, %v2953, 0
        %v3672 = vsel %vm433, %v2956, 0
        %v3674 = vsel %vm433, %v2959, 0
        %v3676 = vsel %vm433, %v2962, 0
        %v3678 = vsel %vm433, %v2965, 0
        %v3680 = vsel %vm433, %v2973, 0
        %v3682 = vsel %vm433, %v2981, 0
        %3684 = vmatpush.msra.mxu0 %v3224
        %3685 = vmatpush.msra.mxu0 %v3223
        %3686 = vmatpush.msra.mxu0 %v3222
        %3687 = vmatpush.msra.mxu0 %v3221
        %3688 = vmatpush.msra.mxu0 %v3220
        %3689 = vmatpush.msra.mxu0 %v3219
        %3690 = vmatpush.msra.mxu0 %v3218
        %3691 = vmatpush.msra.mxu0 %v3217
        %3692 = vmatpush.msra.mxu0 %v3216
        %3693 = vmatpush.msra.mxu0 %v3215
        %3694 = vmatpush.msra.mxu0 %v3214
        %3695 = vmatpush.msra.mxu0 %v3213
        %3696 = vmatpush.msra.mxu0 %v3212
        %3697 = vmatpush.msra.mxu0 %v3211
        %3698 = vmatpush.msra.mxu0 %v3210
        %3699 = vmatpush.msra.mxu0 %v3209
        %3700 = vmatmul.f32.gmra.mxu0 %v3201
        %v3701 = vpop.f32.mrf.mxu0
        %v3702 = vadd.f32 %v3645, %v3701
        %3703 = vmatmul.f32.gmra.mxu0 %v3202
        %v3704 = vpop.f32.mrf.mxu0
        %v3705 = vadd.f32 %v3648, %v3704
        %3706 = vmatmul.f32.gmra.mxu0 %v3203
        %v3707 = vpop.f32.mrf.mxu0
        %v3708 = vadd.f32 %v3651, %v3707
        %3709 = vmatmul.f32.gmra.mxu0 %v3204
        %v3710 = vpop.f32.mrf.mxu0
        %v3711 = vadd.f32 %v3654, %v3710
        %3712 = vmatmul.f32.gmra.mxu0 %v3205
        %v3713 = vpop.f32.mrf.mxu0
        %v3714 = vadd.f32 %v3657, %v3713
        %3715 = vmatmul.f32.gmra.mxu0 %v3206
        %v3716 = vpop.f32.mrf.mxu0
        %v3717 = vadd.f32 %v3660, %v3716
        %3718 = vmatmul.f32.gmra.mxu0 %v3207
        %v3719 = vpop.f32.mrf.mxu0
        %v3720 = vadd.f32 %v3663, %v3719
        %3721 = vmatmul.f32.gmra.mxu0 %v3208
        %v3722 = vpop.f32.mrf.mxu0
        %v3723 = vadd.f32 %v3666, %v3722
        %3724 = vdwg.mxu0
        %3725 = vmatpush.msra.mxu0 0.0
        %3726 = vmatpush.msra.mxu0 0.0
        %3727 = vmatpush.msra.mxu0 0.0
        %3728 = vmatpush.msra.mxu0 0.0
        %3729 = vmatpush.msra.mxu0 0.0
        %3730 = vmatpush.msra.mxu0 0.0
        %3731 = vmatpush.msra.mxu0 0.0
        %3732 = vmatpush.msra.mxu0 0.0
        %3733 = vmatpush.msra.mxu0 0.0
        %3734 = vmatpush.msra.mxu0 0.0
        %3735 = vmatpush.msra.mxu0 0.0
        %3736 = vmatpush.msra.mxu0 0.0
        %3737 = vmatpush.msra.mxu0 0.0
        %3738 = vmatpush.msra.mxu0 0.0
        %3739 = vmatpush.msra.mxu0 %v3226
        %3740 = vmatpush.msra.mxu0 %v3225
        %3741 = vmatmul.f32.gmra.mxu0 %v3668
        %v3742 = vpop.f32.mrf.mxu0
        %v3743 = vadd.f32 %v3702, %v3742
        %3744 = vmatmul.f32.gmra.mxu0 %v3670
        %v3745 = vpop.f32.mrf.mxu0
        %v3746 = vadd.f32 %v3705, %v3745
        %3747 = vmatmul.f32.gmra.mxu0 %v3672
        %v3748 = vpop.f32.mrf.mxu0
        %v3749 = vadd.f32 %v3708, %v3748
        %3750 = vmatmul.f32.gmra.mxu0 %v3674
        %v3751 = vpop.f32.mrf.mxu0
        %v3752 = vadd.f32 %v3711, %v3751
        %3753 = vmatmul.f32.gmra.mxu0 %v3676
        %v3754 = vpop.f32.mrf.mxu0
        %v3755 = vadd.f32 %v3714, %v3754
        %3756 = vmatmul.f32.gmra.mxu0 %v3678
        %v3757 = vpop.f32.mrf.mxu0
        %v3758 = vadd.f32 %v3717, %v3757
        %3759 = vmatmul.f32.gmra.mxu0 %v3680
        %v3760 = vpop.f32.mrf.mxu0
        %v3761 = vadd.f32 %v3720, %v3760
        %3762 = vmatmul.f32.gmra.mxu0 %v3682
        %v3763 = vpop.f32.mrf.mxu0
        %v3764 = vadd.f32 %v3723, %v3763
        %3765 = vdwg.mxu0
        %v3766 = vld [vmem:[%s481] sm:$0xff]
        %v3767 = vld [vmem:[%s481 + $0x8] sm:$0x3]
        %v3768 = vld [vmem:[%s481 + $0x10] sm:$0xff]
        %v3769 = vld [vmem:[%s481 + $0x18] sm:$0x3]
        %v3770 = vld [vmem:[%s481 + $0x20] sm:$0xff]
        %v3771 = vld [vmem:[%s481 + $0x28] sm:$0x3]
        %v3772 = vld [vmem:[%s481 + $0x30] sm:$0xff]
        %v3773 = vld [vmem:[%s481 + $0x38] sm:$0x3]
        %v3774 = vld [vmem:[%s481 + $0x40] sm:$0xff]
        %v3775 = vld [vmem:[%s481 + $0x48] sm:$0x3]
        %v3776 = vld [vmem:[%s481 + $0x50] sm:$0xff]
        %v3777 = vld [vmem:[%s481 + $0x58] sm:$0x3]
        %v3778 = vld [vmem:[%s481 + $0x60] sm:$0xff]
        %v3779 = vld [vmem:[%s481 + $0x68] sm:$0x3]
        %v3780 = vld [vmem:[%s481 + $0x70] sm:$0xff]
        %v3781 = vld [vmem:[%s481 + $0x78] sm:$0x3]
        %v3782 = vld [vmem:[%s481 + $0x80] sm:$0xff]
        %v3783 = vld [vmem:[%s481 + $0x88] sm:$0x3]
        %v3784 = vld [vmem:[%s481 + $0x90] sm:$0xff]
        %v3785 = vld [vmem:[%s481 + $0x98] sm:$0x3]
        %v3802 = vrot.slane %v3766, 1
        %v3803 = vrot.slane %v3767, 1
        %v3804 = vsel %vm579, %v3802, %v3803
        %v3805 = vrot.slane %v3768, 1
        %v3806 = vrot.slane %v3769, 1
        %v3807 = vsel %vm579, %v3805, %v3806
        %v3808 = vrot.slane %v3770, 1
        %v3809 = vrot.slane %v3771, 1
        %v3810 = vsel %vm579, %v3808, %v3809
        %v3811 = vrot.slane %v3772, 1
        %v3812 = vrot.slane %v3773, 1
        %v3813 = vsel %vm579, %v3811, %v3812
        %v3814 = vrot.slane %v3774, 1
        %v3815 = vrot.slane %v3775, 1
        %v3816 = vsel %vm579, %v3814, %v3815
        %v3817 = vrot.slane %v3776, 1
        %v3818 = vrot.slane %v3777, 1
        %v3819 = vsel %vm579, %v3817, %v3818
        %v3820 = vrot.slane %v3778, 1
        %v3821 = vrot.slane %v3779, 1
        %v3822 = vsel %vm579, %v3820, %v3821
        %v3823 = vrot.slane %v3780, 1
        %v3824 = vrot.slane %v3781, 1
        %v3825 = vsel %vm579, %v3823, %v3824
        %v3826 = vrot.slane %v3766, 2
        %v3827 = vrot.slane %v3767, 2
        %v3828 = vsel %vm604, %v3826, %v3827
        %v3829 = vrot.slane %v3768, 2
        %v3830 = vrot.slane %v3769, 2
        %v3831 = vsel %vm604, %v3829, %v3830
        %v3832 = vrot.slane %v3770, 2
        %v3833 = vrot.slane %v3771, 2
        %v3834 = vsel %vm604, %v3832, %v3833
        %v3835 = vrot.slane %v3772, 2
        %v3836 = vrot.slane %v3773, 2
        %v3837 = vsel %vm604, %v3835, %v3836
        %v3838 = vrot.slane %v3774, 2
        %v3839 = vrot.slane %v3775, 2
        %v3840 = vsel %vm604, %v3838, %v3839
        %v3841 = vrot.slane %v3776, 2
        %v3842 = vrot.slane %v3777, 2
        %v3843 = vsel %vm604, %v3841, %v3842
        %v3844 = vrot.slane %v3778, 2
        %v3845 = vrot.slane %v3779, 2
        %v3846 = vsel %vm604, %v3844, %v3845
        %v3847 = vrot.slane %v3780, 2
        %v3848 = vrot.slane %v3781, 2
        %v3849 = vsel %vm604, %v3847, %v3848
        %v3852 = vrot.slane %v3782, 1
        %v3853 = vrot.slane %v3783, 1
        %v3854 = vsel %vm579, %v3852, %v3853
        %v3855 = vrot.slane %v3782, 2
        %v3856 = vrot.slane %v3783, 2
        %v3857 = vsel %vm604, %v3855, %v3856
        %v3860 = vrot.slane %v3784, 1
        %v3861 = vrot.slane %v3785, 1
        %v3862 = vsel %vm579, %v3860, %v3861
        %v3863 = vrot.slane %v3784, 2
        %v3864 = vrot.slane %v3785, 2
        %v3865 = vsel %vm604, %v3863, %v3864
        %3866 = vrot.lane.b32.xlu0 %v3804, 16
        %v3867 = vpop.permute.xlu0 %3866
        %3868 = vrot.lane.b32.xlu0 %v3807, 16
        %v3869 = vpop.permute.xlu0 %3868
        %3870 = vrot.lane.b32.xlu0 %v3810, 16
        %v3871 = vpop.permute.xlu0 %3870
        %3872 = vrot.lane.b32.xlu0 %v3813, 16
        %v3873 = vpop.permute.xlu0 %3872
        %3874 = vrot.lane.b32.xlu0 %v3816, 16
        %v3875 = vpop.permute.xlu0 %3874
        %3876 = vrot.lane.b32.xlu0 %v3819, 16
        %v3877 = vpop.permute.xlu0 %3876
        %3878 = vrot.lane.b32.xlu0 %v3822, 16
        %v3879 = vpop.permute.xlu0 %3878
        %3880 = vrot.lane.b32.xlu0 %v3825, 16
        %v3881 = vpop.permute.xlu0 %3880
        %3890 = vrot.lane.b32.xlu0 %v3828, 32
        %v3891 = vpop.permute.xlu0 %3890
        %3892 = vrot.lane.b32.xlu0 %v3831, 32
        %v3893 = vpop.permute.xlu0 %3892
        %3894 = vrot.lane.b32.xlu0 %v3834, 32
        %v3895 = vpop.permute.xlu0 %3894
        %3896 = vrot.lane.b32.xlu0 %v3837, 32
        %v3897 = vpop.permute.xlu0 %3896
        %3898 = vrot.lane.b32.xlu0 %v3840, 32
        %v3899 = vpop.permute.xlu0 %3898
        %3900 = vrot.lane.b32.xlu0 %v3843, 32
        %v3901 = vpop.permute.xlu0 %3900
        %3902 = vrot.lane.b32.xlu0 %v3846, 32
        %v3903 = vpop.permute.xlu0 %3902
        %3904 = vrot.lane.b32.xlu0 %v3849, 32
        %v3905 = vpop.permute.xlu0 %3904
        %3914 = vrot.lane.b32.xlu0 %v3768, 48
        %v3915 = vpop.permute.xlu0 %3914
        %3916 = vrot.lane.b32.xlu0 %v3770, 48
        %v3917 = vpop.permute.xlu0 %3916
        %3918 = vrot.lane.b32.xlu0 %v3772, 48
        %v3919 = vpop.permute.xlu0 %3918
        %3920 = vrot.lane.b32.xlu0 %v3774, 48
        %v3921 = vpop.permute.xlu0 %3920
        %3922 = vrot.lane.b32.xlu0 %v3776, 48
        %v3923 = vpop.permute.xlu0 %3922
        %3924 = vrot.lane.b32.xlu0 %v3778, 48
        %v3925 = vpop.permute.xlu0 %3924
        %3926 = vrot.lane.b32.xlu0 %v3780, 48
        %v3927 = vpop.permute.xlu0 %3926
        %3928 = vrot.lane.b32.xlu0 %v3782, 48
        %v3929 = vpop.permute.xlu0 %3928
        %3938 = vrot.lane.b32.xlu0 %v3807, 64
        %v3939 = vpop.permute.xlu0 %3938
        %3940 = vrot.lane.b32.xlu0 %v3810, 64
        %v3941 = vpop.permute.xlu0 %3940
        %3942 = vrot.lane.b32.xlu0 %v3813, 64
        %v3943 = vpop.permute.xlu0 %3942
        %3944 = vrot.lane.b32.xlu0 %v3816, 64
        %v3945 = vpop.permute.xlu0 %3944
        %3946 = vrot.lane.b32.xlu0 %v3819, 64
        %v3947 = vpop.permute.xlu0 %3946
        %3948 = vrot.lane.b32.xlu0 %v3822, 64
        %v3949 = vpop.permute.xlu0 %3948
        %3950 = vrot.lane.b32.xlu0 %v3825, 64
        %v3951 = vpop.permute.xlu0 %3950
        %3952 = vrot.lane.b32.xlu0 %v3854, 64
        %v3953 = vpop.permute.xlu0 %3952
        %3962 = vrot.lane.b32.xlu0 %v3831, 80
        %v3963 = vpop.permute.xlu0 %3962
        %3964 = vrot.lane.b32.xlu0 %v3834, 80
        %v3965 = vpop.permute.xlu0 %3964
        %3966 = vrot.lane.b32.xlu0 %v3837, 80
        %v3967 = vpop.permute.xlu0 %3966
        %3968 = vrot.lane.b32.xlu0 %v3840, 80
        %v3969 = vpop.permute.xlu0 %3968
        %3970 = vrot.lane.b32.xlu0 %v3843, 80
        %v3971 = vpop.permute.xlu0 %3970
        %3972 = vrot.lane.b32.xlu0 %v3846, 80
        %v3973 = vpop.permute.xlu0 %3972
        %3974 = vrot.lane.b32.xlu0 %v3849, 80
        %v3975 = vpop.permute.xlu0 %3974
        %3976 = vrot.lane.b32.xlu0 %v3857, 80
        %v3977 = vpop.permute.xlu0 %3976
        %3986 = vrot.lane.b32.xlu0 %v3770, 96
        %v3987 = vpop.permute.xlu0 %3986
        %3988 = vrot.lane.b32.xlu0 %v3772, 96
        %v3989 = vpop.permute.xlu0 %3988
        %3990 = vrot.lane.b32.xlu0 %v3774, 96
        %v3991 = vpop.permute.xlu0 %3990
        %3992 = vrot.lane.b32.xlu0 %v3776, 96
        %v3993 = vpop.permute.xlu0 %3992
        %3994 = vrot.lane.b32.xlu0 %v3778, 96
        %v3995 = vpop.permute.xlu0 %3994
        %3996 = vrot.lane.b32.xlu0 %v3780, 96
        %v3997 = vpop.permute.xlu0 %3996
        %3998 = vrot.lane.b32.xlu0 %v3782, 96
        %v3999 = vpop.permute.xlu0 %3998
        %4000 = vrot.lane.b32.xlu0 %v3784, 96
        %v4001 = vpop.permute.xlu0 %4000
        %4010 = vrot.lane.b32.xlu0 %v3810, 112
        %v4011 = vpop.permute.xlu0 %4010
        %4012 = vrot.lane.b32.xlu0 %v3813, 112
        %v4013 = vpop.permute.xlu0 %4012
        %4014 = vrot.lane.b32.xlu0 %v3816, 112
        %v4015 = vpop.permute.xlu0 %4014
        %4016 = vrot.lane.b32.xlu0 %v3819, 112
        %v4017 = vpop.permute.xlu0 %4016
        %4018 = vrot.lane.b32.xlu0 %v3822, 112
        %v4019 = vpop.permute.xlu0 %4018
        %4020 = vrot.lane.b32.xlu0 %v3825, 112
        %v4021 = vpop.permute.xlu0 %4020
        %4022 = vrot.lane.b32.xlu0 %v3854, 112
        %v4023 = vpop.permute.xlu0 %4022
        %4024 = vrot.lane.b32.xlu0 %v3862, 112
        %v4025 = vpop.permute.xlu0 %4024
        %v4034 = vsel %vm433, %v3766, %v3867
        %v4035 = vsel %vm433, %v3768, %v3869
        %v4036 = vsel %vm433, %v3770, %v3871
        %v4037 = vsel %vm433, %v3772, %v3873
        %v4038 = vsel %vm433, %v3774, %v3875
        %v4039 = vsel %vm433, %v3776, %v3877
        %v4040 = vsel %vm433, %v3778, %v3879
        %v4041 = vsel %vm433, %v3780, %v3881
        %v4042 = vsel %vm408, %v4034, %v3891
        %v4043 = vsel %vm408, %v4035, %v3893
        %v4044 = vsel %vm408, %v4036, %v3895
        %v4045 = vsel %vm408, %v4037, %v3897
        %v4046 = vsel %vm408, %v4038, %v3899
        %v4047 = vsel %vm408, %v4039, %v3901
        %v4048 = vsel %vm408, %v4040, %v3903
        %v4049 = vsel %vm408, %v4041, %v3905
        %v4050 = vsel %vm3166, %v4042, %v3915
        %v4051 = vsel %vm3166, %v4043, %v3917
        %v4052 = vsel %vm3166, %v4044, %v3919
        %v4053 = vsel %vm3166, %v4045, %v3921
        %v4054 = vsel %vm3166, %v4046, %v3923
        %v4055 = vsel %vm3166, %v4047, %v3925
        %v4056 = vsel %vm3166, %v4048, %v3927
        %v4057 = vsel %vm3166, %v4049, %v3929
        %v4058 = vsel %vm1273, %v4050, %v3939
        %v4059 = vsel %vm1273, %v4051, %v3941
        %v4060 = vsel %vm1273, %v4052, %v3943
        %v4061 = vsel %vm1273, %v4053, %v3945
        %v4062 = vsel %vm1273, %v4054, %v3947
        %v4063 = vsel %vm1273, %v4055, %v3949
        %v4064 = vsel %vm1273, %v4056, %v3951
        %v4065 = vsel %vm1273, %v4057, %v3953
        %v4066 = vsel %vm3183, %v4058, %v3963
        %v4067 = vsel %vm3183, %v4059, %v3965
        %v4068 = vsel %vm3183, %v4060, %v3967
        %v4069 = vsel %vm3183, %v4061, %v3969
        %v4070 = vsel %vm3183, %v4062, %v3971
        %v4071 = vsel %vm3183, %v4063, %v3973
        %v4072 = vsel %vm3183, %v4064, %v3975
        %v4073 = vsel %vm3183, %v4065, %v3977
        %v4074 = vsel %vm1282, %v4066, %v3987
        %v4075 = vsel %vm1282, %v4067, %v3989
        %v4076 = vsel %vm1282, %v4068, %v3991
        %v4077 = vsel %vm1282, %v4069, %v3993
        %v4078 = vsel %vm1282, %v4070, %v3995
        %v4079 = vsel %vm1282, %v4071, %v3997
        %v4080 = vsel %vm1282, %v4072, %v3999
        %v4081 = vsel %vm1282, %v4073, %v4001
        %v4082 = vsel %vm3200, %v4074, %v4011
        %v4083 = vsel %vm3200, %v4075, %v4013
        %v4084 = vsel %vm3200, %v4076, %v4015
        %v4085 = vsel %vm3200, %v4077, %v4017
        %v4086 = vsel %vm3200, %v4078, %v4019
        %v4087 = vsel %vm3200, %v4079, %v4021
        %v4088 = vsel %vm3200, %v4080, %v4023
        %v4089 = vsel %vm3200, %v4081, %v4025
        %s4090 = scalar_lea.vmem [#allocation9], 288
        %v4091 = vld [vmem:[%s4090] sm:$0xff]
        %v4092 = vld [vmem:[%s4090 + $0x8] sm:$0xff]
        %v4093 = vld [vmem:[%s4090 + $0x10] sm:$0xff]
        %v4094 = vld [vmem:[%s4090 + $0x18] sm:$0xff]
        %v4095 = vld [vmem:[%s4090 + $0x20] sm:$0xff]
        %v4096 = vld [vmem:[%s4090 + $0x28] sm:$0xff]
        %v4097 = vld [vmem:[%s4090 + $0x30] sm:$0xff]
        %v4098 = vld [vmem:[%s4090 + $0x38] sm:$0xff]
        %v4099 = vld [vmem:[%s4090 + $0x40] sm:$0xff]
        %v4100 = vld [vmem:[%s4090 + $0x48] sm:$0xff]
        %v4101 = vld [vmem:[%s4090 + $0x50] sm:$0xff]
        %v4102 = vld [vmem:[%s4090 + $0x58] sm:$0xff]
        %v4103 = vld [vmem:[%s4090 + $0x60] sm:$0xff]
        %v4104 = vld [vmem:[%s4090 + $0x68] sm:$0xff]
        %v4105 = vld [vmem:[%s4090 + $0x70] sm:$0xff]
        %v4106 = vld [vmem:[%s4090 + $0x78] sm:$0xff]
        %v4107 = vld [vmem:[%s4090 + $0x80] sm:$0xff]
        %v4108 = vld [vmem:[%s4090 + $0x88] sm:$0xff]
        %v4109 = vsel %vm433, %v3834, 0
        %v4111 = vsel %vm433, %v3837, 0
        %v4113 = vsel %vm433, %v3840, 0
        %v4115 = vsel %vm433, %v3843, 0
        %v4117 = vsel %vm433, %v3846, 0
        %v4119 = vsel %vm433, %v3849, 0
        %v4121 = vsel %vm433, %v3857, 0
        %v4123 = vsel %vm433, %v3865, 0
        %4125 = vmatpush.msra.mxu0 %v4106
        %4126 = vmatpush.msra.mxu0 %v4105
        %4127 = vmatpush.msra.mxu0 %v4104
        %4128 = vmatpush.msra.mxu0 %v4103
        %4129 = vmatpush.msra.mxu0 %v4102
        %4130 = vmatpush.msra.mxu0 %v4101
        %4131 = vmatpush.msra.mxu0 %v4100
        %4132 = vmatpush.msra.mxu0 %v4099
        %4133 = vmatpush.msra.mxu0 %v4098
        %4134 = vmatpush.msra.mxu0 %v4097
        %4135 = vmatpush.msra.mxu0 %v4096
        %4136 = vmatpush.msra.mxu0 %v4095
        %4137 = vmatpush.msra.mxu0 %v4094
        %4138 = vmatpush.msra.mxu0 %v4093
        %4139 = vmatpush.msra.mxu0 %v4092
        %4140 = vmatpush.msra.mxu0 %v4091
        %4141 = vmatmul.f32.gmra.mxu0 %v4082
        %v4142 = vpop.f32.mrf.mxu0
        %v4143 = vadd.f32 0.0, %v4142
        %4144 = vmatmul.f32.gmra.mxu0 %v4083
        %v4145 = vpop.f32.mrf.mxu0
        %v4146 = vadd.f32 0.0, %v4145
        %4147 = vmatmul.f32.gmra.mxu0 %v4084
        %v4148 = vpop.f32.mrf.mxu0
        %v4149 = vadd.f32 0.0, %v4148
        %4150 = vmatmul.f32.gmra.mxu0 %v4085
        %v4151 = vpop.f32.mrf.mxu0
        %v4152 = vadd.f32 0.0, %v4151
        %4153 = vmatmul.f32.gmra.mxu0 %v4086
        %v4154 = vpop.f32.mrf.mxu0
        %v4155 = vadd.f32 0.0, %v4154
        %4156 = vmatmul.f32.gmra.mxu0 %v4087
        %v4157 = vpop.f32.mrf.mxu0
        %v4158 = vadd.f32 0.0, %v4157
        %4159 = vmatmul.f32.gmra.mxu0 %v4088
        %v4160 = vpop.f32.mrf.mxu0
        %v4161 = vadd.f32 0.0, %v4160
        %4162 = vmatmul.f32.gmra.mxu0 %v4089
        %v4163 = vpop.f32.mrf.mxu0
        %v4164 = vadd.f32 0.0, %v4163
        %4165 = vdwg.mxu0
        %4166 = vmatpush.msra.mxu0 0.0
        %4167 = vmatpush.msra.mxu0 0.0
        %4168 = vmatpush.msra.mxu0 0.0
        %4169 = vmatpush.msra.mxu0 0.0
        %4170 = vmatpush.msra.mxu0 0.0
        %4171 = vmatpush.msra.mxu0 0.0
        %4172 = vmatpush.msra.mxu0 0.0
        %4173 = vmatpush.msra.mxu0 0.0
        %4174 = vmatpush.msra.mxu0 0.0
        %4175 = vmatpush.msra.mxu0 0.0
        %4176 = vmatpush.msra.mxu0 0.0
        %4177 = vmatpush.msra.mxu0 0.0
        %4178 = vmatpush.msra.mxu0 0.0
        %4179 = vmatpush.msra.mxu0 0.0
        %4180 = vmatpush.msra.mxu0 %v4108
        %4181 = vmatpush.msra.mxu0 %v4107
        %4182 = vmatmul.f32.gmra.mxu0 %v4109
        %v4183 = vpop.f32.mrf.mxu0
        %v4184 = vadd.f32 %v4143, %v4183
        %4185 = vmatmul.f32.gmra.mxu0 %v4111
        %v4186 = vpop.f32.mrf.mxu0
        %v4187 = vadd.f32 %v4146, %v4186
        %4188 = vmatmul.f32.gmra.mxu0 %v4113
        %v4189 = vpop.f32.mrf.mxu0
        %v4190 = vadd.f32 %v4149, %v4189
        %4191 = vmatmul.f32.gmra.mxu0 %v4115
        %v4192 = vpop.f32.mrf.mxu0
        %v4193 = vadd.f32 %v4152, %v4192
        %4194 = vmatmul.f32.gmra.mxu0 %v4117
        %v4195 = vpop.f32.mrf.mxu0
        %v4196 = vadd.f32 %v4155, %v4195
        %4197 = vmatmul.f32.gmra.mxu0 %v4119
        %v4198 = vpop.f32.mrf.mxu0
        %v4199 = vadd.f32 %v4158, %v4198
        %4200 = vmatmul.f32.gmra.mxu0 %v4121
        %v4201 = vpop.f32.mrf.mxu0
        %v4202 = vadd.f32 %v4161, %v4201
        %4203 = vmatmul.f32.gmra.mxu0 %v4123
        %v4204 = vpop.f32.mrf.mxu0
        %v4205 = vadd.f32 %v4164, %v4204
        %4206 = vdwg.mxu0
        %v4207 = vadd.f32 %v3743, %v4184
        %v4208 = vadd.f32 %v3746, %v4187
        %v4209 = vadd.f32 %v3749, %v4190
        %v4210 = vadd.f32 %v3752, %v4193
        %v4211 = vadd.f32 %v3755, %v4196
        %v4212 = vadd.f32 %v3758, %v4199
        %v4213 = vadd.f32 %v3761, %v4202
        %v4214 = vadd.f32 %v3764, %v4205
        %v4215 = vld [vmem:[%s504] sm:$0xff]
        %v4216 = vld [vmem:[%s504 + $0x8] sm:$0x3]
        %v4217 = vld [vmem:[%s504 + $0x10] sm:$0xff]
        %v4218 = vld [vmem:[%s504 + $0x18] sm:$0x3]
        %v4219 = vld [vmem:[%s504 + $0x20] sm:$0xff]
        %v4220 = vld [vmem:[%s504 + $0x28] sm:$0x3]
        %v4221 = vld [vmem:[%s504 + $0x30] sm:$0xff]
        %v4222 = vld [vmem:[%s504 + $0x38] sm:$0x3]
        %v4223 = vld [vmem:[%s504 + $0x40] sm:$0xff]
        %v4224 = vld [vmem:[%s504 + $0x48] sm:$0x3]
        %v4225 = vld [vmem:[%s504 + $0x50] sm:$0xff]
        %v4226 = vld [vmem:[%s504 + $0x58] sm:$0x3]
        %v4227 = vld [vmem:[%s504 + $0x60] sm:$0xff]
        %v4228 = vld [vmem:[%s504 + $0x68] sm:$0x3]
        %v4229 = vld [vmem:[%s504 + $0x70] sm:$0xff]
        %v4230 = vld [vmem:[%s504 + $0x78] sm:$0x3]
        %v4231 = vld [vmem:[%s504 + $0x80] sm:$0xff]
        %v4232 = vld [vmem:[%s504 + $0x88] sm:$0x3]
        %v4233 = vld [vmem:[%s504 + $0x90] sm:$0xff]
        %v4234 = vld [vmem:[%s504 + $0x98] sm:$0x3]
        %v4251 = vrot.slane %v4215, 1
        %v4252 = vrot.slane %v4216, 1
        %v4253 = vsel %vm579, %v4251, %v4252
        %v4254 = vrot.slane %v4217, 1
        %v4255 = vrot.slane %v4218, 1
        %v4256 = vsel %vm579, %v4254, %v4255
        %v4257 = vrot.slane %v4219, 1
        %v4258 = vrot.slane %v4220, 1
        %v4259 = vsel %vm579, %v4257, %v4258
        %v4260 = vrot.slane %v4221, 1
        %v4261 = vrot.slane %v4222, 1
        %v4262 = vsel %vm579, %v4260, %v4261
        %v4263 = vrot.slane %v4223, 1
        %v4264 = vrot.slane %v4224, 1
        %v4265 = vsel %vm579, %v4263, %v4264
        %v4266 = vrot.slane %v4225, 1
        %v4267 = vrot.slane %v4226, 1
        %v4268 = vsel %vm579, %v4266, %v4267
        %v4269 = vrot.slane %v4227, 1
        %v4270 = vrot.slane %v4228, 1
        %v4271 = vsel %vm579, %v4269, %v4270
        %v4272 = vrot.slane %v4229, 1
        %v4273 = vrot.slane %v4230, 1
        %v4274 = vsel %vm579, %v4272, %v4273
        %v4275 = vrot.slane %v4215, 2
        %v4276 = vrot.slane %v4216, 2
        %v4277 = vsel %vm604, %v4275, %v4276
        %v4278 = vrot.slane %v4217, 2
        %v4279 = vrot.slane %v4218, 2
        %v4280 = vsel %vm604, %v4278, %v4279
        %v4281 = vrot.slane %v4219, 2
        %v4282 = vrot.slane %v4220, 2
        %v4283 = vsel %vm604, %v4281, %v4282
        %v4284 = vrot.slane %v4221, 2
        %v4285 = vrot.slane %v4222, 2
        %v4286 = vsel %vm604, %v4284, %v4285
        %v4287 = vrot.slane %v4223, 2
        %v4288 = vrot.slane %v4224, 2
        %v4289 = vsel %vm604, %v4287, %v4288
        %v4290 = vrot.slane %v4225, 2
        %v4291 = vrot.slane %v4226, 2
        %v4292 = vsel %vm604, %v4290, %v4291
        %v4293 = vrot.slane %v4227, 2
        %v4294 = vrot.slane %v4228, 2
        %v4295 = vsel %vm604, %v4293, %v4294
        %v4296 = vrot.slane %v4229, 2
        %v4297 = vrot.slane %v4230, 2
        %v4298 = vsel %vm604, %v4296, %v4297
        %v4301 = vrot.slane %v4231, 1
        %v4302 = vrot.slane %v4232, 1
        %v4303 = vsel %vm579, %v4301, %v4302
        %v4304 = vrot.slane %v4231, 2
        %v4305 = vrot.slane %v4232, 2
        %v4306 = vsel %vm604, %v4304, %v4305
        %v4309 = vrot.slane %v4233, 1
        %v4310 = vrot.slane %v4234, 1
        %v4311 = vsel %vm579, %v4309, %v4310
        %v4312 = vrot.slane %v4233, 2
        %v4313 = vrot.slane %v4234, 2
        %v4314 = vsel %vm604, %v4312, %v4313
        %4315 = vrot.lane.b32.xlu0 %v4253, 16
        %v4316 = vpop.permute.xlu0 %4315
        %4317 = vrot.lane.b32.xlu0 %v4256, 16
        %v4318 = vpop.permute.xlu0 %4317
        %4319 = vrot.lane.b32.xlu0 %v4259, 16
        %v4320 = vpop.permute.xlu0 %4319
        %4321 = vrot.lane.b32.xlu0 %v4262, 16
        %v4322 = vpop.permute.xlu0 %4321
        %4323 = vrot.lane.b32.xlu0 %v4265, 16
        %v4324 = vpop.permute.xlu0 %4323
        %4325 = vrot.lane.b32.xlu0 %v4268, 16
        %v4326 = vpop.permute.xlu0 %4325
        %4327 = vrot.lane.b32.xlu0 %v4271, 16
        %v4328 = vpop.permute.xlu0 %4327
        %4329 = vrot.lane.b32.xlu0 %v4274, 16
        %v4330 = vpop.permute.xlu0 %4329
        %4339 = vrot.lane.b32.xlu0 %v4277, 32
        %v4340 = vpop.permute.xlu0 %4339
        %4341 = vrot.lane.b32.xlu0 %v4280, 32
        %v4342 = vpop.permute.xlu0 %4341
        %4343 = vrot.lane.b32.xlu0 %v4283, 32
        %v4344 = vpop.permute.xlu0 %4343
        %4345 = vrot.lane.b32.xlu0 %v4286, 32
        %v4346 = vpop.permute.xlu0 %4345
        %4347 = vrot.lane.b32.xlu0 %v4289, 32
        %v4348 = vpop.permute.xlu0 %4347
        %4349 = vrot.lane.b32.xlu0 %v4292, 32
        %v4350 = vpop.permute.xlu0 %4349
        %4351 = vrot.lane.b32.xlu0 %v4295, 32
        %v4352 = vpop.permute.xlu0 %4351
        %4353 = vrot.lane.b32.xlu0 %v4298, 32
        %v4354 = vpop.permute.xlu0 %4353
        %4363 = vrot.lane.b32.xlu0 %v4217, 48
        %v4364 = vpop.permute.xlu0 %4363
        %4365 = vrot.lane.b32.xlu0 %v4219, 48
        %v4366 = vpop.permute.xlu0 %4365
        %4367 = vrot.lane.b32.xlu0 %v4221, 48
        %v4368 = vpop.permute.xlu0 %4367
        %4369 = vrot.lane.b32.xlu0 %v4223, 48
        %v4370 = vpop.permute.xlu0 %4369
        %4371 = vrot.lane.b32.xlu0 %v4225, 48
        %v4372 = vpop.permute.xlu0 %4371
        %4373 = vrot.lane.b32.xlu0 %v4227, 48
        %v4374 = vpop.permute.xlu0 %4373
        %4375 = vrot.lane.b32.xlu0 %v4229, 48
        %v4376 = vpop.permute.xlu0 %4375
        %4377 = vrot.lane.b32.xlu0 %v4231, 48
        %v4378 = vpop.permute.xlu0 %4377
        %4387 = vrot.lane.b32.xlu0 %v4256, 64
        %v4388 = vpop.permute.xlu0 %4387
        %4389 = vrot.lane.b32.xlu0 %v4259, 64
        %v4390 = vpop.permute.xlu0 %4389
        %4391 = vrot.lane.b32.xlu0 %v4262, 64
        %v4392 = vpop.permute.xlu0 %4391
        %4393 = vrot.lane.b32.xlu0 %v4265, 64
        %v4394 = vpop.permute.xlu0 %4393
        %4395 = vrot.lane.b32.xlu0 %v4268, 64
        %v4396 = vpop.permute.xlu0 %4395
        %4397 = vrot.lane.b32.xlu0 %v4271, 64
        %v4398 = vpop.permute.xlu0 %4397
        %4399 = vrot.lane.b32.xlu0 %v4274, 64
        %v4400 = vpop.permute.xlu0 %4399
        %4401 = vrot.lane.b32.xlu0 %v4303, 64
        %v4402 = vpop.permute.xlu0 %4401
        %4411 = vrot.lane.b32.xlu0 %v4280, 80
        %v4412 = vpop.permute.xlu0 %4411
        %4413 = vrot.lane.b32.xlu0 %v4283, 80
        %v4414 = vpop.permute.xlu0 %4413
        %4415 = vrot.lane.b32.xlu0 %v4286, 80
        %v4416 = vpop.permute.xlu0 %4415
        %4417 = vrot.lane.b32.xlu0 %v4289, 80
        %v4418 = vpop.permute.xlu0 %4417
        %4419 = vrot.lane.b32.xlu0 %v4292, 80
        %v4420 = vpop.permute.xlu0 %4419
        %4421 = vrot.lane.b32.xlu0 %v4295, 80
        %v4422 = vpop.permute.xlu0 %4421
        %4423 = vrot.lane.b32.xlu0 %v4298, 80
        %v4424 = vpop.permute.xlu0 %4423
        %4425 = vrot.lane.b32.xlu0 %v4306, 80
        %v4426 = vpop.permute.xlu0 %4425
        %4435 = vrot.lane.b32.xlu0 %v4219, 96
        %v4436 = vpop.permute.xlu0 %4435
        %4437 = vrot.lane.b32.xlu0 %v4221, 96
        %v4438 = vpop.permute.xlu0 %4437
        %4439 = vrot.lane.b32.xlu0 %v4223, 96
        %v4440 = vpop.permute.xlu0 %4439
        %4441 = vrot.lane.b32.xlu0 %v4225, 96
        %v4442 = vpop.permute.xlu0 %4441
        %4443 = vrot.lane.b32.xlu0 %v4227, 96
        %v4444 = vpop.permute.xlu0 %4443
        %4445 = vrot.lane.b32.xlu0 %v4229, 96
        %v4446 = vpop.permute.xlu0 %4445
        %4447 = vrot.lane.b32.xlu0 %v4231, 96
        %v4448 = vpop.permute.xlu0 %4447
        %4449 = vrot.lane.b32.xlu0 %v4233, 96
        %v4450 = vpop.permute.xlu0 %4449
        %4459 = vrot.lane.b32.xlu0 %v4259, 112
        %v4460 = vpop.permute.xlu0 %4459
        %4461 = vrot.lane.b32.xlu0 %v4262, 112
        %v4462 = vpop.permute.xlu0 %4461
        %4463 = vrot.lane.b32.xlu0 %v4265, 112
        %v4464 = vpop.permute.xlu0 %4463
        %4465 = vrot.lane.b32.xlu0 %v4268, 112
        %v4466 = vpop.permute.xlu0 %4465
        %4467 = vrot.lane.b32.xlu0 %v4271, 112
        %v4468 = vpop.permute.xlu0 %4467
        %4469 = vrot.lane.b32.xlu0 %v4274, 112
        %v4470 = vpop.permute.xlu0 %4469
        %4471 = vrot.lane.b32.xlu0 %v4303, 112
        %v4472 = vpop.permute.xlu0 %4471
        %4473 = vrot.lane.b32.xlu0 %v4311, 112
        %v4474 = vpop.permute.xlu0 %4473
        %v4483 = vsel %vm433, %v4215, %v4316
        %v4484 = vsel %vm433, %v4217, %v4318
        %v4485 = vsel %vm433, %v4219, %v4320
        %v4486 = vsel %vm433, %v4221, %v4322
        %v4487 = vsel %vm433, %v4223, %v4324
        %v4488 = vsel %vm433, %v4225, %v4326
        %v4489 = vsel %vm433, %v4227, %v4328
        %v4490 = vsel %vm433, %v4229, %v4330
        %v4491 = vsel %vm408, %v4483, %v4340
        %v4492 = vsel %vm408, %v4484, %v4342
        %v4493 = vsel %vm408, %v4485, %v4344
        %v4494 = vsel %vm408, %v4486, %v4346
        %v4495 = vsel %vm408, %v4487, %v4348
        %v4496 = vsel %vm408, %v4488, %v4350
        %v4497 = vsel %vm408, %v4489, %v4352
        %v4498 = vsel %vm408, %v4490, %v4354
        %v4499 = vsel %vm3166, %v4491, %v4364
        %v4500 = vsel %vm3166, %v4492, %v4366
        %v4501 = vsel %vm3166, %v4493, %v4368
        %v4502 = vsel %vm3166, %v4494, %v4370
        %v4503 = vsel %vm3166, %v4495, %v4372
        %v4504 = vsel %vm3166, %v4496, %v4374
        %v4505 = vsel %vm3166, %v4497, %v4376
        %v4506 = vsel %vm3166, %v4498, %v4378
        %v4507 = vsel %vm1273, %v4499, %v4388
        %v4508 = vsel %vm1273, %v4500, %v4390
        %v4509 = vsel %vm1273, %v4501, %v4392
        %v4510 = vsel %vm1273, %v4502, %v4394
        %v4511 = vsel %vm1273, %v4503, %v4396
        %v4512 = vsel %vm1273, %v4504, %v4398
        %v4513 = vsel %vm1273, %v4505, %v4400
        %v4514 = vsel %vm1273, %v4506, %v4402
        %v4515 = vsel %vm3183, %v4507, %v4412
        %v4516 = vsel %vm3183, %v4508, %v4414
        %v4517 = vsel %vm3183, %v4509, %v4416
        %v4518 = vsel %vm3183, %v4510, %v4418
        %v4519 = vsel %vm3183, %v4511, %v4420
        %v4520 = vsel %vm3183, %v4512, %v4422
        %v4521 = vsel %vm3183, %v4513, %v4424
        %v4522 = vsel %vm3183, %v4514, %v4426
        %v4523 = vsel %vm1282, %v4515, %v4436
        %v4524 = vsel %vm1282, %v4516, %v4438
        %v4525 = vsel %vm1282, %v4517, %v4440
        %v4526 = vsel %vm1282, %v4518, %v4442
        %v4527 = vsel %vm1282, %v4519, %v4444
        %v4528 = vsel %vm1282, %v4520, %v4446
        %v4529 = vsel %vm1282, %v4521, %v4448
        %v4530 = vsel %vm1282, %v4522, %v4450
        %v4531 = vsel %vm3200, %v4523, %v4460
        %v4532 = vsel %vm3200, %v4524, %v4462
        %v4533 = vsel %vm3200, %v4525, %v4464
        %v4534 = vsel %vm3200, %v4526, %v4466
        %v4535 = vsel %vm3200, %v4527, %v4468
        %v4536 = vsel %vm3200, %v4528, %v4470
        %v4537 = vsel %vm3200, %v4529, %v4472
        %v4538 = vsel %vm3200, %v4530, %v4474
        %s4539 = scalar_lea.vmem [#allocation9], 432
        %v4540 = vld [vmem:[%s4539] sm:$0xff]
        %v4541 = vld [vmem:[%s4539 + $0x8] sm:$0xff]
        %v4542 = vld [vmem:[%s4539 + $0x10] sm:$0xff]
        %v4543 = vld [vmem:[%s4539 + $0x18] sm:$0xff]
        %v4544 = vld [vmem:[%s4539 + $0x20] sm:$0xff]
        %v4545 = vld [vmem:[%s4539 + $0x28] sm:$0xff]
        %v4546 = vld [vmem:[%s4539 + $0x30] sm:$0xff]
        %v4547 = vld [vmem:[%s4539 + $0x38] sm:$0xff]
        %v4548 = vld [vmem:[%s4539 + $0x40] sm:$0xff]
        %v4549 = vld [vmem:[%s4539 + $0x48] sm:$0xff]
        %v4550 = vld [vmem:[%s4539 + $0x50] sm:$0xff]
        %v4551 = vld [vmem:[%s4539 + $0x58] sm:$0xff]
        %v4552 = vld [vmem:[%s4539 + $0x60] sm:$0xff]
        %v4553 = vld [vmem:[%s4539 + $0x68] sm:$0xff]
        %v4554 = vld [vmem:[%s4539 + $0x70] sm:$0xff]
        %v4555 = vld [vmem:[%s4539 + $0x78] sm:$0xff]
        %v4556 = vld [vmem:[%s4539 + $0x80] sm:$0xff]
        %v4557 = vld [vmem:[%s4539 + $0x88] sm:$0xff]
        %v4558 = vsel %vm433, %v4283, 0
        %v4560 = vsel %vm433, %v4286, 0
        %v4562 = vsel %vm433, %v4289, 0
        %v4564 = vsel %vm433, %v4292, 0
        %v4566 = vsel %vm433, %v4295, 0
        %v4568 = vsel %vm433, %v4298, 0
        %v4570 = vsel %vm433, %v4306, 0
        %v4572 = vsel %vm433, %v4314, 0
        %4574 = vmatpush.msra.mxu0 %v4555
        %4575 = vmatpush.msra.mxu0 %v4554
        %4576 = vmatpush.msra.mxu0 %v4553
        %4577 = vmatpush.msra.mxu0 %v4552
        %4578 = vmatpush.msra.mxu0 %v4551
        %4579 = vmatpush.msra.mxu0 %v4550
        %4580 = vmatpush.msra.mxu0 %v4549
        %4581 = vmatpush.msra.mxu0 %v4548
        %4582 = vmatpush.msra.mxu0 %v4547
        %4583 = vmatpush.msra.mxu0 %v4546
        %4584 = vmatpush.msra.mxu0 %v4545
        %4585 = vmatpush.msra.mxu0 %v4544
        %4586 = vmatpush.msra.mxu0 %v4543
        %4587 = vmatpush.msra.mxu0 %v4542
        %4588 = vmatpush.msra.mxu0 %v4541
        %4589 = vmatpush.msra.mxu0 %v4540
        %4590 = vmatmul.f32.gmra.mxu0 %v4531
        %v4591 = vpop.f32.mrf.mxu0
        %v4592 = vadd.f32 0.0, %v4591
        %4593 = vmatmul.f32.gmra.mxu0 %v4532
        %v4594 = vpop.f32.mrf.mxu0
        %v4595 = vadd.f32 0.0, %v4594
        %4596 = vmatmul.f32.gmra.mxu0 %v4533
        %v4597 = vpop.f32.mrf.mxu0
        %v4598 = vadd.f32 0.0, %v4597
        %4599 = vmatmul.f32.gmra.mxu0 %v4534
        %v4600 = vpop.f32.mrf.mxu0
        %v4601 = vadd.f32 0.0, %v4600
        %4602 = vmatmul.f32.gmra.mxu0 %v4535
        %v4603 = vpop.f32.mrf.mxu0
        %v4604 = vadd.f32 0.0, %v4603
        %4605 = vmatmul.f32.gmra.mxu0 %v4536
        %v4606 = vpop.f32.mrf.mxu0
        %v4607 = vadd.f32 0.0, %v4606
        %4608 = vmatmul.f32.gmra.mxu0 %v4537
        %v4609 = vpop.f32.mrf.mxu0
        %v4610 = vadd.f32 0.0, %v4609
        %4611 = vmatmul.f32.gmra.mxu0 %v4538
        %v4612 = vpop.f32.mrf.mxu0
        %v4613 = vadd.f32 0.0, %v4612
        %4614 = vdwg.mxu0
        %4615 = vmatpush.msra.mxu0 0.0
        %4616 = vmatpush.msra.mxu0 0.0
        %4617 = vmatpush.msra.mxu0 0.0
        %4618 = vmatpush.msra.mxu0 0.0
        %4619 = vmatpush.msra.mxu0 0.0
        %4620 = vmatpush.msra.mxu0 0.0
        %4621 = vmatpush.msra.mxu0 0.0
        %4622 = vmatpush.msra.mxu0 0.0
        %4623 = vmatpush.msra.mxu0 0.0
        %4624 = vmatpush.msra.mxu0 0.0
        %4625 = vmatpush.msra.mxu0 0.0
        %4626 = vmatpush.msra.mxu0 0.0
        %4627 = vmatpush.msra.mxu0 0.0
        %4628 = vmatpush.msra.mxu0 0.0
        %4629 = vmatpush.msra.mxu0 %v4557
        %4630 = vmatpush.msra.mxu0 %v4556
        %4631 = vmatmul.f32.gmra.mxu0 %v4558
        %v4632 = vpop.f32.mrf.mxu0
        %v4633 = vadd.f32 %v4592, %v4632
        %4634 = vmatmul.f32.gmra.mxu0 %v4560
        %v4635 = vpop.f32.mrf.mxu0
        %v4636 = vadd.f32 %v4595, %v4635
        %4637 = vmatmul.f32.gmra.mxu0 %v4562
        %v4638 = vpop.f32.mrf.mxu0
        %v4639 = vadd.f32 %v4598, %v4638
        %4640 = vmatmul.f32.gmra.mxu0 %v4564
        %v4641 = vpop.f32.mrf.mxu0
        %v4642 = vadd.f32 %v4601, %v4641
        %4643 = vmatmul.f32.gmra.mxu0 %v4566
        %v4644 = vpop.f32.mrf.mxu0
        %v4645 = vadd.f32 %v4604, %v4644
        %4646 = vmatmul.f32.gmra.mxu0 %v4568
        %v4647 = vpop.f32.mrf.mxu0
        %v4648 = vadd.f32 %v4607, %v4647
        %4649 = vmatmul.f32.gmra.mxu0 %v4570
        %v4650 = vpop.f32.mrf.mxu0
        %v4651 = vadd.f32 %v4610, %v4650
        %4652 = vmatmul.f32.gmra.mxu0 %v4572
        %v4653 = vpop.f32.mrf.mxu0
        %v4654 = vadd.f32 %v4613, %v4653
        %4655 = vdwg.mxu0
        %v4656 = vadd.f32 %v4207, %v4633
        %v4657 = vadd.f32 %v4208, %v4636
        %v4658 = vadd.f32 %v4209, %v4639
        %v4659 = vadd.f32 %v4210, %v4642
        %v4660 = vadd.f32 %v4211, %v4645
        %v4661 = vadd.f32 %v4212, %v4648
        %v4662 = vadd.f32 %v4213, %v4651
        %v4663 = vadd.f32 %v4214, %v4654
        %v4664 = vld [vmem:[%s8] sm:$0x1]
        %v4666 = vperm.slane %v4664, 0
        %v4668 = vadd.f32 %v4656, %v4666
        %v4669 = vadd.f32 %v4657, %v4666
        %v4670 = vadd.f32 %v4658, %v4666
        %v4671 = vadd.f32 %v4659, %v4666
        %v4672 = vadd.f32 %v4660, %v4666
        %v4673 = vadd.f32 %v4661, %v4666
        %v4674 = vadd.f32 %v4662, %v4666
        %v4675 = vadd.f32 %v4663, %v4666
        %4676 = vst [vmem:[%s382] sm:$0xff] %v4668
        %4677 = vst [vmem:[%s382 + $0x8] sm:$0xff] %v4669
        %4678 = vst [vmem:[%s382 + $0x10] sm:$0xff] %v4670
        %4679 = vst [vmem:[%s382 + $0x18] sm:$0xff] %v4671
        %4680 = vst [vmem:[%s382 + $0x20] sm:$0xff] %v4672
        %4681 = vst [vmem:[%s382 + $0x28] sm:$0xff] %v4673
        %4682 = vst [vmem:[%s382 + $0x30] sm:$0xff] %v4674
        %4683 = vst [vmem:[%s382 + $0x38] sm:$0xff] %v4675
        %p4684 = scmp.lt.s32.totalorder %s22, 1
        %s4685 = scalar_select %p4684, %s22, 1
        %s4686 = smul.addr %s4685, 8
        %s4687 = smul.addr %s4686, 8
        %s4688 = scalar_lea.vmem %s9, %s4687
        // Predicated region
        $region69: #{decoder_forward.1} parent=55 // pred_check
          %p4689 = pneg %p234
        $region70: #{decoder_forward.1} parent=55 // pred_check_branch
          %4691 = sbr.rel (%p4689) target = $region72
        $region71: #{decoder_forward.1} parent=55 // pred_region
          _
        $region72: #{decoder_forward.1} parent=55 // pred_fallthru
          _
      $region56: #{decoder_forward.1} parent=5 // pred_fallthru
        _
      %p4692 = scmp.le.s32.totalorder 2, %s17
      // Predicated region
      $region73: #{decoder_forward.1} parent=5 // pred_check
        %p4693 = pneg %p4692
      $region74: #{decoder_forward.1} parent=5 // pred_check_branch
        %4695 = sbr.rel (%p4693) target = $region76
      $region75: #{decoder_forward.1} parent=5 // pred_region
        %s4696 = ssub.s32 %s17, 2
        // Predicated region
        $region77: #{decoder_forward.1} parent=75 // pred_check
          %p4697 = pneg %p240
        $region78: #{decoder_forward.1} parent=75 // pred_check_branch
          %4699 = sbr.rel (%p4697) target = $region80
        $region79: #{decoder_forward.1} parent=75 // pred_region
          %p4700 = scmp.lt.s32.totalorder %s23, 1
          %s4701 = scalar_select %p4700, %s23, 1
          %s4702 = smul.addr %s4701, 8
          %s4703 = smul.addr %s4702, 8
          %s4704 = scalar_lea.vmem %s9, %s4703
        $region80: #{decoder_forward.1} parent=75 // pred_fallthru
          _
      $region76: #{decoder_forward.1} parent=5 // pred_fallthru
        _
    $region6: #{decoder_forward.1} parent=1 // loop_footer
      %s21 = sadd.s32 1, %s17
    $region7: #{decoder_forward.1} parent=1 // loop_footer_branch
      %16 = sbr.rel target = $region3
    $region8: #{decoder_forward.1} parent=1 // loop_exit
      _
    %4705 = vsyncpa [#allocation6], 1
    %s4706 = scalar_lea.sflag [#allocation6], 1
    %4707 = vsyncpa %s4706, 1
    %4708 = vsyncpa [#allocation8], 1

</llo_original>
